<compile_context>
chip_gen: v7x
topology: tpu7x:2x2x1
jax: 0.10.0
libtpu: 0.0.40
codegen_flags: <defaults>
</compile_context>

<pallas_src>
import functools

import jax
import jax.numpy as jnp
from jax.experimental import pallas as pl
from jax.experimental.pallas import tpu as pltpu


# ----------------------------- fused Pallas kernel --------------------------


def _fused_convlstm_kernel(
    x_ref,        # (1, B, H+2, W+2, Cin)  observed frame, spatially pre-padded
    wg_ref,       # (9*(Cin+Ch), 4*Ch)     folded 3x3 gate weights (bf16)
    bg_ref,       # (1, 4*Ch)              gate bias (f32)
    wo_ref,       # (Ch, Cout)             1x1 output projection weight (f32)
    bo_ref,       # (1, Cout)              output projection bias (f32)
    pred_ref,     # (1, N, Cout)           projected frame for this grid step
    xpad_ref,     # VMEM (B, H+2, W+2, Cin)  padded cell input   (persistent)
    hpad_ref,     # VMEM (B, H+2, W+2, Ch)   padded hidden state (persistent)
    c_ref,        # VMEM (N, Ch)             cell state          (persistent)
    xcol_ref,     # VMEM (B, H, W, 9*(Cin+Ch)) lane-dense im2col scratch
    *, seqlen, B, H, W, CIN, CH,
):
    t = pl.program_id(0)
    n = B * H * W
    ctot = CIN + CH

    # ---- init persistent recurrent state once (accumulator pattern) --------
    @pl.when(t == 0)
    def _init():
        hpad_ref[...] = jnp.zeros_like(hpad_ref)
        xpad_ref[...] = jnp.zeros_like(xpad_ref)
        c_ref[...] = jnp.zeros_like(c_ref)

    # ---- fused 1x1 output projection of the current hidden state -----------
    hp = hpad_ref[...]                                    # (B, H+2, W+2, Ch)
    h_prev = hp[:, 1:1 + H, 1:1 + W, :].reshape(n, CH)    # interior == h_t
    frame = (
        jnp.dot(h_prev, wo_ref[...], preferred_element_type=jnp.float32)
        + bo_ref[...]
    )                                                     # (N, Cout) f32
    pred_ref[0] = frame      # wrapper keeps only the decode-phase blocks

    # ---- pick the cell input: observed frame (encode) or feedback (decode) -
    @pl.when(t < seqlen)
    def _use_observation():
        xpad_ref[...] = x_ref[0]                          # border already zero

    @pl.when(t >= seqlen)
    def _use_feedback():
        xpad_ref[:, 1:1 + H, 1:1 + W, :] = frame.reshape(B, H, W, CIN)

    xp = xpad_ref[...]                                    # (B, H+2, W+2, Cin)

    # ---- in-VMEM im2col: 9 shifted taps of [x, h], packed lane-dense -------
    for k in range(9):
        di, dj = k // 3, k % 3
        base = k * ctot
        xcol_ref[:, :, :, base:base + CIN] = xp[:, di:di + H, dj:dj + W, :]
        xcol_ref[:, :, :, base + CIN:base + ctot] = hp[:, di:di + H, dj:dj + W, :]

    # ---- single K = 9*(Cin+Ch) MXU matmul for all 4 gates (bf16 -> f32) ----
    xcol = xcol_ref[...].reshape(n, 9 * ctot).astype(jnp.bfloat16)
    gates = (
        jnp.dot(xcol, wg_ref[...], preferred_element_type=jnp.float32)
        + bg_ref[...]
    )                                                     # (N, 4*Ch) f32

    i = jax.nn.sigmoid(gates[:, 0 * CH:1 * CH])
    f = jax.nn.sigmoid(gates[:, 1 * CH:2 * CH])
    g = jnp.tanh(gates[:, 2 * CH:3 * CH])
    o = jax.nn.sigmoid(gates[:, 3 * CH:4 * CH])

    c_new = f * c_ref[...] + i * g                        # f32 state update
    h_new = o * jnp.tanh(c_new)

    c_ref[...] = c_new
    hpad_ref[:, 1:1 + H, 1:1 + W, :] = h_new.reshape(B, H, W, CH)


# ------------------------------ JAX wrappers ---------------------------------


# TODO(synk): Standard_RNN source was not provided in models/Model.py; it is
# implemented here as the canonical ConvLSTM encoder + autoregressive
# next-frame decoder (gate order i, f, g, o; predicted frame fed back).
def standard_rnn(x_nchw, batch, seqlen, params, numiterations):
    _, cin, hh, ww = x_nchw.shape
    ch = params["w_gates"].shape[-1] // 4
    cout = params["w_out"].shape[-1]
    assert cout == cin, "autoregressive feedback requires Cout == Cin"

    # NCHW frames -> time-major NHWC, spatially pre-padded once (SAME, 3x3).
    # Time axis is padded with zero frames so the fused kernel's index_map is
    # trivial (decode steps ignore those frames and use the in-kernel feedback).
    x = jnp.transpose(x_nchw, (0, 2, 3, 1)).reshape(batch, seqlen, hh, ww, cin)
    x = jnp.transpose(x, (1, 0, 2, 3, 4))                    # (S, B, H, W, C)
    x = jnp.pad(x, ((0, numiterations), (0, 0), (1, 1), (1, 1), (0, 0)))

    total_steps = seqlen + numiterations
    n = batch * hh * ww
    ctot = cin + ch

    # Fold the 3x3 gate conv weights tap-major into one (9*Ctot, 4Ch) matrix.
    w_gates = params["w_gates"].reshape(9 * ctot, 4 * ch).astype(jnp.bfloat16)
    b_gates = params["b_gates"].astype(jnp.float32)
    w_out = params["w_out"].astype(jnp.float32)
    b_out = params["b_out"].astype(jnp.float32)

    kernel = functools.partial(
        _fused_convlstm_kernel,
        seqlen=seqlen, B=batch, H=hh, W=ww, CIN=cin, CH=ch)

    flops = int(total_steps * (2 * n * (9 * ctot) * (4 * ch) + 2 * n * ch * cout))
    transcendentals = int(total_steps * 5 * n * ch)
    bytes_accessed = int(
        x.size * 4 + w_gates.size * 2 + b_gates.size * 4
        + w_out.size * 4 + b_out.size * 4 + total_steps * n * cout * 4)

    # TODO(synk): at realistic sizes, add a spatial grid axis ("parallel", with
    # halo exchange for the 3x3 conv) to tile N through VMEM and to shard the
    # work across v7x's two TensorCores; unnecessary at this toy size.
    pred_full = pl.pallas_call(
        kernel,
        out_shape=jax.ShapeDtypeStruct((total_steps, n, cout), jnp.float32),
        grid_spec=pltpu.PrefetchScalarGridSpec(
            num_scalar_prefetch=0,
            grid=(total_steps,),
            in_specs=[
                pl.BlockSpec((1, batch, hh + 2, ww + 2, cin),
                             lambda t: (t, 0, 0, 0, 0)),
                pl.BlockSpec((9 * ctot, 4 * ch), lambda t: (0, 0)),   # resident
                pl.BlockSpec((1, 4 * ch), lambda t: (0, 0)),          # resident
                pl.BlockSpec((ch, cout), lambda t: (0, 0)),           # resident
                pl.BlockSpec((1, cout), lambda t: (0, 0)),            # resident
            ],
            out_specs=pl.BlockSpec((1, n, cout), lambda t: (t, 0, 0)),
            scratch_shapes=[
                pltpu.VMEM((batch, hh + 2, ww + 2, cin), jnp.float32),  # xpad
                pltpu.VMEM((batch, hh + 2, ww + 2, ch), jnp.float32),   # hpad
                pltpu.VMEM((n, ch), jnp.float32),                       # c
                pltpu.VMEM((batch, hh, ww, 9 * ctot), jnp.float32),     # im2col
            ],
        ),
        compiler_params=pltpu.CompilerParams(
            dimension_semantics=("arbitrary",)),   # sequential recurrence
        cost_estimate=pl.CostEstimate(
            flops=flops, transcendentals=transcendentals,
            bytes_accessed=bytes_accessed),
    )(x, w_gates, b_gates, w_out, b_out)

    # Keep only the decode-phase projections.
    preds = pred_full[seqlen:].reshape(numiterations, batch, hh, ww, cout)
    return jnp.transpose(preds, (1, 0, 4, 2, 3))   # (B, numiter, C, H, W)


def network_convlstm_forward(seq_tensor, params, *, numiterations):
    """Mirrors Network_ConvLSTM_combinedStaticSemantic.forward."""
    batch, seqlen, imght, imgwd, imgch = seq_tensor.shape
    # Exactly the PyTorch `.contiguous().view(batch*seqlen, imgch, imght, imgwd)`
    # -- a raw row-major reshape, NOT a permute.
    x_nchw = seq_tensor.reshape(batch * seqlen, imgch, imght, imgwd)
    return standard_rnn(x_nchw, batch, seqlen, params, numiterations)


def init_params(key, imgch, hidden):
    k1, k2 = jax.random.split(key)
    ctot = imgch + hidden
    w_gates = 0.1 * jax.random.normal(k1, (9, ctot, 4 * hidden), jnp.float32)
    b_gates = jnp.zeros((1, 4 * hidden), jnp.float32)
    b_gates = b_gates.at[:, hidden:2 * hidden].set(1.0)  # forget-gate bias
    w_out = 0.1 * jax.random.normal(k2, (hidden, imgch), jnp.float32)
    b_out = jnp.zeros((1, imgch), jnp.float32)
    return {"w_gates": w_gates, "b_gates": b_gates, "w_out": w_out, "b_out": b_out}


# --------------------------------- main --------------------------------------

if __name__ == "__main__":
    batch, seqlen, imght, imgwd, imgch = 2, 4, 8, 8, 4
    hidden = 8
    numiterations = 3

    key = jax.random.PRNGKey(0)
    kx, kp = jax.random.split(key)
    seq_tensor = jax.random.normal(
        kx, (batch, seqlen, imght, imgwd, imgch), jnp.float32
    )
    params = init_params(kp, imgch, hidden)

    fwd = jax.jit(
        functools.partial(network_convlstm_forward, numiterations=numiterations)
    )
    next_frames = fwd(seq_tensor, params)
    jax.block_until_ready(next_frames)

    assert next_frames.shape == (batch, numiterations, imgch, imght, imgwd)
    assert next_frames.dtype == jnp.float32
    assert bool(jnp.all(jnp.isfinite(next_frames)))
    print("KERNEL_OK")
</pallas_src>

<mosaic_0001>
module attributes {stable_mosaic.version = 11 : i64} {
  func.func @_fused_convlstm_kernel(%arg0: i32, %arg1: memref<1x2x10x10x4xf32, #tpu.memory_space<vmem>>, %arg2: memref<108x32xbf16, #tpu.memory_space<vmem>>, %arg3: memref<1x32xf32, #tpu.memory_space<vmem>>, %arg4: memref<8x4xf32, #tpu.memory_space<vmem>>, %arg5: memref<1x4xf32, #tpu.memory_space<vmem>>, %arg6: memref<1x128x4xf32, #tpu.memory_space<vmem>>, %arg7: memref<2x10x10x4xf32, #tpu.memory_space<vmem>>, %arg8: memref<2x10x10x8xf32, #tpu.memory_space<vmem>>, %arg9: memref<128x8xf32, #tpu.memory_space<vmem>>, %arg10: memref<2x8x8x108xf32, #tpu.memory_space<vmem>>) attributes {dimension_semantics = [#tpu.dimension_semantics<arbitrary>], iteration_bounds = array<i64: 7>, scalar_prefetch = 0 : i64, scratch_operands = 4 : i64, tpu.core_type = #tpu.core_type<tc>, window_params = [{transform_indices = @transform_0, window_bounds = array<i64: 1, 2, 10, 10, 4>}, {pipeline_mode = #tpu.pipeline_mode<synchronous>, transform_indices = @transform_1, window_bounds = array<i64: 108, 32>}, {pipeline_mode = #tpu.pipeline_mode<synchronous>, transform_indices = @transform_2, window_bounds = array<i64: 1, 32>}, {pipeline_mode = #tpu.pipeline_mode<synchronous>, transform_indices = @transform_3, window_bounds = array<i64: 8, 4>}, {pipeline_mode = #tpu.pipeline_mode<synchronous>, transform_indices = @transform_4, window_bounds = array<i64: 1, 4>}, {transform_indices = @transform_5, window_bounds = array<i64: 1, 128, 4>}]} {
    %c0_i32 = arith.constant 0 : i32
    %0 = arith.cmpi eq, %arg0, %c0_i32 : i32
    %1 = arith.extui %0 : i1 to i32
    %c0_i32_0 = arith.constant 0 : i32
    %2 = arith.cmpi ne, %1, %c0_i32_0 : i32
    scf.if %2 {
      %cst_92 = arith.constant 0.000000e+00 : f32
      %94 = vector.broadcast %cst_92 : f32 to vector<2x10x10x8xf32>
      %c0_93 = arith.constant 0 : index
      %c0_94 = arith.constant 0 : index
      %c0_95 = arith.constant 0 : index
      %c0_96 = arith.constant 0 : index
      %95 = vector.load %arg8[%c0_93, %c0_94, %c0_95, %c0_96] : memref<2x10x10x8xf32, #tpu.memory_space<vmem>>, vector<2x10x10x8xf32>
      tpu.vector_store %arg8[%c0_93, %c0_94, %c0_95, %c0_96], %94 {strides = array<i32>} : memref<2x10x10x8xf32, #tpu.memory_space<vmem>>, vector<2x10x10x8xf32>,
      %cst_97 = arith.constant 0.000000e+00 : f32
      %96 = vector.broadcast %cst_97 : f32 to vector<2x10x10x4xf32>
      %c0_98 = arith.constant 0 : index
      %c0_99 = arith.constant 0 : index
      %c0_100 = arith.constant 0 : index
      %c0_101 = arith.constant 0 : index
      %97 = vector.load %arg7[%c0_98, %c0_99, %c0_100, %c0_101] : memref<2x10x10x4xf32, #tpu.memory_space<vmem>>, vector<2x10x10x4xf32>
      tpu.vector_store %arg7[%c0_98, %c0_99, %c0_100, %c0_101], %96 {strides = array<i32>} : memref<2x10x10x4xf32, #tpu.memory_space<vmem>>, vector<2x10x10x4xf32>,
      %cst_102 = arith.constant 0.000000e+00 : f32
      %98 = vector.broadcast %cst_102 : f32 to vector<128x8xf32>
      %c0_103 = arith.constant 0 : index
      %c0_104 = arith.constant 0 : index
      %99 = vector.load %arg9[%c0_103, %c0_104] : memref<128x8xf32, #tpu.memory_space<vmem>>, vector<128x8xf32>
      tpu.vector_store %arg9[%c0_103, %c0_104], %98 {strides = array<i32>} : memref<128x8xf32, #tpu.memory_space<vmem>>, vector<128x8xf32>,
    } else {
    }
    %c0 = arith.constant 0 : index
    %c0_1 = arith.constant 0 : index
    %c0_2 = arith.constant 0 : index
    %c0_3 = arith.constant 0 : index
    %3 = vector.load %arg8[%c0, %c0_1, %c0_2, %c0_3] : memref<2x10x10x8xf32, #tpu.memory_space<vmem>>, vector<2x10x10x8xf32>
    %4 = vector.extract_strided_slice %3 {offsets = [0, 1, 1, 0], sizes = [2, 8, 8, 8], strides = [1, 1, 1, 1]} : vector<2x10x10x8xf32> to vector<2x8x8x8xf32>
    %5 = vector.shape_cast %4 : vector<2x8x8x8xf32> to vector<128x8xf32>
    %c0_4 = arith.constant 0 : index
    %c0_5 = arith.constant 0 : index
    %6 = vector.load %arg4[%c0_4, %c0_5] : memref<8x4xf32, #tpu.memory_space<vmem>>, vector<8x4xf32>
    %cst = arith.constant dense<0.000000e+00> : vector<128x4xf32>
    %7 = tpu.matmul %5, %6, %cst {dimension_numbers = #tpu.dot_dimension_numbers<[1], [0], [0], [1], [0, 0, 1, 1], [], []>} : vector<128x8xf32>, vector<8x4xf32>, vector<128x4xf32> -> vector<128x4xf32>
    %c0_6 = arith.constant 0 : index
    %c0_7 = arith.constant 0 : index
    %8 = vector.load %arg5[%c0_6, %c0_7] : memref<1x4xf32, #tpu.memory_space<vmem>>, vector<1x4xf32>
    %9 = vector.broadcast %8 : vector<1x4xf32> to vector<128x4xf32>
    %10 = arith.addf %7, %9 : vector<128x4xf32>
    %c0_8 = arith.constant 0 : index
    %c0_9 = arith.constant 0 : index
    %c0_10 = arith.constant 0 : index
    %11 = vector.load %arg6[%c0_8, %c0_9, %c0_10] : memref<1x128x4xf32, #tpu.memory_space<vmem>>, vector<1x128x4xf32>
    %12 = vector.shape_cast %11 : vector<1x128x4xf32> to vector<128x4xf32>
    %13 = vector.shape_cast %10 : vector<128x4xf32> to vector<1x128x4xf32>
    tpu.vector_store %arg6[%c0_8, %c0_9, %c0_10], %13 {strides = array<i32>} : memref<1x128x4xf32, #tpu.memory_space<vmem>>, vector<1x128x4xf32>,
    %c4_i32 = arith.constant 4 : i32
    %14 = arith.cmpi slt, %arg0, %c4_i32 : i32
    %15 = arith.extui %14 : i1 to i32
    %c0_i32_11 = arith.constant 0 : i32
    %16 = arith.cmpi ne, %15, %c0_i32_11 : i32
    scf.if %16 {
      %c0_92 = arith.constant 0 : index
      %c0_93 = arith.constant 0 : index
      %c0_94 = arith.constant 0 : index
      %c0_95 = arith.constant 0 : index
      %c0_96 = arith.constant 0 : index
      %94 = vector.load %arg1[%c0_92, %c0_93, %c0_94, %c0_95, %c0_96] : memref<1x2x10x10x4xf32, #tpu.memory_space<vmem>>, vector<1x2x10x10x4xf32>
      %95 = vector.shape_cast %94 : vector<1x2x10x10x4xf32> to vector<2x10x10x4xf32>
      %c0_97 = arith.constant 0 : index
      %c0_98 = arith.constant 0 : index
      %c0_99 = arith.constant 0 : index
      %c0_100 = arith.constant 0 : index
      %96 = vector.load %arg7[%c0_97, %c0_98, %c0_99, %c0_100] : memref<2x10x10x4xf32, #tpu.memory_space<vmem>>, vector<2x10x10x4xf32>
      tpu.vector_store %arg7[%c0_97, %c0_98, %c0_99, %c0_100], %95 {strides = array<i32>} : memref<2x10x10x4xf32, #tpu.memory_space<vmem>>, vector<2x10x10x4xf32>,
    } else {
    }
    %c4_i32_12 = arith.constant 4 : i32
    %17 = arith.cmpi sge, %arg0, %c4_i32_12 : i32
    %18 = arith.extui %17 : i1 to i32
    %c0_i32_13 = arith.constant 0 : i32
    %19 = arith.cmpi ne, %18, %c0_i32_13 : i32
    scf.if %19 {
      %94 = vector.shape_cast %10 : vector<128x4xf32> to vector<2x8x8x4xf32>
      %c0_92 = arith.constant 0 : index
      %c1_93 = arith.constant 1 : index
      %c1_94 = arith.constant 1 : index
      %c0_95 = arith.constant 0 : index
      %95 = vector.load %arg7[%c0_92, %c1_93, %c1_94, %c0_95] : memref<2x10x10x4xf32, #tpu.memory_space<vmem>>, vector<2x8x8x4xf32>
      tpu.vector_store %arg7[%c0_92, %c1_93, %c1_94, %c0_95], %94 {strides = array<i32>} : memref<2x10x10x4xf32, #tpu.memory_space<vmem>>, vector<2x8x8x4xf32>,
    } else {
    }
    %c0_14 = arith.constant 0 : index
    %c0_15 = arith.constant 0 : index
    %c0_16 = arith.constant 0 : index
    %c0_17 = arith.constant 0 : index
    %20 = vector.load %arg7[%c0_14, %c0_15, %c0_16, %c0_17] : memref<2x10x10x4xf32, #tpu.memory_space<vmem>>, vector<2x10x10x4xf32>
    %21 = vector.extract_strided_slice %20 {offsets = [0, 0, 0, 0], sizes = [2, 8, 8, 4], strides = [1, 1, 1, 1]} : vector<2x10x10x4xf32> to vector<2x8x8x4xf32>
    %c0_18 = arith.constant 0 : index
    %c0_19 = arith.constant 0 : index
    %c0_20 = arith.constant 0 : index
    %c0_21 = arith.constant 0 : index
    %22 = vector.load %arg10[%c0_18, %c0_19, %c0_20, %c0_21] : memref<2x8x8x108xf32, #tpu.memory_space<vmem>>, vector<2x8x8x4xf32>
    tpu.vector_store %arg10[%c0_18, %c0_19, %c0_20, %c0_21], %21 {strides = array<i32>} : memref<2x8x8x108xf32, #tpu.memory_space<vmem>>, vector<2x8x8x4xf32>,
    %23 = vector.extract_strided_slice %3 {offsets = [0, 0, 0, 0], sizes = [2, 8, 8, 8], strides = [1, 1, 1, 1]} : vector<2x10x10x8xf32> to vector<2x8x8x8xf32>
    %c0_22 = arith.constant 0 : index
    %c0_23 = arith.constant 0 : index
    %c0_24 = arith.constant 0 : index
    %c4 = arith.constant 4 : index
    %24 = vector.load %arg10[%c0_22, %c0_23, %c0_24, %c4] : memref<2x8x8x108xf32, #tpu.memory_space<vmem>>, vector<2x8x8x8xf32>
    tpu.vector_store %arg10[%c0_22, %c0_23, %c0_24, %c4], %23 {strides = array<i32>} : memref<2x8x8x108xf32, #tpu.memory_space<vmem>>, vector<2x8x8x8xf32>,
    %25 = vector.extract_strided_slice %20 {offsets = [0, 0, 1, 0], sizes = [2, 8, 8, 4], strides = [1, 1, 1, 1]} : vector<2x10x10x4xf32> to vector<2x8x8x4xf32>
    %c0_25 = arith.constant 0 : index
    %c0_26 = arith.constant 0 : index
    %c0_27 = arith.constant 0 : index
    %c12 = arith.constant 12 : index
    %26 = vector.load %arg10[%c0_25, %c0_26, %c0_27, %c12] : memref<2x8x8x108xf32, #tpu.memory_space<vmem>>, vector<2x8x8x4xf32>
    tpu.vector_store %arg10[%c0_25, %c0_26, %c0_27, %c12], %25 {strides = array<i32>} : memref<2x8x8x108xf32, #tpu.memory_space<vmem>>, vector<2x8x8x4xf32>,
    %27 = vector.extract_strided_slice %3 {offsets = [0, 0, 1, 0], sizes = [2, 8, 8, 8], strides = [1, 1, 1, 1]} : vector<2x10x10x8xf32> to vector<2x8x8x8xf32>
    %c0_28 = arith.constant 0 : index
    %c0_29 = arith.constant 0 : index
    %c0_30 = arith.constant 0 : index
    %c16 = arith.constant 16 : index
    %28 = vector.load %arg10[%c0_28, %c0_29, %c0_30, %c16] : memref<2x8x8x108xf32, #tpu.memory_space<vmem>>, vector<2x8x8x8xf32>
    tpu.vector_store %arg10[%c0_28, %c0_29, %c0_30, %c16], %27 {strides = array<i32>} : memref<2x8x8x108xf32, #tpu.memory_space<vmem>>, vector<2x8x8x8xf32>,
    %29 = vector.extract_strided_slice %20 {offsets = [0, 0, 2, 0], sizes = [2, 8, 8, 4], strides = [1, 1, 1, 1]} : vector<2x10x10x4xf32> to vector<2x8x8x4xf32>
    %c0_31 = arith.constant 0 : index
    %c0_32 = arith.constant 0 : index
    %c0_33 = arith.constant 0 : index
    %c24 = arith.constant 24 : index
    %30 = vector.load %arg10[%c0_31, %c0_32, %c0_33, %c24] : memref<2x8x8x108xf32, #tpu.memory_space<vmem>>, vector<2x8x8x4xf32>
    tpu.vector_store %arg10[%c0_31, %c0_32, %c0_33, %c24], %29 {strides = array<i32>} : memref<2x8x8x108xf32, #tpu.memory_space<vmem>>, vector<2x8x8x4xf32>,
    %31 = vector.extract_strided_slice %3 {offsets = [0, 0, 2, 0], sizes = [2, 8, 8, 8], strides = [1, 1, 1, 1]} : vector<2x10x10x8xf32> to vector<2x8x8x8xf32>
    %c0_34 = arith.constant 0 : index
    %c0_35 = arith.constant 0 : index
    %c0_36 = arith.constant 0 : index
    %c28 = arith.constant 28 : index
    %32 = vector.load %arg10[%c0_34, %c0_35, %c0_36, %c28] : memref<2x8x8x108xf32, #tpu.memory_space<vmem>>, vector<2x8x8x8xf32>
    tpu.vector_store %arg10[%c0_34, %c0_35, %c0_36, %c28], %31 {strides = array<i32>} : memref<2x8x8x108xf32, #tpu.memory_space<vmem>>, vector<2x8x8x8xf32>,
    %33 = vector.extract_strided_slice %20 {offsets = [0, 1, 0, 0], sizes = [2, 8, 8, 4], strides = [1, 1, 1, 1]} : vector<2x10x10x4xf32> to vector<2x8x8x4xf32>
    %c0_37 = arith.constant 0 : index
    %c0_38 = arith.constant 0 : index
    %c0_39 = arith.constant 0 : index
    %c36 = arith.constant 36 : index
    %34 = vector.load %arg10[%c0_37, %c0_38, %c0_39, %c36] : memref<2x8x8x108xf32, #tpu.memory_space<vmem>>, vector<2x8x8x4xf32>
    tpu.vector_store %arg10[%c0_37, %c0_38, %c0_39, %c36], %33 {strides = array<i32>} : memref<2x8x8x108xf32, #tpu.memory_space<vmem>>, vector<2x8x8x4xf32>,
    %35 = vector.extract_strided_slice %3 {offsets = [0, 1, 0, 0], sizes = [2, 8, 8, 8], strides = [1, 1, 1, 1]} : vector<2x10x10x8xf32> to vector<2x8x8x8xf32>
    %c0_40 = arith.constant 0 : index
    %c0_41 = arith.constant 0 : index
    %c0_42 = arith.constant 0 : index
    %c40 = arith.constant 40 : index
    %36 = vector.load %arg10[%c0_40, %c0_41, %c0_42, %c40] : memref<2x8x8x108xf32, #tpu.memory_space<vmem>>, vector<2x8x8x8xf32>
    tpu.vector_store %arg10[%c0_40, %c0_41, %c0_42, %c40], %35 {strides = array<i32>} : memref<2x8x8x108xf32, #tpu.memory_space<vmem>>, vector<2x8x8x8xf32>,
    %37 = vector.extract_strided_slice %20 {offsets = [0, 1, 1, 0], sizes = [2, 8, 8, 4], strides = [1, 1, 1, 1]} : vector<2x10x10x4xf32> to vector<2x8x8x4xf32>
    %c0_43 = arith.constant 0 : index
    %c0_44 = arith.constant 0 : index
    %c0_45 = arith.constant 0 : index
    %c48 = arith.constant 48 : index
    %38 = vector.load %arg10[%c0_43, %c0_44, %c0_45, %c48] : memref<2x8x8x108xf32, #tpu.memory_space<vmem>>, vector<2x8x8x4xf32>
    tpu.vector_store %arg10[%c0_43, %c0_44, %c0_45, %c48], %37 {strides = array<i32>} : memref<2x8x8x108xf32, #tpu.memory_space<vmem>>, vector<2x8x8x4xf32>,
    %39 = vector.extract_strided_slice %3 {offsets = [0, 1, 1, 0], sizes = [2, 8, 8, 8], strides = [1, 1, 1, 1]} : vector<2x10x10x8xf32> to vector<2x8x8x8xf32>
    %c0_46 = arith.constant 0 : index
    %c0_47 = arith.constant 0 : index
    %c0_48 = arith.constant 0 : index
    %c52 = arith.constant 52 : index
    %40 = vector.load %arg10[%c0_46, %c0_47, %c0_48, %c52] : memref<2x8x8x108xf32, #tpu.memory_space<vmem>>, vector<2x8x8x8xf32>
    tpu.vector_store %arg10[%c0_46, %c0_47, %c0_48, %c52], %39 {strides = array<i32>} : memref<2x8x8x108xf32, #tpu.memory_space<vmem>>, vector<2x8x8x8xf32>,
    %41 = vector.extract_strided_slice %20 {offsets = [0, 1, 2, 0], sizes = [2, 8, 8, 4], strides = [1, 1, 1, 1]} : vector<2x10x10x4xf32> to vector<2x8x8x4xf32>
    %c0_49 = arith.constant 0 : index
    %c0_50 = arith.constant 0 : index
    %c0_51 = arith.constant 0 : index
    %c60 = arith.constant 60 : index
    %42 = vector.load %arg10[%c0_49, %c0_50, %c0_51, %c60] : memref<2x8x8x108xf32, #tpu.memory_space<vmem>>, vector<2x8x8x4xf32>
    tpu.vector_store %arg10[%c0_49, %c0_50, %c0_51, %c60], %41 {strides = array<i32>} : memref<2x8x8x108xf32, #tpu.memory_space<vmem>>, vector<2x8x8x4xf32>,
    %43 = vector.extract_strided_slice %3 {offsets = [0, 1, 2, 0], sizes = [2, 8, 8, 8], strides = [1, 1, 1, 1]} : vector<2x10x10x8xf32> to vector<2x8x8x8xf32>
    %c0_52 = arith.constant 0 : index
    %c0_53 = arith.constant 0 : index
    %c0_54 = arith.constant 0 : index
    %c64 = arith.constant 64 : index
    %44 = vector.load %arg10[%c0_52, %c0_53, %c0_54, %c64] : memref<2x8x8x108xf32, #tpu.memory_space<vmem>>, vector<2x8x8x8xf32>
    tpu.vector_store %arg10[%c0_52, %c0_53, %c0_54, %c64], %43 {strides = array<i32>} : memref<2x8x8x108xf32, #tpu.memory_space<vmem>>, vector<2x8x8x8xf32>,
    %45 = vector.extract_strided_slice %20 {offsets = [0, 2, 0, 0], sizes = [2, 8, 8, 4], strides = [1, 1, 1, 1]} : vector<2x10x10x4xf32> to vector<2x8x8x4xf32>
    %c0_55 = arith.constant 0 : index
    %c0_56 = arith.constant 0 : index
    %c0_57 = arith.constant 0 : index
    %c72 = arith.constant 72 : index
    %46 = vector.load %arg10[%c0_55, %c0_56, %c0_57, %c72] : memref<2x8x8x108xf32, #tpu.memory_space<vmem>>, vector<2x8x8x4xf32>
    tpu.vector_store %arg10[%c0_55, %c0_56, %c0_57, %c72], %45 {strides = array<i32>} : memref<2x8x8x108xf32, #tpu.memory_space<vmem>>, vector<2x8x8x4xf32>,
    %47 = vector.extract_strided_slice %3 {offsets = [0, 2, 0, 0], sizes = [2, 8, 8, 8], strides = [1, 1, 1, 1]} : vector<2x10x10x8xf32> to vector<2x8x8x8xf32>
    %c0_58 = arith.constant 0 : index
    %c0_59 = arith.constant 0 : index
    %c0_60 = arith.constant 0 : index
    %c76 = arith.constant 76 : index
    %48 = vector.load %arg10[%c0_58, %c0_59, %c0_60, %c76] : memref<2x8x8x108xf32, #tpu.memory_space<vmem>>, vector<2x8x8x8xf32>
    tpu.vector_store %arg10[%c0_58, %c0_59, %c0_60, %c76], %47 {strides = array<i32>} : memref<2x8x8x108xf32, #tpu.memory_space<vmem>>, vector<2x8x8x8xf32>,
    %49 = vector.extract_strided_slice %20 {offsets = [0, 2, 1, 0], sizes = [2, 8, 8, 4], strides = [1, 1, 1, 1]} : vector<2x10x10x4xf32> to vector<2x8x8x4xf32>
    %c0_61 = arith.constant 0 : index
    %c0_62 = arith.constant 0 : index
    %c0_63 = arith.constant 0 : index
    %c84 = arith.constant 84 : index
    %50 = vector.load %arg10[%c0_61, %c0_62, %c0_63, %c84] : memref<2x8x8x108xf32, #tpu.memory_space<vmem>>, vector<2x8x8x4xf32>
    tpu.vector_store %arg10[%c0_61, %c0_62, %c0_63, %c84], %49 {strides = array<i32>} : memref<2x8x8x108xf32, #tpu.memory_space<vmem>>, vector<2x8x8x4xf32>,
    %51 = vector.extract_strided_slice %3 {offsets = [0, 2, 1, 0], sizes = [2, 8, 8, 8], strides = [1, 1, 1, 1]} : vector<2x10x10x8xf32> to vector<2x8x8x8xf32>
    %c0_64 = arith.constant 0 : index
    %c0_65 = arith.constant 0 : index
    %c0_66 = arith.constant 0 : index
    %c88 = arith.constant 88 : index
    %52 = vector.load %arg10[%c0_64, %c0_65, %c0_66, %c88] : memref<2x8x8x108xf32, #tpu.memory_space<vmem>>, vector<2x8x8x8xf32>
    tpu.vector_store %arg10[%c0_64, %c0_65, %c0_66, %c88], %51 {strides = array<i32>} : memref<2x8x8x108xf32, #tpu.memory_space<vmem>>, vector<2x8x8x8xf32>,
    %53 = vector.extract_strided_slice %20 {offsets = [0, 2, 2, 0], sizes = [2, 8, 8, 4], strides = [1, 1, 1, 1]} : vector<2x10x10x4xf32> to vector<2x8x8x4xf32>
    %c0_67 = arith.constant 0 : index
    %c0_68 = arith.constant 0 : index
    %c0_69 = arith.constant 0 : index
    %c96 = arith.constant 96 : index
    %54 = vector.load %arg10[%c0_67, %c0_68, %c0_69, %c96] : memref<2x8x8x108xf32, #tpu.memory_space<vmem>>, vector<2x8x8x4xf32>
    tpu.vector_store %arg10[%c0_67, %c0_68, %c0_69, %c96], %53 {strides = array<i32>} : memref<2x8x8x108xf32, #tpu.memory_space<vmem>>, vector<2x8x8x4xf32>,
    %55 = vector.extract_strided_slice %3 {offsets = [0, 2, 2, 0], sizes = [2, 8, 8, 8], strides = [1, 1, 1, 1]} : vector<2x10x10x8xf32> to vector<2x8x8x8xf32>
    %c0_70 = arith.constant 0 : index
    %c0_71 = arith.constant 0 : index
    %c0_72 = arith.constant 0 : index
    %c100 = arith.constant 100 : index
    %56 = vector.load %arg10[%c0_70, %c0_71, %c0_72, %c100] : memref<2x8x8x108xf32, #tpu.memory_space<vmem>>, vector<2x8x8x8xf32>
    tpu.vector_store %arg10[%c0_70, %c0_71, %c0_72, %c100], %55 {strides = array<i32>} : memref<2x8x8x108xf32, #tpu.memory_space<vmem>>, vector<2x8x8x8xf32>,
    %c0_73 = arith.constant 0 : index
    %c0_74 = arith.constant 0 : index
    %c0_75 = arith.constant 0 : index
    %c0_76 = arith.constant 0 : index
    %57 = vector.load %arg10[%c0_73, %c0_74, %c0_75, %c0_76] : memref<2x8x8x108xf32, #tpu.memory_space<vmem>>, vector<2x8x8x108xf32>
    %58 = vector.shape_cast %57 : vector<2x8x8x108xf32> to vector<128x108xf32>
    %59 = arith.truncf %58 : vector<128x108xf32> to vector<128x108xbf16>
    %c0_77 = arith.constant 0 : index
    %c0_78 = arith.constant 0 : index
    %60 = vector.load %arg2[%c0_77, %c0_78] : memref<108x32xbf16, #tpu.memory_space<vmem>>, vector<108x32xbf16>
    %cst_79 = arith.constant dense<0.000000e+00> : vector<128x32xf32>
    %61 = tpu.matmul %59, %60, %cst_79 {dimension_numbers = #tpu.dot_dimension_numbers<[1], [0], [0], [1], [0, 0, 1, 1], [], []>} : vector<128x108xbf16>, vector<108x32xbf16>, vector<128x32xf32> -> vector<128x32xf32>
    %c0_80 = arith.constant 0 : index
    %c0_81 = arith.constant 0 : index
    %62 = vector.load %arg3[%c0_80, %c0_81] : memref<1x32xf32, #tpu.memory_space<vmem>>, vector<1x32xf32>
    %63 = vector.broadcast %62 : vector<1x32xf32> to vector<128x32xf32>
    %64 = arith.addf %61, %63 : vector<128x32xf32>
    %65 = vector.extract_strided_slice %64 {offsets = [0, 0], sizes = [128, 8], strides = [1, 1]} : vector<128x32xf32> to vector<128x8xf32>
    %66 = arith.negf %65 : vector<128x8xf32>
    %67 = math.exp %66 : vector<128x8xf32>
    %cst_82 = arith.constant 1.000000e+00 : f32
    %68 = vector.broadcast %cst_82 : f32 to vector<128x8xf32>
    %69 = arith.addf %68, %67 : vector<128x8xf32>
    %70 = arith.divf %68, %69 : vector<128x8xf32>
    %71 = vector.extract_strided_slice %64 {offsets = [0, 8], sizes = [128, 8], strides = [1, 1]} : vector<128x32xf32> to vector<128x8xf32>
    %72 = arith.negf %71 : vector<128x8xf32>
    %73 = math.exp %72 : vector<128x8xf32>
    %cst_83 = arith.constant 1.000000e+00 : f32
    %74 = vector.broadcast %cst_83 : f32 to vector<128x8xf32>
    %75 = arith.addf %74, %73 : vector<128x8xf32>
    %76 = arith.divf %74, %75 : vector<128x8xf32>
    %77 = vector.extract_strided_slice %64 {offsets = [0, 16], sizes = [128, 8], strides = [1, 1]} : vector<128x32xf32> to vector<128x8xf32>
    %78 = math.tanh %77 : vector<128x8xf32>
    %79 = vector.extract_strided_slice %64 {offsets = [0, 24], sizes = [128, 8], strides = [1, 1]} : vector<128x32xf32> to vector<128x8xf32>
    %80 = arith.negf %79 : vector<128x8xf32>
    %81 = math.exp %80 : vector<128x8xf32>
    %cst_84 = arith.constant 1.000000e+00 : f32
    %82 = vector.broadcast %cst_84 : f32 to vector<128x8xf32>
    %83 = arith.addf %82, %81 : vector<128x8xf32>
    %84 = arith.divf %82, %83 : vector<128x8xf32>
    %c0_85 = arith.constant 0 : index
    %c0_86 = arith.constant 0 : index
    %85 = vector.load %arg9[%c0_85, %c0_86] : memref<128x8xf32, #tpu.memory_space<vmem>>, vector<128x8xf32>
    %86 = arith.mulf %76, %85 : vector<128x8xf32>
    %87 = arith.mulf %70, %78 : vector<128x8xf32>
    %88 = arith.addf %86, %87 : vector<128x8xf32>
    %89 = math.tanh %88 : vector<128x8xf32>
    %90 = arith.mulf %84, %89 : vector<128x8xf32>
    %c0_87 = arith.constant 0 : index
    %c0_88 = arith.constant 0 : index
    %91 = vector.load %arg9[%c0_87, %c0_88] : memref<128x8xf32, #tpu.memory_space<vmem>>, vector<128x8xf32>
    tpu.vector_store %arg9[%c0_87, %c0_88], %88 {strides = array<i32>} : memref<128x8xf32, #tpu.memory_space<vmem>>, vector<128x8xf32>,
    %92 = vector.shape_cast %90 : vector<128x8xf32> to vector<2x8x8x8xf32>
    %c0_89 = arith.constant 0 : index
    %c1 = arith.constant 1 : index
    %c1_90 = arith.constant 1 : index
    %c0_91 = arith.constant 0 : index
    %93 = vector.load %arg8[%c0_89, %c1, %c1_90, %c0_91] : memref<2x10x10x8xf32, #tpu.memory_space<vmem>>, vector<2x8x8x8xf32>
    tpu.vector_store %arg8[%c0_89, %c1, %c1_90, %c0_91], %92 {strides = array<i32>} : memref<2x10x10x8xf32, #tpu.memory_space<vmem>>, vector<2x8x8x8xf32>,
    return
  }
  func.func @transform_0(%arg0: i32) -> (i32, i32, i32, i32, i32) {
    %c0_i32 = arith.constant 0 : i32
    %c0_i32_0 = arith.constant 0 : i32
    %c0_i32_1 = arith.constant 0 : i32
    %c0_i32_2 = arith.constant 0 : i32
    %c0_i32_3 = arith.constant 0 : i32
    return %arg0, %c0_i32, %c0_i32_0, %c0_i32_1, %c0_i32_2 : i32, i32, i32, i32, i32
  }
  func.func @transform_1(%arg0: i32) -> (i32, i32) {
    %c0_i32 = arith.constant 0 : i32
    %c0_i32_0 = arith.constant 0 : i32
    %c0_i32_1 = arith.constant 0 : i32
    return %c0_i32, %c0_i32_0 : i32, i32
  }
  func.func @transform_2(%arg0: i32) -> (i32, i32) {
    %c0_i32 = arith.constant 0 : i32
    %c0_i32_0 = arith.constant 0 : i32
    %c0_i32_1 = arith.constant 0 : i32
    return %c0_i32, %c0_i32_0 : i32, i32
  }
  func.func @transform_3(%arg0: i32) -> (i32, i32) {
    %c0_i32 = arith.constant 0 : i32
    %c0_i32_0 = arith.constant 0 : i32
    %c0_i32_1 = arith.constant 0 : i32
    return %c0_i32, %c0_i32_0 : i32, i32
  }
  func.func @transform_4(%arg0: i32) -> (i32, i32) {
    %c0_i32 = arith.constant 0 : i32
    %c0_i32_0 = arith.constant 0 : i32
    %c0_i32_1 = arith.constant 0 : i32
    return %c0_i32, %c0_i32_0 : i32, i32
  }
  func.func @transform_5(%arg0: i32) -> (i32, i32, i32) {
    %c0_i32 = arith.constant 0 : i32
    %c0_i32_0 = arith.constant 0 : i32
    %c0_i32_1 = arith.constant 0 : i32
    return %arg0, %c0_i32, %c0_i32_0 : i32, i32, i32
  }
}

</mosaic_0001>

<llo_original>
// kernel: network_convlstm_forward.1
$region0: #{network_convlstm_forward.1}
  #allocation0 [shape = 'u32[]', space=smem, size = 0x4, offset = 0x4, fixed_abs, tag = 'smem constant byte address 0x4 - core index']
  #allocation1 [shape = 'u32[144,128]{1,0:T(1,128)}', space=vmem, size = 0x12000, scoped, tag = 'internal scratch']
  #allocation2 [shape = 'f32[2,10,10,4]{3,2,1,0:T(8,128)}', space=vmem, size = 0x28000, scoped, tag = 'scratch operand']
  #allocation3 [shape = 'f32[2,10,10,8]{3,2,1,0:T(8,128)}', space=vmem, size = 0x28000, scoped, tag = 'scratch operand']
  #allocation4 [shape = 'f32[128,8]{1,0:T(8,128)}', space=vmem, size = 0x10000, scoped, tag = 'scratch operand']
  #allocation5 [shape = 'f32[2,8,8,108]{3,2,1,0:T(8,128)}', space=vmem, size = 0x10000, scoped, tag = 'scratch operand']
  %s0 = inlined_call_operand.vmem [shape: f32[7,2,10,10,4], index: 0, kind: input, shape index: {}]
  %s1 = inlined_call_operand.vmem [shape: bf16[108,32], index: 1, kind: input, shape index: {}]
  %s2 = inlined_call_operand.vmem [shape: f32[1,32], index: 2, kind: input, shape index: {}]
  %s3 = inlined_call_operand.vmem [shape: f32[8,4], index: 3, kind: input, shape index: {}]
  %s4 = inlined_call_operand.vmem [shape: f32[1,4], index: 4, kind: input, shape index: {}]
  %s5 = inlined_call_operand.vmem [shape: f32[7,128,4], index: 5, kind: output, shape index: {}]
  %s6 = sld [smem:[#allocation0]]
  $region65: #{network_convlstm_forward.1} parent=0
    _
  %s8 = ssub.s32 1, %s6
  %s9 = scalar_select 0, %s8, %s6
  loop: start=0, step=1, limit=9
  $region2: #{network_convlstm_forward.1} parent=0 // loop_pre_header
    _
  $region3: #{network_convlstm_forward.1} parent=0 // loop_header
    %s11 = sphi 0, %s15
    %p12 = scmp.ge.s32.totalorder %s11, 9
    %s21 = sphi 0, %s23
    %s24 = sphi 0, %s21
    %s25 = sphi 0, %s24
    %s41 = sphi 0, %s25
    %s45 = sphi 0, %s45
    %s47 = sphi 0, %s45
    %s48 = sphi 0, %s47
    %s62 = sphi 0, %s48
    %s66 = sphi 0, %s66
    %s68 = sphi 0, %s66
    %s69 = sphi 0, %s68
    %s83 = sphi 0, %s69
    %s87 = sphi 0, %s87
    %s89 = sphi 0, %s87
    %s90 = sphi 0, %s89
    %s104 = sphi 0, %s90
    %s108 = sphi 0, %s108
    %s110 = sphi 0, %s108
    %s111 = sphi 0, %s110
    %s125 = sphi 0, %s111
    %s131 = sphi 0, %s133
    %s134 = sphi 0, %s131
    %s135 = sphi 0, %s134
    %s151 = sphi 0, %s135
  $region4: #{network_convlstm_forward.1} parent=0 // loop_header_branch
    %14 = sbr.rel (%p12) target = $region8
  $region5: #{network_convlstm_forward.1} parent=0 // loop_body
    %s16 = ssub.s32 %s11, 1
    %s17 = ssub.s32 %s11, 2
    %s18 = sadd.s32 %s11, 1
    %s19 = ssub.s32 %s11, %s18
    %p20 = scmp.eq.s32.totalorder %s19, 0
    %s22 = sadd.s32 %s21, 1
    %s23 = scalar_select %p20, %s21, %s22
    %p26 = pneg %p20
    %p27 = scmp.eq.s32.totalorder %s11, 6
    %p28 = por %p26, %p27
    %p29 = scmp.ne.s32.totalorder %s21, %s24
    %p30 = scmp.eq.s32.totalorder %s11, 0
    %p31 = por %p29, %p30
    %p32 = scmp.ne.s32.totalorder %s21, %s24
    %p33 = scmp.eq.s32.totalorder %s16, 6
    %p34 = por %p32, %p33
    %p35 = scmp.ne.s32.totalorder %s24, %s25
    %p36 = scmp.eq.s32.totalorder %s16, 0
    %p37 = por %p35, %p36
    %p38 = scmp.ne.s32.totalorder %s24, %s25
    %p39 = scmp.eq.s32.totalorder %s17, 6
    %p40 = por %p38, %p39
    %p42 = scmp.ne.s32.totalorder %s25, %s41
    %p43 = scmp.eq.s32.totalorder %s17, 0
    %p44 = por %p42, %p43
    %s46 = sadd.s32 %s45, 1
    %p49 = scmp.eq.s32.totalorder %s11, 6
    %p50 = scmp.ne.s32.totalorder %s45, %s47
    %p51 = scmp.eq.s32.totalorder %s11, 0
    %p52 = por %p50, %p51
    %p53 = scmp.ne.s32.totalorder %s45, %s47
    %p54 = scmp.eq.s32.totalorder %s16, 6
    %p55 = por %p53, %p54
    %p56 = scmp.ne.s32.totalorder %s47, %s48
    %p57 = scmp.eq.s32.totalorder %s16, 0
    %p58 = por %p56, %p57
    %p59 = scmp.ne.s32.totalorder %s47, %s48
    %p60 = scmp.eq.s32.totalorder %s17, 6
    %p61 = por %p59, %p60
    %p63 = scmp.ne.s32.totalorder %s48, %s62
    %p64 = scmp.eq.s32.totalorder %s17, 0
    %p65 = por %p63, %p64
    %s67 = sadd.s32 %s66, 1
    %p70 = scmp.eq.s32.totalorder %s11, 6
    %p71 = scmp.ne.s32.totalorder %s66, %s68
    %p72 = scmp.eq.s32.totalorder %s11, 0
    %p73 = por %p71, %p72
    %p74 = scmp.ne.s32.totalorder %s66, %s68
    %p75 = scmp.eq.s32.totalorder %s16, 6
    %p76 = por %p74, %p75
    %p77 = scmp.ne.s32.totalorder %s68, %s69
    %p78 = scmp.eq.s32.totalorder %s16, 0
    %p79 = por %p77, %p78
    %p80 = scmp.ne.s32.totalorder %s68, %s69
    %p81 = scmp.eq.s32.totalorder %s17, 6
    %p82 = por %p80, %p81
    %p84 = scmp.ne.s32.totalorder %s69, %s83
    %p85 = scmp.eq.s32.totalorder %s17, 0
    %p86 = por %p84, %p85
    %s88 = sadd.s32 %s87, 1
    %p91 = scmp.eq.s32.totalorder %s11, 6
    %p92 = scmp.ne.s32.totalorder %s87, %s89
    %p93 = scmp.eq.s32.totalorder %s11, 0
    %p94 = por %p92, %p93
    %p95 = scmp.ne.s32.totalorder %s87, %s89
    %p96 = scmp.eq.s32.totalorder %s16, 6
    %p97 = por %p95, %p96
    %p98 = scmp.ne.s32.totalorder %s89, %s90
    %p99 = scmp.eq.s32.totalorder %s16, 0
    %p100 = por %p98, %p99
    %p101 = scmp.ne.s32.totalorder %s89, %s90
    %p102 = scmp.eq.s32.totalorder %s17, 6
    %p103 = por %p101, %p102
    %p105 = scmp.ne.s32.totalorder %s90, %s104
    %p106 = scmp.eq.s32.totalorder %s17, 0
    %p107 = por %p105, %p106
    %s109 = sadd.s32 %s108, 1
    %p112 = scmp.eq.s32.totalorder %s11, 6
    %p113 = scmp.ne.s32.totalorder %s108, %s110
    %p114 = scmp.eq.s32.totalorder %s11, 0
    %p115 = por %p113, %p114
    %p116 = scmp.ne.s32.totalorder %s108, %s110
    %p117 = scmp.eq.s32.totalorder %s16, 6
    %p118 = por %p116, %p117
    %p119 = scmp.ne.s32.totalorder %s110, %s111
    %p120 = scmp.eq.s32.totalorder %s16, 0
    %p121 = por %p119, %p120
    %p122 = scmp.ne.s32.totalorder %s110, %s111
    %p123 = scmp.eq.s32.totalorder %s17, 6
    %p124 = por %p122, %p123
    %p126 = scmp.ne.s32.totalorder %s111, %s125
    %p127 = scmp.eq.s32.totalorder %s17, 0
    %p128 = por %p126, %p127
    %s129 = ssub.s32 %s11, %s18
    %p130 = scmp.eq.s32.totalorder %s129, 0
    %s132 = sadd.s32 %s131, 1
    %s133 = scalar_select %p130, %s131, %s132
    %p136 = pneg %p130
    %p137 = scmp.eq.s32.totalorder %s11, 6
    %p138 = por %p136, %p137
    %p139 = scmp.ne.s32.totalorder %s131, %s134
    %p140 = scmp.eq.s32.totalorder %s11, 0
    %p141 = por %p139, %p140
    %p142 = scmp.ne.s32.totalorder %s131, %s134
    %p143 = scmp.eq.s32.totalorder %s16, 6
    %p144 = por %p142, %p143
    %p145 = scmp.ne.s32.totalorder %s134, %s135
    %p146 = scmp.eq.s32.totalorder %s16, 0
    %p147 = por %p145, %p146
    %p148 = scmp.ne.s32.totalorder %s134, %s135
    %p149 = scmp.eq.s32.totalorder %s17, 6
    %p150 = por %p148, %p149
    %p152 = scmp.ne.s32.totalorder %s135, %s151
    %p153 = scmp.eq.s32.totalorder %s17, 0
    %p154 = por %p152, %p153
    %p155 = scmp.le.s32.totalorder 1, %s11
    %p156 = scmp.lt.s32.totalorder %s11, 8
    %p157 = pnand %p155, %p156
    %p158 = pneg %p157
    // Predicated region
    $region9: #{network_convlstm_forward.1} parent=5 // pred_check
      _
    $region10: #{network_convlstm_forward.1} parent=5 // pred_check_branch
      %160 = sbr.rel (%p157) target = $region12
    $region11: #{network_convlstm_forward.1} parent=5 // pred_region
      %s161 = ssub.s32 %s11, 1
      // Predicated region
      $region13: #{network_convlstm_forward.1} parent=11 // pred_check
        %p162 = pneg %p58
      $region14: #{network_convlstm_forward.1} parent=11 // pred_check_branch
        %164 = sbr.rel (%p162) target = $region16
      $region15: #{network_convlstm_forward.1} parent=11 // pred_region
        _
      $region16: #{network_convlstm_forward.1} parent=11 // pred_fallthru
        _
      // Predicated region
      $region17: #{network_convlstm_forward.1} parent=11 // pred_check
        %p165 = pneg %p79
      $region18: #{network_convlstm_forward.1} parent=11 // pred_check_branch
        %167 = sbr.rel (%p165) target = $region20
      $region19: #{network_convlstm_forward.1} parent=11 // pred_region
        _
      $region20: #{network_convlstm_forward.1} parent=11 // pred_fallthru
        _
      // Predicated region
      $region21: #{network_convlstm_forward.1} parent=11 // pred_check
        %p168 = pneg %p100
      $region22: #{network_convlstm_forward.1} parent=11 // pred_check_branch
        %170 = sbr.rel (%p168) target = $region24
      $region23: #{network_convlstm_forward.1} parent=11 // pred_region
        _
      $region24: #{network_convlstm_forward.1} parent=11 // pred_fallthru
        _
      // Predicated region
      $region25: #{network_convlstm_forward.1} parent=11 // pred_check
        %p171 = pneg %p121
      $region26: #{network_convlstm_forward.1} parent=11 // pred_check_branch
        %173 = sbr.rel (%p171) target = $region28
      $region27: #{network_convlstm_forward.1} parent=11 // pred_region
        _
      $region28: #{network_convlstm_forward.1} parent=11 // pred_fallthru
        _
    $region12: #{network_convlstm_forward.1} parent=5 // pred_fallthru
      _
    %p174 = scmp.lt.s32.totalorder %s11, 7
    // Predicated region
    $region29: #{network_convlstm_forward.1} parent=5 // pred_check
      %p175 = pneg %p174
    $region30: #{network_convlstm_forward.1} parent=5 // pred_check_branch
      %177 = sbr.rel (%p175) target = $region32
    $region31: #{network_convlstm_forward.1} parent=5 // pred_region
      // Predicated region
      $region33: #{network_convlstm_forward.1} parent=31 // pred_check
        %p178 = pneg %p31
      $region34: #{network_convlstm_forward.1} parent=31 // pred_check_branch
        %180 = sbr.rel (%p178) target = $region36
      $region35: #{network_convlstm_forward.1} parent=31 // pred_region
        %p181 = scmp.lt.s32.totalorder %s11, 6
        %s182 = scalar_select %p181, %s11, 6
        %s183 = smul.addr %s182, 40
        %s184 = smul.addr %s183, 8
        %s185 = scalar_lea.vmem %s0, %s184
      $region36: #{network_convlstm_forward.1} parent=31 // pred_fallthru
        _
    $region32: #{network_convlstm_forward.1} parent=5 // pred_fallthru
      _
    %p186 = scmp.le.s32.totalorder 1, %s11
    %p187 = scmp.lt.s32.totalorder %s11, 8
    %p188 = pnand %p186, %p187
    %p189 = pneg %p188
    // Predicated region
    $region37: #{network_convlstm_forward.1} parent=5 // pred_check
      _
    $region38: #{network_convlstm_forward.1} parent=5 // pred_check_branch
      %191 = sbr.rel (%p188) target = $region40
    $region39: #{network_convlstm_forward.1} parent=5 // pred_region
      %s192 = ssub.s32 %s11, 1
      %p193 = scmp.lt.s32.totalorder %s16, 6
      %s194 = scalar_select %p193, %s16, 6
      %s195 = smul.addr %s194, 40
      %s196 = smul.addr %s195, 8
      %s197 = scalar_lea.vmem %s0, %s196
      %p198 = pneg %p37
      %p199 = pneg %p34
      %p200 = pneg %p58
      %p201 = pneg %p55
      %p202 = pneg %p79
      %p203 = pneg %p76
      %p204 = pneg %p100
      %p205 = pneg %p97
      %p206 = pneg %p121
      %p207 = pneg %p118
      %p208 = pneg %p147
      %p209 = pneg %p144
      %p210 = scmp.lt.s32.totalorder %s16, 6
      %s211 = scalar_select %p210, %s16, 6
      %s212 = smul.addr %s211, 16
      %s213 = smul.addr %s212, 8
      %s214 = scalar_lea.vmem %s5, %s213
      %p215 = scmp.lt.s32.totalorder %s16, 6
      %s216 = scalar_select %p215, %s16, 6
      %s217 = smul.addr %s216, 40
      %s218 = smul.addr %s217, 8
      %s219 = scalar_lea.vmem %s0, %s218
      %p220 = scmp.lt.s32.totalorder %s16, 6
      %s221 = scalar_select %p220, %s16, 6
      %s222 = smul.addr %s221, 16
      %s223 = smul.addr %s222, 8
      %s224 = scalar_lea.vmem %s5, %s223
      %p226 = scmp.eq.s32.totalorder %s16, 0
      // Predicated region
      $region41: #{network_convlstm_forward.1} parent=39 // pred_check
        %p227 = pneg %p226
      $region42: #{network_convlstm_forward.1} parent=39 // pred_check_branch
        %229 = sbr.rel (%p227) target = $region44
      $region43: #{network_convlstm_forward.1} parent=39 // pred_region
        %vm230 = vcmask 64512
        %231 = vst.msk [vmem:[#allocation3] sm:$0xff] %vm230, 0.0
        %vm232 = vcmask 58368
        %233 = vst.msk [vmem:[#allocation3 + $0x8] sm:$0x3] %vm232, 0.0
        %234 = vst.msk [vmem:[#allocation3 + $0x10] sm:$0xff] %vm230, 0.0
        %235 = vst.msk [vmem:[#allocation3 + $0x18] sm:$0x3] %vm232, 0.0
        %236 = vst.msk [vmem:[#allocation3 + $0x20] sm:$0xff] %vm230, 0.0
        %237 = vst.msk [vmem:[#allocation3 + $0x28] sm:$0x3] %vm232, 0.0
        %238 = vst.msk [vmem:[#allocation3 + $0x30] sm:$0xff] %vm230, 0.0
        %239 = vst.msk [vmem:[#allocation3 + $0x38] sm:$0x3] %vm232, 0.0
        %240 = vst.msk [vmem:[#allocation3 + $0x40] sm:$0xff] %vm230, 0.0
        %241 = vst.msk [vmem:[#allocation3 + $0x48] sm:$0x3] %vm232, 0.0
        %242 = vst.msk [vmem:[#allocation3 + $0x50] sm:$0xff] %vm230, 0.0
        %243 = vst.msk [vmem:[#allocation3 + $0x58] sm:$0x3] %vm232, 0.0
        %244 = vst.msk [vmem:[#allocation3 + $0x60] sm:$0xff] %vm230, 0.0
        %245 = vst.msk [vmem:[#allocation3 + $0x68] sm:$0x3] %vm232, 0.0
        %246 = vst.msk [vmem:[#allocation3 + $0x70] sm:$0xff] %vm230, 0.0
        %247 = vst.msk [vmem:[#allocation3 + $0x78] sm:$0x3] %vm232, 0.0
        %248 = vst.msk [vmem:[#allocation3 + $0x80] sm:$0xff] %vm230, 0.0
        %249 = vst.msk [vmem:[#allocation3 + $0x88] sm:$0x3] %vm232, 0.0
        %250 = vst.msk [vmem:[#allocation3 + $0x90] sm:$0xff] %vm230, 0.0
        %251 = vst.msk [vmem:[#allocation3 + $0x98] sm:$0x3] %vm232, 0.0
        %252 = vst.msk [vmem:[#allocation3 + $0xa0] sm:$0xff] %vm230, 0.0
        %253 = vst.msk [vmem:[#allocation3 + $0xa8] sm:$0x3] %vm232, 0.0
        %254 = vst.msk [vmem:[#allocation3 + $0xb0] sm:$0xff] %vm230, 0.0
        %255 = vst.msk [vmem:[#allocation3 + $0xb8] sm:$0x3] %vm232, 0.0
        %256 = vst.msk [vmem:[#allocation3 + $0xc0] sm:$0xff] %vm230, 0.0
        %257 = vst.msk [vmem:[#allocation3 + $0xc8] sm:$0x3] %vm232, 0.0
        %258 = vst.msk [vmem:[#allocation3 + $0xd0] sm:$0xff] %vm230, 0.0
        %259 = vst.msk [vmem:[#allocation3 + $0xd8] sm:$0x3] %vm232, 0.0
        %260 = vst.msk [vmem:[#allocation3 + $0xe0] sm:$0xff] %vm230, 0.0
        %261 = vst.msk [vmem:[#allocation3 + $0xe8] sm:$0x3] %vm232, 0.0
        %262 = vst.msk [vmem:[#allocation3 + $0xf0] sm:$0xff] %vm230, 0.0
        %263 = vst.msk [vmem:[#allocation3 + $0xf8] sm:$0x3] %vm232, 0.0
        %264 = vst.msk [vmem:[#allocation3 + $0x100] sm:$0xff] %vm230, 0.0
        %265 = vst.msk [vmem:[#allocation3 + $0x108] sm:$0x3] %vm232, 0.0
        %266 = vst.msk [vmem:[#allocation3 + $0x110] sm:$0xff] %vm230, 0.0
        %267 = vst.msk [vmem:[#allocation3 + $0x118] sm:$0x3] %vm232, 0.0
        %268 = vst.msk [vmem:[#allocation3 + $0x120] sm:$0xff] %vm230, 0.0
        %269 = vst.msk [vmem:[#allocation3 + $0x128] sm:$0x3] %vm232, 0.0
        %270 = vst.msk [vmem:[#allocation3 + $0x130] sm:$0xff] %vm230, 0.0
        %271 = vst.msk [vmem:[#allocation3 + $0x138] sm:$0x3] %vm232, 0.0
        %vm272 = vcmask 31744
        %273 = vst.msk [vmem:[#allocation2] sm:$0xff] %vm272, 0.0
        %vm274 = vcmask 25600
        %275 = vst.msk [vmem:[#allocation2 + $0x8] sm:$0x3] %vm274, 0.0
        %276 = vst.msk [vmem:[#allocation2 + $0x10] sm:$0xff] %vm272, 0.0
        %277 = vst.msk [vmem:[#allocation2 + $0x18] sm:$0x3] %vm274, 0.0
        %278 = vst.msk [vmem:[#allocation2 + $0x20] sm:$0xff] %vm272, 0.0
        %279 = vst.msk [vmem:[#allocation2 + $0x28] sm:$0x3] %vm274, 0.0
        %280 = vst.msk [vmem:[#allocation2 + $0x30] sm:$0xff] %vm272, 0.0
        %281 = vst.msk [vmem:[#allocation2 + $0x38] sm:$0x3] %vm274, 0.0
        %282 = vst.msk [vmem:[#allocation2 + $0x40] sm:$0xff] %vm272, 0.0
        %283 = vst.msk [vmem:[#allocation2 + $0x48] sm:$0x3] %vm274, 0.0
        %284 = vst.msk [vmem:[#allocation2 + $0x50] sm:$0xff] %vm272, 0.0
        %285 = vst.msk [vmem:[#allocation2 + $0x58] sm:$0x3] %vm274, 0.0
        %286 = vst.msk [vmem:[#allocation2 + $0x60] sm:$0xff] %vm272, 0.0
        %287 = vst.msk [vmem:[#allocation2 + $0x68] sm:$0x3] %vm274, 0.0
        %288 = vst.msk [vmem:[#allocation2 + $0x70] sm:$0xff] %vm272, 0.0
        %289 = vst.msk [vmem:[#allocation2 + $0x78] sm:$0x3] %vm274, 0.0
        %290 = vst.msk [vmem:[#allocation2 + $0x80] sm:$0xff] %vm272, 0.0
        %291 = vst.msk [vmem:[#allocation2 + $0x88] sm:$0x3] %vm274, 0.0
        %292 = vst.msk [vmem:[#allocation2 + $0x90] sm:$0xff] %vm272, 0.0
        %293 = vst.msk [vmem:[#allocation2 + $0x98] sm:$0x3] %vm274, 0.0
        %294 = vst.msk [vmem:[#allocation2 + $0xa0] sm:$0xff] %vm272, 0.0
        %295 = vst.msk [vmem:[#allocation2 + $0xa8] sm:$0x3] %vm274, 0.0
        %296 = vst.msk [vmem:[#allocation2 + $0xb0] sm:$0xff] %vm272, 0.0
        %297 = vst.msk [vmem:[#allocation2 + $0xb8] sm:$0x3] %vm274, 0.0
        %298 = vst.msk [vmem:[#allocation2 + $0xc0] sm:$0xff] %vm272, 0.0
        %299 = vst.msk [vmem:[#allocation2 + $0xc8] sm:$0x3] %vm274, 0.0
        %300 = vst.msk [vmem:[#allocation2 + $0xd0] sm:$0xff] %vm272, 0.0
        %301 = vst.msk [vmem:[#allocation2 + $0xd8] sm:$0x3] %vm274, 0.0
        %302 = vst.msk [vmem:[#allocation2 + $0xe0] sm:$0xff] %vm272, 0.0
        %303 = vst.msk [vmem:[#allocation2 + $0xe8] sm:$0x3] %vm274, 0.0
        %304 = vst.msk [vmem:[#allocation2 + $0xf0] sm:$0xff] %vm272, 0.0
        %305 = vst.msk [vmem:[#allocation2 + $0xf8] sm:$0x3] %vm274, 0.0
        %306 = vst.msk [vmem:[#allocation2 + $0x100] sm:$0xff] %vm272, 0.0
        %307 = vst.msk [vmem:[#allocation2 + $0x108] sm:$0x3] %vm274, 0.0
        %308 = vst.msk [vmem:[#allocation2 + $0x110] sm:$0xff] %vm272, 0.0
        %309 = vst.msk [vmem:[#allocation2 + $0x118] sm:$0x3] %vm274, 0.0
        %310 = vst.msk [vmem:[#allocation2 + $0x120] sm:$0xff] %vm272, 0.0
        %311 = vst.msk [vmem:[#allocation2 + $0x128] sm:$0x3] %vm274, 0.0
        %312 = vst.msk [vmem:[#allocation2 + $0x130] sm:$0xff] %vm272, 0.0
        %313 = vst.msk [vmem:[#allocation2 + $0x138] sm:$0x3] %vm274, 0.0
        %314 = vst.msk [vmem:[#allocation4] sm:$0xff] %vm230, 0.0
        %315 = vst.msk [vmem:[#allocation4 + $0x8] sm:$0xff] %vm230, 0.0
        %316 = vst.msk [vmem:[#allocation4 + $0x10] sm:$0xff] %vm230, 0.0
        %317 = vst.msk [vmem:[#allocation4 + $0x18] sm:$0xff] %vm230, 0.0
        %318 = vst.msk [vmem:[#allocation4 + $0x20] sm:$0xff] %vm230, 0.0
        %319 = vst.msk [vmem:[#allocation4 + $0x28] sm:$0xff] %vm230, 0.0
        %320 = vst.msk [vmem:[#allocation4 + $0x30] sm:$0xff] %vm230, 0.0
        %321 = vst.msk [vmem:[#allocation4 + $0x38] sm:$0xff] %vm230, 0.0
        %322 = vst.msk [vmem:[#allocation4 + $0x40] sm:$0xff] %vm230, 0.0
        %323 = vst.msk [vmem:[#allocation4 + $0x48] sm:$0xff] %vm230, 0.0
        %324 = vst.msk [vmem:[#allocation4 + $0x50] sm:$0xff] %vm230, 0.0
        %325 = vst.msk [vmem:[#allocation4 + $0x58] sm:$0xff] %vm230, 0.0
        %326 = vst.msk [vmem:[#allocation4 + $0x60] sm:$0xff] %vm230, 0.0
        %327 = vst.msk [vmem:[#allocation4 + $0x68] sm:$0xff] %vm230, 0.0
        %328 = vst.msk [vmem:[#allocation4 + $0x70] sm:$0xff] %vm230, 0.0
        %329 = vst.msk [vmem:[#allocation4 + $0x78] sm:$0xff] %vm230, 0.0
      $region44: #{network_convlstm_forward.1} parent=39 // pred_fallthru
        _
      %v330 = vld [vmem:[#allocation3] sm:$0xff]
      %v331 = vld [vmem:[#allocation3 + $0x8] sm:$0x3]
      %v332 = vld [vmem:[#allocation3 + $0x10] sm:$0xff]
      %v333 = vld [vmem:[#allocation3 + $0x18] sm:$0x3]
      %v334 = vld [vmem:[#allocation3 + $0x20] sm:$0xff]
      %v335 = vld [vmem:[#allocation3 + $0x28] sm:$0x3]
      %v336 = vld [vmem:[#allocation3 + $0x30] sm:$0xff]
      %v337 = vld [vmem:[#allocation3 + $0x38] sm:$0x3]
      %v338 = vld [vmem:[#allocation3 + $0x40] sm:$0xff]
      %v339 = vld [vmem:[#allocation3 + $0x48] sm:$0x3]
      %v340 = vld [vmem:[#allocation3 + $0x50] sm:$0xff]
      %v341 = vld [vmem:[#allocation3 + $0x58] sm:$0x3]
      %v342 = vld [vmem:[#allocation3 + $0x60] sm:$0xff]
      %v343 = vld [vmem:[#allocation3 + $0x68] sm:$0x3]
      %v344 = vld [vmem:[#allocation3 + $0x70] sm:$0xff]
      %v345 = vld [vmem:[#allocation3 + $0x78] sm:$0x3]
      %v346 = vld [vmem:[#allocation3 + $0x80] sm:$0xff]
      %v347 = vld [vmem:[#allocation3 + $0x88] sm:$0x3]
      %v348 = vld [vmem:[#allocation3 + $0x90] sm:$0xff]
      %v349 = vld [vmem:[#allocation3 + $0x98] sm:$0x3]
      %v350 = vld [vmem:[#allocation3 + $0xa0] sm:$0xff]
      %v351 = vld [vmem:[#allocation3 + $0xa8] sm:$0x3]
      %v352 = vld [vmem:[#allocation3 + $0xb0] sm:$0xff]
      %v353 = vld [vmem:[#allocation3 + $0xb8] sm:$0x3]
      %v354 = vld [vmem:[#allocation3 + $0xc0] sm:$0xff]
      %v355 = vld [vmem:[#allocation3 + $0xc8] sm:$0x3]
      %v356 = vld [vmem:[#allocation3 + $0xd0] sm:$0xff]
      %v357 = vld [vmem:[#allocation3 + $0xd8] sm:$0x3]
      %v358 = vld [vmem:[#allocation3 + $0xe0] sm:$0xff]
      %v359 = vld [vmem:[#allocation3 + $0xe8] sm:$0x3]
      %v360 = vld [vmem:[#allocation3 + $0xf0] sm:$0xff]
      %v361 = vld [vmem:[#allocation3 + $0xf8] sm:$0x3]
      %v362 = vld [vmem:[#allocation3 + $0x100] sm:$0xff]
      %v363 = vld [vmem:[#allocation3 + $0x108] sm:$0x3]
      %v364 = vld [vmem:[#allocation3 + $0x110] sm:$0xff]
      %v365 = vld [vmem:[#allocation3 + $0x118] sm:$0x3]
      %v366 = vld [vmem:[#allocation3 + $0x120] sm:$0xff]
      %v367 = vld [vmem:[#allocation3 + $0x128] sm:$0x3]
      %v368 = vld [vmem:[#allocation3 + $0x130] sm:$0xff]
      %v369 = vld [vmem:[#allocation3 + $0x138] sm:$0x3]
      %vm402 = vcmask 1046528
      %v403 = vrot.slane %v332, 1
      %v404 = vrot.slane %v333, 1
      %v405 = vsel %vm402, %v403, %v404
      %v406 = vrot.slane %v334, 1
      %v407 = vrot.slane %v335, 1
      %v408 = vsel %vm402, %v406, %v407
      %v409 = vrot.slane %v336, 1
      %v410 = vrot.slane %v337, 1
      %v411 = vsel %vm402, %v409, %v410
      %v412 = vrot.slane %v338, 1
      %v413 = vrot.slane %v339, 1
      %v414 = vsel %vm402, %v412, %v413
      %v415 = vrot.slane %v340, 1
      %v416 = vrot.slane %v341, 1
      %v417 = vsel %vm402, %v415, %v416
      %v418 = vrot.slane %v342, 1
      %v419 = vrot.slane %v343, 1
      %v420 = vsel %vm402, %v418, %v419
      %v421 = vrot.slane %v344, 1
      %v422 = vrot.slane %v345, 1
      %v423 = vsel %vm402, %v421, %v422
      %v424 = vrot.slane %v346, 1
      %v425 = vrot.slane %v347, 1
      %v426 = vsel %vm402, %v424, %v425
      %v427 = vrot.slane %v352, 1
      %v428 = vrot.slane %v353, 1
      %v429 = vsel %vm402, %v427, %v428
      %v430 = vrot.slane %v354, 1
      %v431 = vrot.slane %v355, 1
      %v432 = vsel %vm402, %v430, %v431
      %v433 = vrot.slane %v356, 1
      %v434 = vrot.slane %v357, 1
      %v435 = vsel %vm402, %v433, %v434
      %v436 = vrot.slane %v358, 1
      %v437 = vrot.slane %v359, 1
      %v438 = vsel %vm402, %v436, %v437
      %v439 = vrot.slane %v360, 1
      %v440 = vrot.slane %v361, 1
      %v441 = vsel %vm402, %v439, %v440
      %v442 = vrot.slane %v362, 1
      %v443 = vrot.slane %v363, 1
      %v444 = vsel %vm402, %v442, %v443
      %v445 = vrot.slane %v364, 1
      %v446 = vrot.slane %v365, 1
      %v447 = vsel %vm402, %v445, %v446
      %v448 = vrot.slane %v366, 1
      %v449 = vrot.slane %v367, 1
      %v450 = vsel %vm402, %v448, %v449
      %v451 = vld [vmem:[%s3] sm:$0xff]
      %v452 = vld [vmem:[%s4] sm:$0x1]
      %v454 = vlaneseq
      %v455 = vshrl.u32 %v454, 7
      %v456 = vsub.s32 0, %v455
      %v457 = vrot.slane %v452, %v456
      %vm459 = vcmask 64512
      %v460 = vsel %vm459, %v405, 0
      %v462 = vsel %vm459, %v408, 0
      %v464 = vsel %vm459, %v411, 0
      %v466 = vsel %vm459, %v414, 0
      %v468 = vsel %vm459, %v417, 0
      %v470 = vsel %vm459, %v420, 0
      %v472 = vsel %vm459, %v423, 0
      %v474 = vsel %vm459, %v426, 0
      %v476 = vsel %vm459, %v429, 0
      %v478 = vsel %vm459, %v432, 0
      %v480 = vsel %vm459, %v435, 0
      %v482 = vsel %vm459, %v438, 0
      %v484 = vsel %vm459, %v441, 0
      %v486 = vsel %vm459, %v444, 0
      %v488 = vsel %vm459, %v447, 0
      %v490 = vsel %vm459, %v450, 0
      %492 = vmatprep.subr.mxu0 0.0
      %493 = vmatpush1.msra.mxu0 %v451
      %494 = vmatprep.subr.mxu0 0.0
      %495 = vmatpush1.msra.mxu0 0.0
      %496 = vmatprep.subr.mxu0 0.0
      %497 = vmatpush1.msra.mxu0 0.0
      %498 = vmatprep.subr.mxu0 0.0
      %499 = vmatpush1.msra.mxu0 0.0
      %500 = vmatprep.subr.mxu0 0.0
      %501 = vmatpush1.msra.mxu0 0.0
      %502 = vmatprep.subr.mxu0 0.0
      %503 = vmatpush1.msra.mxu0 0.0
      %504 = vmatprep.subr.mxu0 0.0
      %505 = vmatpush1.msra.mxu0 0.0
      %506 = vmatprep.subr.mxu0 0.0
      %507 = vmatpush1.msra.mxu0 0.0
      %508 = vmatprep.subr.mxu0 0.0
      %509 = vmatpush1.msra.mxu0 0.0
      %510 = vmatprep.subr.mxu0 0.0
      %511 = vmatpush1.msra.mxu0 0.0
      %512 = vmatprep.subr.mxu0 0.0
      %513 = vmatpush1.msra.mxu0 0.0
      %514 = vmatprep.subr.mxu0 0.0
      %515 = vmatpush1.msra.mxu0 0.0
      %516 = vmatprep.subr.mxu0 0.0
      %517 = vmatpush1.msra.mxu0 0.0
      %518 = vmatprep.subr.mxu0 0.0
      %519 = vmatpush1.msra.mxu0 0.0
      %520 = vmatprep.subr.mxu0 0.0
      %521 = vmatpush1.msra.mxu0 0.0
      %522 = vmatprep.subr.mxu0 0.0
      %523 = vmatpush1.msra.mxu0 0.0
      %524 = vmatprep.subr.mxu0 0.0
      %525 = vmatpush1.msra.mxu0 0.0
      %526 = vmatprep.subr.mxu0 0.0
      %527 = vmatpush1.msra.mxu0 0.0
      %528 = vmatprep.subr.mxu0 0.0
      %529 = vmatpush1.msra.mxu0 0.0
      %530 = vmatprep.subr.mxu0 0.0
      %531 = vmatpush1.msra.mxu0 0.0
      %532 = vmatprep.subr.mxu0 0.0
      %533 = vmatpush1.msra.mxu0 0.0
      %534 = vmatprep.subr.mxu0 0.0
      %535 = vmatpush1.msra.mxu0 0.0
      %536 = vmatprep.subr.mxu0 0.0
      %537 = vmatpush1.msra.mxu0 0.0
      %538 = vmatprep.subr.mxu0 0.0
      %539 = vmatpush1.msra.mxu0 0.0
      %540 = vmatprep.subr.mxu0 0.0
      %541 = vmatpush1.msra.mxu0 0.0
      %542 = vmatprep.subr.mxu0 0.0
      %543 = vmatpush1.msra.mxu0 0.0
      %544 = vmatprep.subr.mxu0 0.0
      %545 = vmatpush1.msra.mxu0 0.0
      %546 = vmatprep.subr.mxu0 0.0
      %547 = vmatpush1.msra.mxu0 0.0
      %548 = vmatprep.subr.mxu0 0.0
      %549 = vmatpush1.msra.mxu0 0.0
      %550 = vmatprep.subr.mxu0 0.0
      %551 = vmatpush1.msra.mxu0 0.0
      %552 = vmatprep.subr.mxu0 0.0
      %553 = vmatpush1.msra.mxu0 0.0
      %554 = vmatprep.subr.mxu0 0.0
      %555 = vmatpush1.msra.mxu0 0.0
      %556 = vmatprep.mubr.f32.mxu0 0.0
      %557 = vmatmul.mubr.f32.gmra.mrb[0].mxu0 %v460
      %v558 = vpop.f32.mrb[0].mxu0
      %v559 = vadd.f32 %v457, %v558
      %v560 = vpop.f32.mrb[0].mxu0
      %561 = vmatprep.mubr.f32.mxu0 0.0
      %562 = vmatmul.mubr.f32.gmra.mrb[0].mxu0 %v462
      %v563 = vpop.f32.mrb[0].mxu0
      %v564 = vadd.f32 %v457, %v563
      %v565 = vpop.f32.mrb[0].mxu0
      %566 = vmatprep.mubr.f32.mxu0 0.0
      %567 = vmatmul.mubr.f32.gmra.mrb[0].mxu0 %v464
      %v568 = vpop.f32.mrb[0].mxu0
      %v569 = vadd.f32 %v457, %v568
      %v570 = vpop.f32.mrb[0].mxu0
      %571 = vmatprep.mubr.f32.mxu0 0.0
      %572 = vmatmul.mubr.f32.gmra.mrb[0].mxu0 %v466
      %v573 = vpop.f32.mrb[0].mxu0
      %v574 = vadd.f32 %v457, %v573
      %v575 = vpop.f32.mrb[0].mxu0
      %576 = vmatprep.mubr.f32.mxu0 0.0
      %577 = vmatmul.mubr.f32.gmra.mrb[0].mxu0 %v468
      %v578 = vpop.f32.mrb[0].mxu0
      %v579 = vadd.f32 %v457, %v578
      %v580 = vpop.f32.mrb[0].mxu0
      %581 = vmatprep.mubr.f32.mxu0 0.0
      %582 = vmatmul.mubr.f32.gmra.mrb[0].mxu0 %v470
      %v583 = vpop.f32.mrb[0].mxu0
      %v584 = vadd.f32 %v457, %v583
      %v585 = vpop.f32.mrb[0].mxu0
      %586 = vmatprep.mubr.f32.mxu0 0.0
      %587 = vmatmul.mubr.f32.gmra.mrb[0].mxu0 %v472
      %v588 = vpop.f32.mrb[0].mxu0
      %v589 = vadd.f32 %v457, %v588
      %v590 = vpop.f32.mrb[0].mxu0
      %591 = vmatprep.mubr.f32.mxu0 0.0
      %592 = vmatmul.mubr.f32.gmra.mrb[0].mxu0 %v474
      %v593 = vpop.f32.mrb[0].mxu0
      %v594 = vadd.f32 %v457, %v593
      %v595 = vpop.f32.mrb[0].mxu0
      %596 = vmatprep.mubr.f32.mxu0 0.0
      %597 = vmatmul.mubr.f32.gmra.mrb[0].mxu0 %v476
      %v598 = vpop.f32.mrb[0].mxu0
      %v599 = vadd.f32 %v457, %v598
      %v600 = vpop.f32.mrb[0].mxu0
      %601 = vmatprep.mubr.f32.mxu0 0.0
      %602 = vmatmul.mubr.f32.gmra.mrb[0].mxu0 %v478
      %v603 = vpop.f32.mrb[0].mxu0
      %v604 = vadd.f32 %v457, %v603
      %v605 = vpop.f32.mrb[0].mxu0
      %606 = vmatprep.mubr.f32.mxu0 0.0
      %607 = vmatmul.mubr.f32.gmra.mrb[0].mxu0 %v480
      %v608 = vpop.f32.mrb[0].mxu0
      %v609 = vadd.f32 %v457, %v608
      %v610 = vpop.f32.mrb[0].mxu0
      %611 = vmatprep.mubr.f32.mxu0 0.0
      %612 = vmatmul.mubr.f32.gmra.mrb[0].mxu0 %v482
      %v613 = vpop.f32.mrb[0].mxu0
      %v614 = vadd.f32 %v457, %v613
      %v615 = vpop.f32.mrb[0].mxu0
      %616 = vmatprep.mubr.f32.mxu0 0.0
      %617 = vmatmul.mubr.f32.gmra.mrb[0].mxu0 %v484
      %v618 = vpop.f32.mrb[0].mxu0
      %v619 = vadd.f32 %v457, %v618
      %v620 = vpop.f32.mrb[0].mxu0
      %621 = vmatprep.mubr.f32.mxu0 0.0
      %622 = vmatmul.mubr.f32.gmra.mrb[0].mxu0 %v486
      %v623 = vpop.f32.mrb[0].mxu0
      %v624 = vadd.f32 %v457, %v623
      %v625 = vpop.f32.mrb[0].mxu0
      %626 = vmatprep.mubr.f32.mxu0 0.0
      %627 = vmatmul.mubr.f32.gmra.mrb[0].mxu0 %v488
      %v628 = vpop.f32.mrb[0].mxu0
      %v629 = vadd.f32 %v457, %v628
      %v630 = vpop.f32.mrb[0].mxu0
      %631 = vmatprep.mubr.f32.mxu0 0.0
      %632 = vmatmul.mubr.f32.gmra.mrb[0].mxu0 %v490
      %v633 = vpop.f32.mrb[0].mxu0
      %v634 = vadd.f32 %v457, %v633
      %v635 = vpop.f32.mrb[0].mxu0
      %636 = vdwg.mxu0
      %vm637 = vcmask 31744
      %638 = vst.msk [vmem:[%s224] sm:$0xff] %vm637, %v559
      %639 = vst.msk [vmem:[%s224 + $0x8] sm:$0xff] %vm637, %v564
      %640 = vst.msk [vmem:[%s224 + $0x10] sm:$0xff] %vm637, %v569
      %641 = vst.msk [vmem:[%s224 + $0x18] sm:$0xff] %vm637, %v574
      %642 = vst.msk [vmem:[%s224 + $0x20] sm:$0xff] %vm637, %v579
      %643 = vst.msk [vmem:[%s224 + $0x28] sm:$0xff] %vm637, %v584
      %644 = vst.msk [vmem:[%s224 + $0x30] sm:$0xff] %vm637, %v589
      %645 = vst.msk [vmem:[%s224 + $0x38] sm:$0xff] %vm637, %v594
      %646 = vst.msk [vmem:[%s224 + $0x40] sm:$0xff] %vm637, %v599
      %647 = vst.msk [vmem:[%s224 + $0x48] sm:$0xff] %vm637, %v604
      %648 = vst.msk [vmem:[%s224 + $0x50] sm:$0xff] %vm637, %v609
      %649 = vst.msk [vmem:[%s224 + $0x58] sm:$0xff] %vm637, %v614
      %650 = vst.msk [vmem:[%s224 + $0x60] sm:$0xff] %vm637, %v619
      %651 = vst.msk [vmem:[%s224 + $0x68] sm:$0xff] %vm637, %v624
      %652 = vst.msk [vmem:[%s224 + $0x70] sm:$0xff] %vm637, %v629
      %653 = vst.msk [vmem:[%s224 + $0x78] sm:$0xff] %vm637, %v634
      %p654 = scmp.lt.s32.totalorder %s16, 4
      // Predicated region
      $region45: #{network_convlstm_forward.1} parent=39 // pred_check
        %p655 = pneg %p654
      $region46: #{network_convlstm_forward.1} parent=39 // pred_check_branch
        %657 = sbr.rel (%p655) target = $region48
      $region47: #{network_convlstm_forward.1} parent=39 // pred_region
        %v658 = vld [vmem:[%s219] sm:$0xff]
        %v659 = vld [vmem:[%s219 + $0x8] sm:$0x3]
        %v660 = vld [vmem:[%s219 + $0x10] sm:$0xff]
        %v661 = vld [vmem:[%s219 + $0x18] sm:$0x3]
        %v662 = vld [vmem:[%s219 + $0x20] sm:$0xff]
        %v663 = vld [vmem:[%s219 + $0x28] sm:$0x3]
        %v664 = vld [vmem:[%s219 + $0x30] sm:$0xff]
        %v665 = vld [vmem:[%s219 + $0x38] sm:$0x3]
        %v666 = vld [vmem:[%s219 + $0x40] sm:$0xff]
        %v667 = vld [vmem:[%s219 + $0x48] sm:$0x3]
        %v668 = vld [vmem:[%s219 + $0x50] sm:$0xff]
        %v669 = vld [vmem:[%s219 + $0x58] sm:$0x3]
        %v670 = vld [vmem:[%s219 + $0x60] sm:$0xff]
        %v671 = vld [vmem:[%s219 + $0x68] sm:$0x3]
        %v672 = vld [vmem:[%s219 + $0x70] sm:$0xff]
        %v673 = vld [vmem:[%s219 + $0x78] sm:$0x3]
        %v674 = vld [vmem:[%s219 + $0x80] sm:$0xff]
        %v675 = vld [vmem:[%s219 + $0x88] sm:$0x3]
        %v676 = vld [vmem:[%s219 + $0x90] sm:$0xff]
        %v677 = vld [vmem:[%s219 + $0x98] sm:$0x3]
        %v678 = vld [vmem:[%s219 + $0xa0] sm:$0xff]
        %v679 = vld [vmem:[%s219 + $0xa8] sm:$0x3]
        %v680 = vld [vmem:[%s219 + $0xb0] sm:$0xff]
        %v681 = vld [vmem:[%s219 + $0xb8] sm:$0x3]
        %v682 = vld [vmem:[%s219 + $0xc0] sm:$0xff]
        %v683 = vld [vmem:[%s219 + $0xc8] sm:$0x3]
        %v684 = vld [vmem:[%s219 + $0xd0] sm:$0xff]
        %v685 = vld [vmem:[%s219 + $0xd8] sm:$0x3]
        %v686 = vld [vmem:[%s219 + $0xe0] sm:$0xff]
        %v687 = vld [vmem:[%s219 + $0xe8] sm:$0x3]
        %v688 = vld [vmem:[%s219 + $0xf0] sm:$0xff]
        %v689 = vld [vmem:[%s219 + $0xf8] sm:$0x3]
        %v690 = vld [vmem:[%s219 + $0x100] sm:$0xff]
        %v691 = vld [vmem:[%s219 + $0x108] sm:$0x3]
        %v692 = vld [vmem:[%s219 + $0x110] sm:$0xff]
        %v693 = vld [vmem:[%s219 + $0x118] sm:$0x3]
        %v694 = vld [vmem:[%s219 + $0x120] sm:$0xff]
        %v695 = vld [vmem:[%s219 + $0x128] sm:$0x3]
        %v696 = vld [vmem:[%s219 + $0x130] sm:$0xff]
        %v697 = vld [vmem:[%s219 + $0x138] sm:$0x3]
        %698 = vst.msk [vmem:[#allocation2] sm:$0xff] %vm637, %v658
        %vm699 = vcmask 25600
        %700 = vst.msk [vmem:[#allocation2 + $0x8] sm:$0x3] %vm699, %v659
        %701 = vst.msk [vmem:[#allocation2 + $0x10] sm:$0xff] %vm637, %v660
        %702 = vst.msk [vmem:[#allocation2 + $0x18] sm:$0x3] %vm699, %v661
        %703 = vst.msk [vmem:[#allocation2 + $0x20] sm:$0xff] %vm637, %v662
        %704 = vst.msk [vmem:[#allocation2 + $0x28] sm:$0x3] %vm699, %v663
        %705 = vst.msk [vmem:[#allocation2 + $0x30] sm:$0xff] %vm637, %v664
        %706 = vst.msk [vmem:[#allocation2 + $0x38] sm:$0x3] %vm699, %v665
        %707 = vst.msk [vmem:[#allocation2 + $0x40] sm:$0xff] %vm637, %v666
        %708 = vst.msk [vmem:[#allocation2 + $0x48] sm:$0x3] %vm699, %v667
        %709 = vst.msk [vmem:[#allocation2 + $0x50] sm:$0xff] %vm637, %v668
        %710 = vst.msk [vmem:[#allocation2 + $0x58] sm:$0x3] %vm699, %v669
        %711 = vst.msk [vmem:[#allocation2 + $0x60] sm:$0xff] %vm637, %v670
        %712 = vst.msk [vmem:[#allocation2 + $0x68] sm:$0x3] %vm699, %v671
        %713 = vst.msk [vmem:[#allocation2 + $0x70] sm:$0xff] %vm637, %v672
        %714 = vst.msk [vmem:[#allocation2 + $0x78] sm:$0x3] %vm699, %v673
        %715 = vst.msk [vmem:[#allocation2 + $0x80] sm:$0xff] %vm637, %v674
        %716 = vst.msk [vmem:[#allocation2 + $0x88] sm:$0x3] %vm699, %v675
        %717 = vst.msk [vmem:[#allocation2 + $0x90] sm:$0xff] %vm637, %v676
        %718 = vst.msk [vmem:[#allocation2 + $0x98] sm:$0x3] %vm699, %v677
        %719 = vst.msk [vmem:[#allocation2 + $0xa0] sm:$0xff] %vm637, %v678
        %720 = vst.msk [vmem:[#allocation2 + $0xa8] sm:$0x3] %vm699, %v679
        %721 = vst.msk [vmem:[#allocation2 + $0xb0] sm:$0xff] %vm637, %v680
        %722 = vst.msk [vmem:[#allocation2 + $0xb8] sm:$0x3] %vm699, %v681
        %723 = vst.msk [vmem:[#allocation2 + $0xc0] sm:$0xff] %vm637, %v682
        %724 = vst.msk [vmem:[#allocation2 + $0xc8] sm:$0x3] %vm699, %v683
        %725 = vst.msk [vmem:[#allocation2 + $0xd0] sm:$0xff] %vm637, %v684
        %726 = vst.msk [vmem:[#allocation2 + $0xd8] sm:$0x3] %vm699, %v685
        %727 = vst.msk [vmem:[#allocation2 + $0xe0] sm:$0xff] %vm637, %v686
        %728 = vst.msk [vmem:[#allocation2 + $0xe8] sm:$0x3] %vm699, %v687
        %729 = vst.msk [vmem:[#allocation2 + $0xf0] sm:$0xff] %vm637, %v688
        %730 = vst.msk [vmem:[#allocation2 + $0xf8] sm:$0x3] %vm699, %v689
        %731 = vst.msk [vmem:[#allocation2 + $0x100] sm:$0xff] %vm637, %v690
        %732 = vst.msk [vmem:[#allocation2 + $0x108] sm:$0x3] %vm699, %v691
        %733 = vst.msk [vmem:[#allocation2 + $0x110] sm:$0xff] %vm637, %v692
        %734 = vst.msk [vmem:[#allocation2 + $0x118] sm:$0x3] %vm699, %v693
        %735 = vst.msk [vmem:[#allocation2 + $0x120] sm:$0xff] %vm637, %v694
        %736 = vst.msk [vmem:[#allocation2 + $0x128] sm:$0x3] %vm699, %v695
        %737 = vst.msk [vmem:[#allocation2 + $0x130] sm:$0xff] %vm637, %v696
        %738 = vst.msk [vmem:[#allocation2 + $0x138] sm:$0x3] %vm699, %v697
      $region48: #{network_convlstm_forward.1} parent=39 // pred_fallthru
        _
      %p739 = scmp.ge.s32.totalorder %s16, 4
      // Predicated region
      $region49: #{network_convlstm_forward.1} parent=39 // pred_check
        %p740 = pneg %p739
      $region50: #{network_convlstm_forward.1} parent=39 // pred_check_branch
        %742 = sbr.rel (%p740) target = $region52
      $region51: #{network_convlstm_forward.1} parent=39 // pred_region
        %s743 = scalar_lea.vmem [#allocation2], 16
        %744 = vst.msk [vmem:[%s743 + $0x1] sm:$0xff] %vm637, %v559
        %745 = vst.msk [vmem:[%s743 + $0x11] sm:$0xff] %vm637, %v564
        %746 = vst.msk [vmem:[%s743 + $0x21] sm:$0xff] %vm637, %v569
        %747 = vst.msk [vmem:[%s743 + $0x31] sm:$0xff] %vm637, %v574
        %748 = vst.msk [vmem:[%s743 + $0x41] sm:$0xff] %vm637, %v579
        %749 = vst.msk [vmem:[%s743 + $0x51] sm:$0xff] %vm637, %v584
        %750 = vst.msk [vmem:[%s743 + $0x61] sm:$0xff] %vm637, %v589
        %751 = vst.msk [vmem:[%s743 + $0x71] sm:$0xff] %vm637, %v594
        %752 = vst.msk [vmem:[%s743 + $0xa1] sm:$0xff] %vm637, %v599
        %753 = vst.msk [vmem:[%s743 + $0xb1] sm:$0xff] %vm637, %v604
        %754 = vst.msk [vmem:[%s743 + $0xc1] sm:$0xff] %vm637, %v609
        %755 = vst.msk [vmem:[%s743 + $0xd1] sm:$0xff] %vm637, %v614
        %756 = vst.msk [vmem:[%s743 + $0xe1] sm:$0xff] %vm637, %v619
        %757 = vst.msk [vmem:[%s743 + $0xf1] sm:$0xff] %vm637, %v624
        %758 = vst.msk [vmem:[%s743 + $0x101] sm:$0xff] %vm637, %v629
        %759 = vst.msk [vmem:[%s743 + $0x111] sm:$0xff] %vm637, %v634
      $region52: #{network_convlstm_forward.1} parent=39 // pred_fallthru
        _
      %v760 = vld [vmem:[#allocation2] sm:$0xff]
      %v761 = vld [vmem:[#allocation2 + $0x8] sm:$0x3]
      %v762 = vld [vmem:[#allocation2 + $0x10] sm:$0xff]
      %v763 = vld [vmem:[#allocation2 + $0x18] sm:$0x3]
      %v764 = vld [vmem:[#allocation2 + $0x20] sm:$0xff]
      %v765 = vld [vmem:[#allocation2 + $0x28] sm:$0x3]
      %v766 = vld [vmem:[#allocation2 + $0x30] sm:$0xff]
      %v767 = vld [vmem:[#allocation2 + $0x38] sm:$0x3]
      %v768 = vld [vmem:[#allocation2 + $0x40] sm:$0xff]
      %v769 = vld [vmem:[#allocation2 + $0x48] sm:$0x3]
      %v770 = vld [vmem:[#allocation2 + $0x50] sm:$0xff]
      %v771 = vld [vmem:[#allocation2 + $0x58] sm:$0x3]
      %v772 = vld [vmem:[#allocation2 + $0x60] sm:$0xff]
      %v773 = vld [vmem:[#allocation2 + $0x68] sm:$0x3]
      %v774 = vld [vmem:[#allocation2 + $0x70] sm:$0xff]
      %v775 = vld [vmem:[#allocation2 + $0x78] sm:$0x3]
      %v776 = vld [vmem:[#allocation2 + $0x80] sm:$0xff]
      %v777 = vld [vmem:[#allocation2 + $0x88] sm:$0x3]
      %v778 = vld [vmem:[#allocation2 + $0x90] sm:$0xff]
      %v779 = vld [vmem:[#allocation2 + $0x98] sm:$0x3]
      %v780 = vld [vmem:[#allocation2 + $0xa0] sm:$0xff]
      %v781 = vld [vmem:[#allocation2 + $0xa8] sm:$0x3]
      %v782 = vld [vmem:[#allocation2 + $0xb0] sm:$0xff]
      %v783 = vld [vmem:[#allocation2 + $0xb8] sm:$0x3]
      %v784 = vld [vmem:[#allocation2 + $0xc0] sm:$0xff]
      %v785 = vld [vmem:[#allocation2 + $0xc8] sm:$0x3]
      %v786 = vld [vmem:[#allocation2 + $0xd0] sm:$0xff]
      %v787 = vld [vmem:[#allocation2 + $0xd8] sm:$0x3]
      %v788 = vld [vmem:[#allocation2 + $0xe0] sm:$0xff]
      %v789 = vld [vmem:[#allocation2 + $0xe8] sm:$0x3]
      %v790 = vld [vmem:[#allocation2 + $0xf0] sm:$0xff]
      %v791 = vld [vmem:[#allocation2 + $0xf8] sm:$0x3]
      %v792 = vld [vmem:[#allocation2 + $0x100] sm:$0xff]
      %v793 = vld [vmem:[#allocation2 + $0x108] sm:$0x3]
      %v794 = vld [vmem:[#allocation2 + $0x110] sm:$0xff]
      %v795 = vld [vmem:[#allocation2 + $0x118] sm:$0x3]
      %v796 = vld [vmem:[#allocation2 + $0x120] sm:$0xff]
      %v797 = vld [vmem:[#allocation2 + $0x128] sm:$0x3]
      %v798 = vld [vmem:[#allocation2 + $0x130] sm:$0xff]
      %v799 = vld [vmem:[#allocation2 + $0x138] sm:$0x3]
      %800 = vst.msk [vmem:[#allocation5] sm:$0xff] %vm637, %v760
      %801 = vst.msk [vmem:[#allocation5 + $0x8] sm:$0xff] %vm637, %v762
      %802 = vst.msk [vmem:[#allocation5 + $0x10] sm:$0xff] %vm637, %v764
      %803 = vst.msk [vmem:[#allocation5 + $0x18] sm:$0xff] %vm637, %v766
      %804 = vst.msk [vmem:[#allocation5 + $0x20] sm:$0xff] %vm637, %v768
      %805 = vst.msk [vmem:[#allocation5 + $0x28] sm:$0xff] %vm637, %v770
      %806 = vst.msk [vmem:[#allocation5 + $0x30] sm:$0xff] %vm637, %v772
      %807 = vst.msk [vmem:[#allocation5 + $0x38] sm:$0xff] %vm637, %v774
      %808 = vst.msk [vmem:[#allocation5 + $0x40] sm:$0xff] %vm637, %v780
      %809 = vst.msk [vmem:[#allocation5 + $0x48] sm:$0xff] %vm637, %v782
      %810 = vst.msk [vmem:[#allocation5 + $0x50] sm:$0xff] %vm637, %v784
      %811 = vst.msk [vmem:[#allocation5 + $0x58] sm:$0xff] %vm637, %v786
      %812 = vst.msk [vmem:[#allocation5 + $0x60] sm:$0xff] %vm637, %v788
      %813 = vst.msk [vmem:[#allocation5 + $0x68] sm:$0xff] %vm637, %v790
      %814 = vst.msk [vmem:[#allocation5 + $0x70] sm:$0xff] %vm637, %v792
      %815 = vst.msk [vmem:[#allocation5 + $0x78] sm:$0xff] %vm637, %v794
      %818 = vrot.lane.b32.xlu0 %v330, 4
      %v819 = vpop.permute.xlu0 %818
      %820 = vrot.lane.b32.xlu0 %v332, 4
      %v821 = vpop.permute.xlu0 %820
      %822 = vrot.lane.b32.xlu0 %v334, 4
      %v823 = vpop.permute.xlu0 %822
      %824 = vrot.lane.b32.xlu0 %v336, 4
      %v825 = vpop.permute.xlu0 %824
      %826 = vrot.lane.b32.xlu0 %v338, 4
      %v827 = vpop.permute.xlu0 %826
      %828 = vrot.lane.b32.xlu0 %v340, 4
      %v829 = vpop.permute.xlu0 %828
      %830 = vrot.lane.b32.xlu0 %v342, 4
      %v831 = vpop.permute.xlu0 %830
      %832 = vrot.lane.b32.xlu0 %v344, 4
      %v833 = vpop.permute.xlu0 %832
      %834 = vrot.lane.b32.xlu0 %v350, 4
      %v835 = vpop.permute.xlu0 %834
      %836 = vrot.lane.b32.xlu0 %v352, 4
      %v837 = vpop.permute.xlu0 %836
      %838 = vrot.lane.b32.xlu0 %v354, 4
      %v839 = vpop.permute.xlu0 %838
      %840 = vrot.lane.b32.xlu0 %v356, 4
      %v841 = vpop.permute.xlu0 %840
      %842 = vrot.lane.b32.xlu0 %v358, 4
      %v843 = vpop.permute.xlu0 %842
      %844 = vrot.lane.b32.xlu0 %v360, 4
      %v845 = vpop.permute.xlu0 %844
      %846 = vrot.lane.b32.xlu0 %v362, 4
      %v847 = vpop.permute.xlu0 %846
      %848 = vrot.lane.b32.xlu0 %v364, 4
      %v849 = vpop.permute.xlu0 %848
      %vm866 = vcmask 97312
      %867 = vst.msk [vmem:[#allocation5] sm:$0xff] %vm866, %v819
      %868 = vst.msk [vmem:[#allocation5 + $0x8] sm:$0xff] %vm866, %v821
      %869 = vst.msk [vmem:[#allocation5 + $0x10] sm:$0xff] %vm866, %v823
      %870 = vst.msk [vmem:[#allocation5 + $0x18] sm:$0xff] %vm866, %v825
      %871 = vst.msk [vmem:[#allocation5 + $0x20] sm:$0xff] %vm866, %v827
      %872 = vst.msk [vmem:[#allocation5 + $0x28] sm:$0xff] %vm866, %v829
      %873 = vst.msk [vmem:[#allocation5 + $0x30] sm:$0xff] %vm866, %v831
      %874 = vst.msk [vmem:[#allocation5 + $0x38] sm:$0xff] %vm866, %v833
      %875 = vst.msk [vmem:[#allocation5 + $0x40] sm:$0xff] %vm866, %v835
      %876 = vst.msk [vmem:[#allocation5 + $0x48] sm:$0xff] %vm866, %v837
      %877 = vst.msk [vmem:[#allocation5 + $0x50] sm:$0xff] %vm866, %v839
      %878 = vst.msk [vmem:[#allocation5 + $0x58] sm:$0xff] %vm866, %v841
      %879 = vst.msk [vmem:[#allocation5 + $0x60] sm:$0xff] %vm866, %v843
      %880 = vst.msk [vmem:[#allocation5 + $0x68] sm:$0xff] %vm866, %v845
      %881 = vst.msk [vmem:[#allocation5 + $0x70] sm:$0xff] %vm866, %v847
      %882 = vst.msk [vmem:[#allocation5 + $0x78] sm:$0xff] %vm866, %v849
      %915 = vrot.lane.b32.xlu0 %v760, 12
      %v916 = vpop.permute.xlu0 %915
      %917 = vrot.lane.b32.xlu0 %v761, 12
      %v918 = vpop.permute.xlu0 %917
      %919 = vrot.lane.b32.xlu0 %v762, 12
      %v920 = vpop.permute.xlu0 %919
      %921 = vrot.lane.b32.xlu0 %v763, 12
      %v922 = vpop.permute.xlu0 %921
      %923 = vrot.lane.b32.xlu0 %v764, 12
      %v924 = vpop.permute.xlu0 %923
      %925 = vrot.lane.b32.xlu0 %v765, 12
      %v926 = vpop.permute.xlu0 %925
      %927 = vrot.lane.b32.xlu0 %v766, 12
      %v928 = vpop.permute.xlu0 %927
      %929 = vrot.lane.b32.xlu0 %v767, 12
      %v930 = vpop.permute.xlu0 %929
      %931 = vrot.lane.b32.xlu0 %v768, 12
      %v932 = vpop.permute.xlu0 %931
      %933 = vrot.lane.b32.xlu0 %v769, 12
      %v934 = vpop.permute.xlu0 %933
      %935 = vrot.lane.b32.xlu0 %v770, 12
      %v936 = vpop.permute.xlu0 %935
      %937 = vrot.lane.b32.xlu0 %v771, 12
      %v938 = vpop.permute.xlu0 %937
      %939 = vrot.lane.b32.xlu0 %v772, 12
      %v940 = vpop.permute.xlu0 %939
      %941 = vrot.lane.b32.xlu0 %v773, 12
      %v942 = vpop.permute.xlu0 %941
      %943 = vrot.lane.b32.xlu0 %v774, 12
      %v944 = vpop.permute.xlu0 %943
      %945 = vrot.lane.b32.xlu0 %v775, 12
      %v946 = vpop.permute.xlu0 %945
      %947 = vrot.lane.b32.xlu0 %v780, 12
      %v948 = vpop.permute.xlu0 %947
      %949 = vrot.lane.b32.xlu0 %v781, 12
      %v950 = vpop.permute.xlu0 %949
      %951 = vrot.lane.b32.xlu0 %v782, 12
      %v952 = vpop.permute.xlu0 %951
      %953 = vrot.lane.b32.xlu0 %v783, 12
      %v954 = vpop.permute.xlu0 %953
      %955 = vrot.lane.b32.xlu0 %v784, 12
      %v956 = vpop.permute.xlu0 %955
      %957 = vrot.lane.b32.xlu0 %v785, 12
      %v958 = vpop.permute.xlu0 %957
      %959 = vrot.lane.b32.xlu0 %v786, 12
      %v960 = vpop.permute.xlu0 %959
      %961 = vrot.lane.b32.xlu0 %v787, 12
      %v962 = vpop.permute.xlu0 %961
      %963 = vrot.lane.b32.xlu0 %v788, 12
      %v964 = vpop.permute.xlu0 %963
      %965 = vrot.lane.b32.xlu0 %v789, 12
      %v966 = vpop.permute.xlu0 %965
      %967 = vrot.lane.b32.xlu0 %v790, 12
      %v968 = vpop.permute.xlu0 %967
      %969 = vrot.lane.b32.xlu0 %v791, 12
      %v970 = vpop.permute.xlu0 %969
      %971 = vrot.lane.b32.xlu0 %v792, 12
      %v972 = vpop.permute.xlu0 %971
      %973 = vrot.lane.b32.xlu0 %v793, 12
      %v974 = vpop.permute.xlu0 %973
      %975 = vrot.lane.b32.xlu0 %v794, 12
      %v976 = vpop.permute.xlu0 %975
      %977 = vrot.lane.b32.xlu0 %v795, 12
      %v978 = vpop.permute.xlu0 %977
      %vm1011 = vcmask 130145
      %1012 = vst.msk [vmem:[#allocation5 - $0x1] sm:$0xfe] %vm1011, %v916
      %vm1013 = vcmask 122976
      %1014 = vst.msk [vmem:[#allocation5 + $0x7] sm:$0x1] %vm1013, %v918
      %1015 = vst.msk [vmem:[#allocation5 + $0x7] sm:$0xfe] %vm1011, %v920
      %1016 = vst.msk [vmem:[#allocation5 + $0xf] sm:$0x1] %vm1013, %v922
      %1017 = vst.msk [vmem:[#allocation5 + $0xf] sm:$0xfe] %vm1011, %v924
      %1018 = vst.msk [vmem:[#allocation5 + $0x17] sm:$0x1] %vm1013, %v926
      %1019 = vst.msk [vmem:[#allocation5 + $0x17] sm:$0xfe] %vm1011, %v928
      %1020 = vst.msk [vmem:[#allocation5 + $0x1f] sm:$0x1] %vm1013, %v930
      %1021 = vst.msk [vmem:[#allocation5 + $0x1f] sm:$0xfe] %vm1011, %v932
      %1022 = vst.msk [vmem:[#allocation5 + $0x27] sm:$0x1] %vm1013, %v934
      %1023 = vst.msk [vmem:[#allocation5 + $0x27] sm:$0xfe] %vm1011, %v936
      %1024 = vst.msk [vmem:[#allocation5 + $0x2f] sm:$0x1] %vm1013, %v938
      %1025 = vst.msk [vmem:[#allocation5 + $0x2f] sm:$0xfe] %vm1011, %v940
      %1026 = vst.msk [vmem:[#allocation5 + $0x37] sm:$0x1] %vm1013, %v942
      %1027 = vst.msk [vmem:[#allocation5 + $0x37] sm:$0xfe] %vm1011, %v944
      %1028 = vst.msk [vmem:[#allocation5 + $0x3f] sm:$0x1] %vm1013, %v946
      %1029 = vst.msk [vmem:[#allocation5 + $0x3f] sm:$0xfe] %vm1011, %v948
      %1030 = vst.msk [vmem:[#allocation5 + $0x47] sm:$0x1] %vm1013, %v950
      %1031 = vst.msk [vmem:[#allocation5 + $0x47] sm:$0xfe] %vm1011, %v952
      %1032 = vst.msk [vmem:[#allocation5 + $0x4f] sm:$0x1] %vm1013, %v954
      %1033 = vst.msk [vmem:[#allocation5 + $0x4f] sm:$0xfe] %vm1011, %v956
      %1034 = vst.msk [vmem:[#allocation5 + $0x57] sm:$0x1] %vm1013, %v958
      %1035 = vst.msk [vmem:[#allocation5 + $0x57] sm:$0xfe] %vm1011, %v960
      %1036 = vst.msk [vmem:[#allocation5 + $0x5f] sm:$0x1] %vm1013, %v962
      %1037 = vst.msk [vmem:[#allocation5 + $0x5f] sm:$0xfe] %vm1011, %v964
      %1038 = vst.msk [vmem:[#allocation5 + $0x67] sm:$0x1] %vm1013, %v966
      %1039 = vst.msk [vmem:[#allocation5 + $0x67] sm:$0xfe] %vm1011, %v968
      %1040 = vst.msk [vmem:[#allocation5 + $0x6f] sm:$0x1] %vm1013, %v970
      %1041 = vst.msk [vmem:[#allocation5 + $0x6f] sm:$0xfe] %vm1011, %v972
      %1042 = vst.msk [vmem:[#allocation5 + $0x77] sm:$0x1] %vm1013, %v974
      %1043 = vst.msk [vmem:[#allocation5 + $0x77] sm:$0xfe] %vm1011, %v976
      %1044 = vst.msk [vmem:[#allocation5 + $0x7f] sm:$0x1] %vm1013, %v978
      %1047 = vrot.lane.b32.xlu0 %v330, 16
      %v1048 = vpop.permute.xlu0 %1047
      %1049 = vrot.lane.b32.xlu0 %v331, 16
      %v1050 = vpop.permute.xlu0 %1049
      %1051 = vrot.lane.b32.xlu0 %v332, 16
      %v1052 = vpop.permute.xlu0 %1051
      %1053 = vrot.lane.b32.xlu0 %v333, 16
      %v1054 = vpop.permute.xlu0 %1053
      %1055 = vrot.lane.b32.xlu0 %v334, 16
      %v1056 = vpop.permute.xlu0 %1055
      %1057 = vrot.lane.b32.xlu0 %v335, 16
      %v1058 = vpop.permute.xlu0 %1057
      %1059 = vrot.lane.b32.xlu0 %v336, 16
      %v1060 = vpop.permute.xlu0 %1059
      %1061 = vrot.lane.b32.xlu0 %v337, 16
      %v1062 = vpop.permute.xlu0 %1061
      %1063 = vrot.lane.b32.xlu0 %v338, 16
      %v1064 = vpop.permute.xlu0 %1063
      %1065 = vrot.lane.b32.xlu0 %v339, 16
      %v1066 = vpop.permute.xlu0 %1065
      %1067 = vrot.lane.b32.xlu0 %v340, 16
      %v1068 = vpop.permute.xlu0 %1067
      %1069 = vrot.lane.b32.xlu0 %v341, 16
      %v1070 = vpop.permute.xlu0 %1069
      %1071 = vrot.lane.b32.xlu0 %v342, 16
      %v1072 = vpop.permute.xlu0 %1071
      %1073 = vrot.lane.b32.xlu0 %v343, 16
      %v1074 = vpop.permute.xlu0 %1073
      %1075 = vrot.lane.b32.xlu0 %v344, 16
      %v1076 = vpop.permute.xlu0 %1075
      %1077 = vrot.lane.b32.xlu0 %v345, 16
      %v1078 = vpop.permute.xlu0 %1077
      %1079 = vrot.lane.b32.xlu0 %v350, 16
      %v1080 = vpop.permute.xlu0 %1079
      %1081 = vrot.lane.b32.xlu0 %v351, 16
      %v1082 = vpop.permute.xlu0 %1081
      %1083 = vrot.lane.b32.xlu0 %v352, 16
      %v1084 = vpop.permute.xlu0 %1083
      %1085 = vrot.lane.b32.xlu0 %v353, 16
      %v1086 = vpop.permute.xlu0 %1085
      %1087 = vrot.lane.b32.xlu0 %v354, 16
      %v1088 = vpop.permute.xlu0 %1087
      %1089 = vrot.lane.b32.xlu0 %v355, 16
      %v1090 = vpop.permute.xlu0 %1089
      %1091 = vrot.lane.b32.xlu0 %v356, 16
      %v1092 = vpop.permute.xlu0 %1091
      %1093 = vrot.lane.b32.xlu0 %v357, 16
      %v1094 = vpop.permute.xlu0 %1093
      %1095 = vrot.lane.b32.xlu0 %v358, 16
      %v1096 = vpop.permute.xlu0 %1095
      %1097 = vrot.lane.b32.xlu0 %v359, 16
      %v1098 = vpop.permute.xlu0 %1097
      %1099 = vrot.lane.b32.xlu0 %v360, 16
      %v1100 = vpop.permute.xlu0 %1099
      %1101 = vrot.lane.b32.xlu0 %v361, 16
      %v1102 = vpop.permute.xlu0 %1101
      %1103 = vrot.lane.b32.xlu0 %v362, 16
      %v1104 = vpop.permute.xlu0 %1103
      %1105 = vrot.lane.b32.xlu0 %v363, 16
      %v1106 = vpop.permute.xlu0 %1105
      %1107 = vrot.lane.b32.xlu0 %v364, 16
      %v1108 = vpop.permute.xlu0 %1107
      %1109 = vrot.lane.b32.xlu0 %v365, 16
      %v1110 = vpop.permute.xlu0 %1109
      %vm1143 = vcmask 195713
      %1144 = vst.msk [vmem:[#allocation5 - $0x1] sm:$0xfe] %vm1143, %v1048
      %vm1145 = vcmask 188544
      %1146 = vst.msk [vmem:[#allocation5 + $0x7] sm:$0x1] %vm1145, %v1050
      %1147 = vst.msk [vmem:[#allocation5 + $0x7] sm:$0xfe] %vm1143, %v1052
      %1148 = vst.msk [vmem:[#allocation5 + $0xf] sm:$0x1] %vm1145, %v1054
      %1149 = vst.msk [vmem:[#allocation5 + $0xf] sm:$0xfe] %vm1143, %v1056
      %1150 = vst.msk [vmem:[#allocation5 + $0x17] sm:$0x1] %vm1145, %v1058
      %1151 = vst.msk [vmem:[#allocation5 + $0x17] sm:$0xfe] %vm1143, %v1060
      %1152 = vst.msk [vmem:[#allocation5 + $0x1f] sm:$0x1] %vm1145, %v1062
      %1153 = vst.msk [vmem:[#allocation5 + $0x1f] sm:$0xfe] %vm1143, %v1064
      %1154 = vst.msk [vmem:[#allocation5 + $0x27] sm:$0x1] %vm1145, %v1066
      %1155 = vst.msk [vmem:[#allocation5 + $0x27] sm:$0xfe] %vm1143, %v1068
      %1156 = vst.msk [vmem:[#allocation5 + $0x2f] sm:$0x1] %vm1145, %v1070
      %1157 = vst.msk [vmem:[#allocation5 + $0x2f] sm:$0xfe] %vm1143, %v1072
      %1158 = vst.msk [vmem:[#allocation5 + $0x37] sm:$0x1] %vm1145, %v1074
      %1159 = vst.msk [vmem:[#allocation5 + $0x37] sm:$0xfe] %vm1143, %v1076
      %1160 = vst.msk [vmem:[#allocation5 + $0x3f] sm:$0x1] %vm1145, %v1078
      %1161 = vst.msk [vmem:[#allocation5 + $0x3f] sm:$0xfe] %vm1143, %v1080
      %1162 = vst.msk [vmem:[#allocation5 + $0x47] sm:$0x1] %vm1145, %v1082
      %1163 = vst.msk [vmem:[#allocation5 + $0x47] sm:$0xfe] %vm1143, %v1084
      %1164 = vst.msk [vmem:[#allocation5 + $0x4f] sm:$0x1] %vm1145, %v1086
      %1165 = vst.msk [vmem:[#allocation5 + $0x4f] sm:$0xfe] %vm1143, %v1088
      %1166 = vst.msk [vmem:[#allocation5 + $0x57] sm:$0x1] %vm1145, %v1090
      %1167 = vst.msk [vmem:[#allocation5 + $0x57] sm:$0xfe] %vm1143, %v1092
      %1168 = vst.msk [vmem:[#allocation5 + $0x5f] sm:$0x1] %vm1145, %v1094
      %1169 = vst.msk [vmem:[#allocation5 + $0x5f] sm:$0xfe] %vm1143, %v1096
      %1170 = vst.msk [vmem:[#allocation5 + $0x67] sm:$0x1] %vm1145, %v1098
      %1171 = vst.msk [vmem:[#allocation5 + $0x67] sm:$0xfe] %vm1143, %v1100
      %1172 = vst.msk [vmem:[#allocation5 + $0x6f] sm:$0x1] %vm1145, %v1102
      %1173 = vst.msk [vmem:[#allocation5 + $0x6f] sm:$0xfe] %vm1143, %v1104
      %1174 = vst.msk [vmem:[#allocation5 + $0x77] sm:$0x1] %vm1145, %v1106
      %1175 = vst.msk [vmem:[#allocation5 + $0x77] sm:$0xfe] %vm1143, %v1108
      %1176 = vst.msk [vmem:[#allocation5 + $0x7f] sm:$0x1] %vm1145, %v1110
      %1177 = vrot.lane.b32.xlu0 %v760, 24
      %v1178 = vpop.permute.xlu0 %1177
      %1179 = vrot.lane.b32.xlu0 %v761, 24
      %v1180 = vpop.permute.xlu0 %1179
      %1181 = vrot.lane.b32.xlu0 %v762, 24
      %v1182 = vpop.permute.xlu0 %1181
      %1183 = vrot.lane.b32.xlu0 %v763, 24
      %v1184 = vpop.permute.xlu0 %1183
      %1185 = vrot.lane.b32.xlu0 %v764, 24
      %v1186 = vpop.permute.xlu0 %1185
      %1187 = vrot.lane.b32.xlu0 %v765, 24
      %v1188 = vpop.permute.xlu0 %1187
      %1189 = vrot.lane.b32.xlu0 %v766, 24
      %v1190 = vpop.permute.xlu0 %1189
      %1191 = vrot.lane.b32.xlu0 %v767, 24
      %v1192 = vpop.permute.xlu0 %1191
      %1193 = vrot.lane.b32.xlu0 %v768, 24
      %v1194 = vpop.permute.xlu0 %1193
      %1195 = vrot.lane.b32.xlu0 %v769, 24
      %v1196 = vpop.permute.xlu0 %1195
      %1197 = vrot.lane.b32.xlu0 %v770, 24
      %v1198 = vpop.permute.xlu0 %1197
      %1199 = vrot.lane.b32.xlu0 %v771, 24
      %v1200 = vpop.permute.xlu0 %1199
      %1201 = vrot.lane.b32.xlu0 %v772, 24
      %v1202 = vpop.permute.xlu0 %1201
      %1203 = vrot.lane.b32.xlu0 %v773, 24
      %v1204 = vpop.permute.xlu0 %1203
      %1205 = vrot.lane.b32.xlu0 %v774, 24
      %v1206 = vpop.permute.xlu0 %1205
      %1207 = vrot.lane.b32.xlu0 %v775, 24
      %v1208 = vpop.permute.xlu0 %1207
      %1209 = vrot.lane.b32.xlu0 %v780, 24
      %v1210 = vpop.permute.xlu0 %1209
      %1211 = vrot.lane.b32.xlu0 %v781, 24
      %v1212 = vpop.permute.xlu0 %1211
      %1213 = vrot.lane.b32.xlu0 %v782, 24
      %v1214 = vpop.permute.xlu0 %1213
      %1215 = vrot.lane.b32.xlu0 %v783, 24
      %v1216 = vpop.permute.xlu0 %1215
      %1217 = vrot.lane.b32.xlu0 %v784, 24
      %v1218 = vpop.permute.xlu0 %1217
      %1219 = vrot.lane.b32.xlu0 %v785, 24
      %v1220 = vpop.permute.xlu0 %1219
      %1221 = vrot.lane.b32.xlu0 %v786, 24
      %v1222 = vpop.permute.xlu0 %1221
      %1223 = vrot.lane.b32.xlu0 %v787, 24
      %v1224 = vpop.permute.xlu0 %1223
      %1225 = vrot.lane.b32.xlu0 %v788, 24
      %v1226 = vpop.permute.xlu0 %1225
      %1227 = vrot.lane.b32.xlu0 %v789, 24
      %v1228 = vpop.permute.xlu0 %1227
      %1229 = vrot.lane.b32.xlu0 %v790, 24
      %v1230 = vpop.permute.xlu0 %1229
      %1231 = vrot.lane.b32.xlu0 %v791, 24
      %v1232 = vpop.permute.xlu0 %1231
      %1233 = vrot.lane.b32.xlu0 %v792, 24
      %v1234 = vpop.permute.xlu0 %1233
      %1235 = vrot.lane.b32.xlu0 %v793, 24
      %v1236 = vpop.permute.xlu0 %1235
      %1237 = vrot.lane.b32.xlu0 %v794, 24
      %v1238 = vpop.permute.xlu0 %1237
      %1239 = vrot.lane.b32.xlu0 %v795, 24
      %v1240 = vpop.permute.xlu0 %1239
      %vm1273 = vcmask 228546
      %1274 = vst.msk [vmem:[#allocation5 - $0x2] sm:$0xfc] %vm1273, %v1178
      %vm1275 = vcmask 222400
      %1276 = vst.msk [vmem:[#allocation5 + $0x6] sm:$0x3] %vm1275, %v1180
      %1277 = vst.msk [vmem:[#allocation5 + $0x6] sm:$0xfc] %vm1273, %v1182
      %1278 = vst.msk [vmem:[#allocation5 + $0xe] sm:$0x3] %vm1275, %v1184
      %1279 = vst.msk [vmem:[#allocation5 + $0xe] sm:$0xfc] %vm1273, %v1186
      %1280 = vst.msk [vmem:[#allocation5 + $0x16] sm:$0x3] %vm1275, %v1188
      %1281 = vst.msk [vmem:[#allocation5 + $0x16] sm:$0xfc] %vm1273, %v1190
      %1282 = vst.msk [vmem:[#allocation5 + $0x1e] sm:$0x3] %vm1275, %v1192
      %1283 = vst.msk [vmem:[#allocation5 + $0x1e] sm:$0xfc] %vm1273, %v1194
      %1284 = vst.msk [vmem:[#allocation5 + $0x26] sm:$0x3] %vm1275, %v1196
      %1285 = vst.msk [vmem:[#allocation5 + $0x26] sm:$0xfc] %vm1273, %v1198
      %1286 = vst.msk [vmem:[#allocation5 + $0x2e] sm:$0x3] %vm1275, %v1200
      %1287 = vst.msk [vmem:[#allocation5 + $0x2e] sm:$0xfc] %vm1273, %v1202
      %1288 = vst.msk [vmem:[#allocation5 + $0x36] sm:$0x3] %vm1275, %v1204
      %1289 = vst.msk [vmem:[#allocation5 + $0x36] sm:$0xfc] %vm1273, %v1206
      %1290 = vst.msk [vmem:[#allocation5 + $0x3e] sm:$0x3] %vm1275, %v1208
      %1291 = vst.msk [vmem:[#allocation5 + $0x3e] sm:$0xfc] %vm1273, %v1210
      %1292 = vst.msk [vmem:[#allocation5 + $0x46] sm:$0x3] %vm1275, %v1212
      %1293 = vst.msk [vmem:[#allocation5 + $0x46] sm:$0xfc] %vm1273, %v1214
      %1294 = vst.msk [vmem:[#allocation5 + $0x4e] sm:$0x3] %vm1275, %v1216
      %1295 = vst.msk [vmem:[#allocation5 + $0x4e] sm:$0xfc] %vm1273, %v1218
      %1296 = vst.msk [vmem:[#allocation5 + $0x56] sm:$0x3] %vm1275, %v1220
      %1297 = vst.msk [vmem:[#allocation5 + $0x56] sm:$0xfc] %vm1273, %v1222
      %1298 = vst.msk [vmem:[#allocation5 + $0x5e] sm:$0x3] %vm1275, %v1224
      %1299 = vst.msk [vmem:[#allocation5 + $0x5e] sm:$0xfc] %vm1273, %v1226
      %1300 = vst.msk [vmem:[#allocation5 + $0x66] sm:$0x3] %vm1275, %v1228
      %1301 = vst.msk [vmem:[#allocation5 + $0x66] sm:$0xfc] %vm1273, %v1230
      %1302 = vst.msk [vmem:[#allocation5 + $0x6e] sm:$0x3] %vm1275, %v1232
      %1303 = vst.msk [vmem:[#allocation5 + $0x6e] sm:$0xfc] %vm1273, %v1234
      %1304 = vst.msk [vmem:[#allocation5 + $0x76] sm:$0x3] %vm1275, %v1236
      %1305 = vst.msk [vmem:[#allocation5 + $0x76] sm:$0xfc] %vm1273, %v1238
      %1306 = vst.msk [vmem:[#allocation5 + $0x7e] sm:$0x3] %vm1275, %v1240
      %1307 = vrot.lane.b32.xlu0 %v330, 28
      %v1308 = vpop.permute.xlu0 %1307
      %1309 = vrot.lane.b32.xlu0 %v331, 28
      %v1310 = vpop.permute.xlu0 %1309
      %1311 = vrot.lane.b32.xlu0 %v332, 28
      %v1312 = vpop.permute.xlu0 %1311
      %1313 = vrot.lane.b32.xlu0 %v333, 28
      %v1314 = vpop.permute.xlu0 %1313
      %1315 = vrot.lane.b32.xlu0 %v334, 28
      %v1316 = vpop.permute.xlu0 %1315
      %1317 = vrot.lane.b32.xlu0 %v335, 28
      %v1318 = vpop.permute.xlu0 %1317
      %1319 = vrot.lane.b32.xlu0 %v336, 28
      %v1320 = vpop.permute.xlu0 %1319
      %1321 = vrot.lane.b32.xlu0 %v337, 28
      %v1322 = vpop.permute.xlu0 %1321
      %1323 = vrot.lane.b32.xlu0 %v338, 28
      %v1324 = vpop.permute.xlu0 %1323
      %1325 = vrot.lane.b32.xlu0 %v339, 28
      %v1326 = vpop.permute.xlu0 %1325
      %1327 = vrot.lane.b32.xlu0 %v340, 28
      %v1328 = vpop.permute.xlu0 %1327
      %1329 = vrot.lane.b32.xlu0 %v341, 28
      %v1330 = vpop.permute.xlu0 %1329
      %1331 = vrot.lane.b32.xlu0 %v342, 28
      %v1332 = vpop.permute.xlu0 %1331
      %1333 = vrot.lane.b32.xlu0 %v343, 28
      %v1334 = vpop.permute.xlu0 %1333
      %1335 = vrot.lane.b32.xlu0 %v344, 28
      %v1336 = vpop.permute.xlu0 %1335
      %1337 = vrot.lane.b32.xlu0 %v345, 28
      %v1338 = vpop.permute.xlu0 %1337
      %1339 = vrot.lane.b32.xlu0 %v350, 28
      %v1340 = vpop.permute.xlu0 %1339
      %1341 = vrot.lane.b32.xlu0 %v351, 28
      %v1342 = vpop.permute.xlu0 %1341
      %1343 = vrot.lane.b32.xlu0 %v352, 28
      %v1344 = vpop.permute.xlu0 %1343
      %1345 = vrot.lane.b32.xlu0 %v353, 28
      %v1346 = vpop.permute.xlu0 %1345
      %1347 = vrot.lane.b32.xlu0 %v354, 28
      %v1348 = vpop.permute.xlu0 %1347
      %1349 = vrot.lane.b32.xlu0 %v355, 28
      %v1350 = vpop.permute.xlu0 %1349
      %1351 = vrot.lane.b32.xlu0 %v356, 28
      %v1352 = vpop.permute.xlu0 %1351
      %1353 = vrot.lane.b32.xlu0 %v357, 28
      %v1354 = vpop.permute.xlu0 %1353
      %1355 = vrot.lane.b32.xlu0 %v358, 28
      %v1356 = vpop.permute.xlu0 %1355
      %1357 = vrot.lane.b32.xlu0 %v359, 28
      %v1358 = vpop.permute.xlu0 %1357
      %1359 = vrot.lane.b32.xlu0 %v360, 28
      %v1360 = vpop.permute.xlu0 %1359
      %1361 = vrot.lane.b32.xlu0 %v361, 28
      %v1362 = vpop.permute.xlu0 %1361
      %1363 = vrot.lane.b32.xlu0 %v362, 28
      %v1364 = vpop.permute.xlu0 %1363
      %1365 = vrot.lane.b32.xlu0 %v363, 28
      %v1366 = vpop.permute.xlu0 %1365
      %1367 = vrot.lane.b32.xlu0 %v364, 28
      %v1368 = vpop.permute.xlu0 %1367
      %1369 = vrot.lane.b32.xlu0 %v365, 28
      %v1370 = vpop.permute.xlu0 %1369
      %vm1403 = vcmask 294114
      %1404 = vst.msk [vmem:[#allocation5 - $0x2] sm:$0xfc] %vm1403, %v1308
      %vm1405 = vcmask 287968
      %1406 = vst.msk [vmem:[#allocation5 + $0x6] sm:$0x3] %vm1405, %v1310
      %1407 = vst.msk [vmem:[#allocation5 + $0x6] sm:$0xfc] %vm1403, %v1312
      %1408 = vst.msk [vmem:[#allocation5 + $0xe] sm:$0x3] %vm1405, %v1314
      %1409 = vst.msk [vmem:[#allocation5 + $0xe] sm:$0xfc] %vm1403, %v1316
      %1410 = vst.msk [vmem:[#allocation5 + $0x16] sm:$0x3] %vm1405, %v1318
      %1411 = vst.msk [vmem:[#allocation5 + $0x16] sm:$0xfc] %vm1403, %v1320
      %1412 = vst.msk [vmem:[#allocation5 + $0x1e] sm:$0x3] %vm1405, %v1322
      %1413 = vst.msk [vmem:[#allocation5 + $0x1e] sm:$0xfc] %vm1403, %v1324
      %1414 = vst.msk [vmem:[#allocation5 + $0x26] sm:$0x3] %vm1405, %v1326
      %1415 = vst.msk [vmem:[#allocation5 + $0x26] sm:$0xfc] %vm1403, %v1328
      %1416 = vst.msk [vmem:[#allocation5 + $0x2e] sm:$0x3] %vm1405, %v1330
      %1417 = vst.msk [vmem:[#allocation5 + $0x2e] sm:$0xfc] %vm1403, %v1332
      %1418 = vst.msk [vmem:[#allocation5 + $0x36] sm:$0x3] %vm1405, %v1334
      %1419 = vst.msk [vmem:[#allocation5 + $0x36] sm:$0xfc] %vm1403, %v1336
      %1420 = vst.msk [vmem:[#allocation5 + $0x3e] sm:$0x3] %vm1405, %v1338
      %1421 = vst.msk [vmem:[#allocation5 + $0x3e] sm:$0xfc] %vm1403, %v1340
      %1422 = vst.msk [vmem:[#allocation5 + $0x46] sm:$0x3] %vm1405, %v1342
      %1423 = vst.msk [vmem:[#allocation5 + $0x46] sm:$0xfc] %vm1403, %v1344
      %1424 = vst.msk [vmem:[#allocation5 + $0x4e] sm:$0x3] %vm1405, %v1346
      %1425 = vst.msk [vmem:[#allocation5 + $0x4e] sm:$0xfc] %vm1403, %v1348
      %1426 = vst.msk [vmem:[#allocation5 + $0x56] sm:$0x3] %vm1405, %v1350
      %1427 = vst.msk [vmem:[#allocation5 + $0x56] sm:$0xfc] %vm1403, %v1352
      %1428 = vst.msk [vmem:[#allocation5 + $0x5e] sm:$0x3] %vm1405, %v1354
      %1429 = vst.msk [vmem:[#allocation5 + $0x5e] sm:$0xfc] %vm1403, %v1356
      %1430 = vst.msk [vmem:[#allocation5 + $0x66] sm:$0x3] %vm1405, %v1358
      %1431 = vst.msk [vmem:[#allocation5 + $0x66] sm:$0xfc] %vm1403, %v1360
      %1432 = vst.msk [vmem:[#allocation5 + $0x6e] sm:$0x3] %vm1405, %v1362
      %1433 = vst.msk [vmem:[#allocation5 + $0x6e] sm:$0xfc] %vm1403, %v1364
      %1434 = vst.msk [vmem:[#allocation5 + $0x76] sm:$0x3] %vm1405, %v1366
      %1435 = vst.msk [vmem:[#allocation5 + $0x76] sm:$0xfc] %vm1403, %v1368
      %1436 = vst.msk [vmem:[#allocation5 + $0x7e] sm:$0x3] %vm1405, %v1370
      %1439 = vrot.lane.b32.xlu0 %v762, 36
      %v1440 = vpop.permute.xlu0 %1439
      %1441 = vrot.lane.b32.xlu0 %v764, 36
      %v1442 = vpop.permute.xlu0 %1441
      %1443 = vrot.lane.b32.xlu0 %v766, 36
      %v1444 = vpop.permute.xlu0 %1443
      %1445 = vrot.lane.b32.xlu0 %v768, 36
      %v1446 = vpop.permute.xlu0 %1445
      %1447 = vrot.lane.b32.xlu0 %v770, 36
      %v1448 = vpop.permute.xlu0 %1447
      %1449 = vrot.lane.b32.xlu0 %v772, 36
      %v1450 = vpop.permute.xlu0 %1449
      %1451 = vrot.lane.b32.xlu0 %v774, 36
      %v1452 = vpop.permute.xlu0 %1451
      %1453 = vrot.lane.b32.xlu0 %v776, 36
      %v1454 = vpop.permute.xlu0 %1453
      %1455 = vrot.lane.b32.xlu0 %v782, 36
      %v1456 = vpop.permute.xlu0 %1455
      %1457 = vrot.lane.b32.xlu0 %v784, 36
      %v1458 = vpop.permute.xlu0 %1457
      %1459 = vrot.lane.b32.xlu0 %v786, 36
      %v1460 = vpop.permute.xlu0 %1459
      %1461 = vrot.lane.b32.xlu0 %v788, 36
      %v1462 = vpop.permute.xlu0 %1461
      %1463 = vrot.lane.b32.xlu0 %v790, 36
      %v1464 = vpop.permute.xlu0 %1463
      %1465 = vrot.lane.b32.xlu0 %v792, 36
      %v1466 = vpop.permute.xlu0 %1465
      %1467 = vrot.lane.b32.xlu0 %v794, 36
      %v1468 = vpop.permute.xlu0 %1467
      %1469 = vrot.lane.b32.xlu0 %v796, 36
      %v1470 = vpop.permute.xlu0 %1469
      %vm1487 = vcmask 326944
      %1488 = vst.msk [vmem:[#allocation5] sm:$0xff] %vm1487, %v1440
      %1489 = vst.msk [vmem:[#allocation5 + $0x8] sm:$0xff] %vm1487, %v1442
      %1490 = vst.msk [vmem:[#allocation5 + $0x10] sm:$0xff] %vm1487, %v1444
      %1491 = vst.msk [vmem:[#allocation5 + $0x18] sm:$0xff] %vm1487, %v1446
      %1492 = vst.msk [vmem:[#allocation5 + $0x20] sm:$0xff] %vm1487, %v1448
      %1493 = vst.msk [vmem:[#allocation5 + $0x28] sm:$0xff] %vm1487, %v1450
      %1494 = vst.msk [vmem:[#allocation5 + $0x30] sm:$0xff] %vm1487, %v1452
      %1495 = vst.msk [vmem:[#allocation5 + $0x38] sm:$0xff] %vm1487, %v1454
      %1496 = vst.msk [vmem:[#allocation5 + $0x40] sm:$0xff] %vm1487, %v1456
      %1497 = vst.msk [vmem:[#allocation5 + $0x48] sm:$0xff] %vm1487, %v1458
      %1498 = vst.msk [vmem:[#allocation5 + $0x50] sm:$0xff] %vm1487, %v1460
      %1499 = vst.msk [vmem:[#allocation5 + $0x58] sm:$0xff] %vm1487, %v1462
      %1500 = vst.msk [vmem:[#allocation5 + $0x60] sm:$0xff] %vm1487, %v1464
      %1501 = vst.msk [vmem:[#allocation5 + $0x68] sm:$0xff] %vm1487, %v1466
      %1502 = vst.msk [vmem:[#allocation5 + $0x70] sm:$0xff] %vm1487, %v1468
      %1503 = vst.msk [vmem:[#allocation5 + $0x78] sm:$0xff] %vm1487, %v1470
      %1504 = vrot.lane.b32.xlu0 %v332, 40
      %v1505 = vpop.permute.xlu0 %1504
      %1506 = vrot.lane.b32.xlu0 %v334, 40
      %v1507 = vpop.permute.xlu0 %1506
      %1508 = vrot.lane.b32.xlu0 %v336, 40
      %v1509 = vpop.permute.xlu0 %1508
      %1510 = vrot.lane.b32.xlu0 %v338, 40
      %v1511 = vpop.permute.xlu0 %1510
      %1512 = vrot.lane.b32.xlu0 %v340, 40
      %v1513 = vpop.permute.xlu0 %1512
      %1514 = vrot.lane.b32.xlu0 %v342, 40
      %v1515 = vpop.permute.xlu0 %1514
      %1516 = vrot.lane.b32.xlu0 %v344, 40
      %v1517 = vpop.permute.xlu0 %1516
      %1518 = vrot.lane.b32.xlu0 %v346, 40
      %v1519 = vpop.permute.xlu0 %1518
      %1520 = vrot.lane.b32.xlu0 %v352, 40
      %v1521 = vpop.permute.xlu0 %1520
      %1522 = vrot.lane.b32.xlu0 %v354, 40
      %v1523 = vpop.permute.xlu0 %1522
      %1524 = vrot.lane.b32.xlu0 %v356, 40
      %v1525 = vpop.permute.xlu0 %1524
      %1526 = vrot.lane.b32.xlu0 %v358, 40
      %v1527 = vpop.permute.xlu0 %1526
      %1528 = vrot.lane.b32.xlu0 %v360, 40
      %v1529 = vpop.permute.xlu0 %1528
      %1530 = vrot.lane.b32.xlu0 %v362, 40
      %v1531 = vpop.permute.xlu0 %1530
      %1532 = vrot.lane.b32.xlu0 %v364, 40
      %v1533 = vpop.permute.xlu0 %1532
      %1534 = vrot.lane.b32.xlu0 %v366, 40
      %v1535 = vpop.permute.xlu0 %1534
      %vm1552 = vcmask 392512
      %1553 = vst.msk [vmem:[#allocation5] sm:$0xff] %vm1552, %v1505
      %1554 = vst.msk [vmem:[#allocation5 + $0x8] sm:$0xff] %vm1552, %v1507
      %1555 = vst.msk [vmem:[#allocation5 + $0x10] sm:$0xff] %vm1552, %v1509
      %1556 = vst.msk [vmem:[#allocation5 + $0x18] sm:$0xff] %vm1552, %v1511
      %1557 = vst.msk [vmem:[#allocation5 + $0x20] sm:$0xff] %vm1552, %v1513
      %1558 = vst.msk [vmem:[#allocation5 + $0x28] sm:$0xff] %vm1552, %v1515
      %1559 = vst.msk [vmem:[#allocation5 + $0x30] sm:$0xff] %vm1552, %v1517
      %1560 = vst.msk [vmem:[#allocation5 + $0x38] sm:$0xff] %vm1552, %v1519
      %1561 = vst.msk [vmem:[#allocation5 + $0x40] sm:$0xff] %vm1552, %v1521
      %1562 = vst.msk [vmem:[#allocation5 + $0x48] sm:$0xff] %vm1552, %v1523
      %1563 = vst.msk [vmem:[#allocation5 + $0x50] sm:$0xff] %vm1552, %v1525
      %1564 = vst.msk [vmem:[#allocation5 + $0x58] sm:$0xff] %vm1552, %v1527
      %1565 = vst.msk [vmem:[#allocation5 + $0x60] sm:$0xff] %vm1552, %v1529
      %1566 = vst.msk [vmem:[#allocation5 + $0x68] sm:$0xff] %vm1552, %v1531
      %1567 = vst.msk [vmem:[#allocation5 + $0x70] sm:$0xff] %vm1552, %v1533
      %1568 = vst.msk [vmem:[#allocation5 + $0x78] sm:$0xff] %vm1552, %v1535
      %1571 = vrot.lane.b32.xlu0 %v762, 48
      %v1572 = vpop.permute.xlu0 %1571
      %1573 = vrot.lane.b32.xlu0 %v763, 48
      %v1574 = vpop.permute.xlu0 %1573
      %1575 = vrot.lane.b32.xlu0 %v764, 48
      %v1576 = vpop.permute.xlu0 %1575
      %1577 = vrot.lane.b32.xlu0 %v765, 48
      %v1578 = vpop.permute.xlu0 %1577
      %1579 = vrot.lane.b32.xlu0 %v766, 48
      %v1580 = vpop.permute.xlu0 %1579
      %1581 = vrot.lane.b32.xlu0 %v767, 48
      %v1582 = vpop.permute.xlu0 %1581
      %1583 = vrot.lane.b32.xlu0 %v768, 48
      %v1584 = vpop.permute.xlu0 %1583
      %1585 = vrot.lane.b32.xlu0 %v769, 48
      %v1586 = vpop.permute.xlu0 %1585
      %1587 = vrot.lane.b32.xlu0 %v770, 48
      %v1588 = vpop.permute.xlu0 %1587
      %1589 = vrot.lane.b32.xlu0 %v771, 48
      %v1590 = vpop.permute.xlu0 %1589
      %1591 = vrot.lane.b32.xlu0 %v772, 48
      %v1592 = vpop.permute.xlu0 %1591
      %1593 = vrot.lane.b32.xlu0 %v773, 48
      %v1594 = vpop.permute.xlu0 %1593
      %1595 = vrot.lane.b32.xlu0 %v774, 48
      %v1596 = vpop.permute.xlu0 %1595
      %1597 = vrot.lane.b32.xlu0 %v775, 48
      %v1598 = vpop.permute.xlu0 %1597
      %1599 = vrot.lane.b32.xlu0 %v776, 48
      %v1600 = vpop.permute.xlu0 %1599
      %1601 = vrot.lane.b32.xlu0 %v777, 48
      %v1602 = vpop.permute.xlu0 %1601
      %1603 = vrot.lane.b32.xlu0 %v782, 48
      %v1604 = vpop.permute.xlu0 %1603
      %1605 = vrot.lane.b32.xlu0 %v783, 48
      %v1606 = vpop.permute.xlu0 %1605
      %1607 = vrot.lane.b32.xlu0 %v784, 48
      %v1608 = vpop.permute.xlu0 %1607
      %1609 = vrot.lane.b32.xlu0 %v785, 48
      %v1610 = vpop.permute.xlu0 %1609
      %1611 = vrot.lane.b32.xlu0 %v786, 48
      %v1612 = vpop.permute.xlu0 %1611
      %1613 = vrot.lane.b32.xlu0 %v787, 48
      %v1614 = vpop.permute.xlu0 %1613
      %1615 = vrot.lane.b32.xlu0 %v788, 48
      %v1616 = vpop.permute.xlu0 %1615
      %1617 = vrot.lane.b32.xlu0 %v789, 48
      %v1618 = vpop.permute.xlu0 %1617
      %1619 = vrot.lane.b32.xlu0 %v790, 48
      %v1620 = vpop.permute.xlu0 %1619
      %1621 = vrot.lane.b32.xlu0 %v791, 48
      %v1622 = vpop.permute.xlu0 %1621
      %1623 = vrot.lane.b32.xlu0 %v792, 48
      %v1624 = vpop.permute.xlu0 %1623
      %1625 = vrot.lane.b32.xlu0 %v793, 48
      %v1626 = vpop.permute.xlu0 %1625
      %1627 = vrot.lane.b32.xlu0 %v794, 48
      %v1628 = vpop.permute.xlu0 %1627
      %1629 = vrot.lane.b32.xlu0 %v795, 48
      %v1630 = vpop.permute.xlu0 %1629
      %1631 = vrot.lane.b32.xlu0 %v796, 48
      %v1632 = vpop.permute.xlu0 %1631
      %1633 = vrot.lane.b32.xlu0 %v797, 48
      %v1634 = vpop.permute.xlu0 %1633
      %vm1667 = vcmask 425345
      %1668 = vst.msk [vmem:[#allocation5 - $0x1] sm:$0xfe] %vm1667, %v1572
      %vm1669 = vcmask 418176
      %1670 = vst.msk [vmem:[#allocation5 + $0x7] sm:$0x1] %vm1669, %v1574
      %1671 = vst.msk [vmem:[#allocation5 + $0x7] sm:$0xfe] %vm1667, %v1576
      %1672 = vst.msk [vmem:[#allocation5 + $0xf] sm:$0x1] %vm1669, %v1578
      %1673 = vst.msk [vmem:[#allocation5 + $0xf] sm:$0xfe] %vm1667, %v1580
      %1674 = vst.msk [vmem:[#allocation5 + $0x17] sm:$0x1] %vm1669, %v1582
      %1675 = vst.msk [vmem:[#allocation5 + $0x17] sm:$0xfe] %vm1667, %v1584
      %1676 = vst.msk [vmem:[#allocation5 + $0x1f] sm:$0x1] %vm1669, %v1586
      %1677 = vst.msk [vmem:[#allocation5 + $0x1f] sm:$0xfe] %vm1667, %v1588
      %1678 = vst.msk [vmem:[#allocation5 + $0x27] sm:$0x1] %vm1669, %v1590
      %1679 = vst.msk [vmem:[#allocation5 + $0x27] sm:$0xfe] %vm1667, %v1592
      %1680 = vst.msk [vmem:[#allocation5 + $0x2f] sm:$0x1] %vm1669, %v1594
      %1681 = vst.msk [vmem:[#allocation5 + $0x2f] sm:$0xfe] %vm1667, %v1596
      %1682 = vst.msk [vmem:[#allocation5 + $0x37] sm:$0x1] %vm1669, %v1598
      %1683 = vst.msk [vmem:[#allocation5 + $0x37] sm:$0xfe] %vm1667, %v1600
      %1684 = vst.msk [vmem:[#allocation5 + $0x3f] sm:$0x1] %vm1669, %v1602
      %1685 = vst.msk [vmem:[#allocation5 + $0x3f] sm:$0xfe] %vm1667, %v1604
      %1686 = vst.msk [vmem:[#allocation5 + $0x47] sm:$0x1] %vm1669, %v1606
      %1687 = vst.msk [vmem:[#allocation5 + $0x47] sm:$0xfe] %vm1667, %v1608
      %1688 = vst.msk [vmem:[#allocation5 + $0x4f] sm:$0x1] %vm1669, %v1610
      %1689 = vst.msk [vmem:[#allocation5 + $0x4f] sm:$0xfe] %vm1667, %v1612
      %1690 = vst.msk [vmem:[#allocation5 + $0x57] sm:$0x1] %vm1669, %v1614
      %1691 = vst.msk [vmem:[#allocation5 + $0x57] sm:$0xfe] %vm1667, %v1616
      %1692 = vst.msk [vmem:[#allocation5 + $0x5f] sm:$0x1] %vm1669, %v1618
      %1693 = vst.msk [vmem:[#allocation5 + $0x5f] sm:$0xfe] %vm1667, %v1620
      %1694 = vst.msk [vmem:[#allocation5 + $0x67] sm:$0x1] %vm1669, %v1622
      %1695 = vst.msk [vmem:[#allocation5 + $0x67] sm:$0xfe] %vm1667, %v1624
      %1696 = vst.msk [vmem:[#allocation5 + $0x6f] sm:$0x1] %vm1669, %v1626
      %1697 = vst.msk [vmem:[#allocation5 + $0x6f] sm:$0xfe] %vm1667, %v1628
      %1698 = vst.msk [vmem:[#allocation5 + $0x77] sm:$0x1] %vm1669, %v1630
      %1699 = vst.msk [vmem:[#allocation5 + $0x77] sm:$0xfe] %vm1667, %v1632
      %1700 = vst.msk [vmem:[#allocation5 + $0x7f] sm:$0x1] %vm1669, %v1634
      %1701 = vrot.lane.b32.xlu0 %v332, 52
      %v1702 = vpop.permute.xlu0 %1701
      %1703 = vrot.lane.b32.xlu0 %v333, 52
      %v1704 = vpop.permute.xlu0 %1703
      %1705 = vrot.lane.b32.xlu0 %v334, 52
      %v1706 = vpop.permute.xlu0 %1705
      %1707 = vrot.lane.b32.xlu0 %v335, 52
      %v1708 = vpop.permute.xlu0 %1707
      %1709 = vrot.lane.b32.xlu0 %v336, 52
      %v1710 = vpop.permute.xlu0 %1709
      %1711 = vrot.lane.b32.xlu0 %v337, 52
      %v1712 = vpop.permute.xlu0 %1711
      %1713 = vrot.lane.b32.xlu0 %v338, 52
      %v1714 = vpop.permute.xlu0 %1713
      %1715 = vrot.lane.b32.xlu0 %v339, 52
      %v1716 = vpop.permute.xlu0 %1715
      %1717 = vrot.lane.b32.xlu0 %v340, 52
      %v1718 = vpop.permute.xlu0 %1717
      %1719 = vrot.lane.b32.xlu0 %v341, 52
      %v1720 = vpop.permute.xlu0 %1719
      %1721 = vrot.lane.b32.xlu0 %v342, 52
      %v1722 = vpop.permute.xlu0 %1721
      %1723 = vrot.lane.b32.xlu0 %v343, 52
      %v1724 = vpop.permute.xlu0 %1723
      %1725 = vrot.lane.b32.xlu0 %v344, 52
      %v1726 = vpop.permute.xlu0 %1725
      %1727 = vrot.lane.b32.xlu0 %v345, 52
      %v1728 = vpop.permute.xlu0 %1727
      %1729 = vrot.lane.b32.xlu0 %v346, 52
      %v1730 = vpop.permute.xlu0 %1729
      %1731 = vrot.lane.b32.xlu0 %v347, 52
      %v1732 = vpop.permute.xlu0 %1731
      %1733 = vrot.lane.b32.xlu0 %v352, 52
      %v1734 = vpop.permute.xlu0 %1733
      %1735 = vrot.lane.b32.xlu0 %v353, 52
      %v1736 = vpop.permute.xlu0 %1735
      %1737 = vrot.lane.b32.xlu0 %v354, 52
      %v1738 = vpop.permute.xlu0 %1737
      %1739 = vrot.lane.b32.xlu0 %v355, 52
      %v1740 = vpop.permute.xlu0 %1739
      %1741 = vrot.lane.b32.xlu0 %v356, 52
      %v1742 = vpop.permute.xlu0 %1741
      %1743 = vrot.lane.b32.xlu0 %v357, 52
      %v1744 = vpop.permute.xlu0 %1743
      %1745 = vrot.lane.b32.xlu0 %v358, 52
      %v1746 = vpop.permute.xlu0 %1745
      %1747 = vrot.lane.b32.xlu0 %v359, 52
      %v1748 = vpop.permute.xlu0 %1747
      %1749 = vrot.lane.b32.xlu0 %v360, 52
      %v1750 = vpop.permute.xlu0 %1749
      %1751 = vrot.lane.b32.xlu0 %v361, 52
      %v1752 = vpop.permute.xlu0 %1751
      %1753 = vrot.lane.b32.xlu0 %v362, 52
      %v1754 = vpop.permute.xlu0 %1753
      %1755 = vrot.lane.b32.xlu0 %v363, 52
      %v1756 = vpop.permute.xlu0 %1755
      %1757 = vrot.lane.b32.xlu0 %v364, 52
      %v1758 = vpop.permute.xlu0 %1757
      %1759 = vrot.lane.b32.xlu0 %v365, 52
      %v1760 = vpop.permute.xlu0 %1759
      %1761 = vrot.lane.b32.xlu0 %v366, 52
      %v1762 = vpop.permute.xlu0 %1761
      %1763 = vrot.lane.b32.xlu0 %v367, 52
      %v1764 = vpop.permute.xlu0 %1763
      %vm1797 = vcmask 490913
      %1798 = vst.msk [vmem:[#allocation5 - $0x1] sm:$0xfe] %vm1797, %v1702
      %vm1799 = vcmask 483744
      %1800 = vst.msk [vmem:[#allocation5 + $0x7] sm:$0x1] %vm1799, %v1704
      %1801 = vst.msk [vmem:[#allocation5 + $0x7] sm:$0xfe] %vm1797, %v1706
      %1802 = vst.msk [vmem:[#allocation5 + $0xf] sm:$0x1] %vm1799, %v1708
      %1803 = vst.msk [vmem:[#allocation5 + $0xf] sm:$0xfe] %vm1797, %v1710
      %1804 = vst.msk [vmem:[#allocation5 + $0x17] sm:$0x1] %vm1799, %v1712
      %1805 = vst.msk [vmem:[#allocation5 + $0x17] sm:$0xfe] %vm1797, %v1714
      %1806 = vst.msk [vmem:[#allocation5 + $0x1f] sm:$0x1] %vm1799, %v1716
      %1807 = vst.msk [vmem:[#allocation5 + $0x1f] sm:$0xfe] %vm1797, %v1718
      %1808 = vst.msk [vmem:[#allocation5 + $0x27] sm:$0x1] %vm1799, %v1720
      %1809 = vst.msk [vmem:[#allocation5 + $0x27] sm:$0xfe] %vm1797, %v1722
      %1810 = vst.msk [vmem:[#allocation5 + $0x2f] sm:$0x1] %vm1799, %v1724
      %1811 = vst.msk [vmem:[#allocation5 + $0x2f] sm:$0xfe] %vm1797, %v1726
      %1812 = vst.msk [vmem:[#allocation5 + $0x37] sm:$0x1] %vm1799, %v1728
      %1813 = vst.msk [vmem:[#allocation5 + $0x37] sm:$0xfe] %vm1797, %v1730
      %1814 = vst.msk [vmem:[#allocation5 + $0x3f] sm:$0x1] %vm1799, %v1732
      %1815 = vst.msk [vmem:[#allocation5 + $0x3f] sm:$0xfe] %vm1797, %v1734
      %1816 = vst.msk [vmem:[#allocation5 + $0x47] sm:$0x1] %vm1799, %v1736
      %1817 = vst.msk [vmem:[#allocation5 + $0x47] sm:$0xfe] %vm1797, %v1738
      %1818 = vst.msk [vmem:[#allocation5 + $0x4f] sm:$0x1] %vm1799, %v1740
      %1819 = vst.msk [vmem:[#allocation5 + $0x4f] sm:$0xfe] %vm1797, %v1742
      %1820 = vst.msk [vmem:[#allocation5 + $0x57] sm:$0x1] %vm1799, %v1744
      %1821 = vst.msk [vmem:[#allocation5 + $0x57] sm:$0xfe] %vm1797, %v1746
      %1822 = vst.msk [vmem:[#allocation5 + $0x5f] sm:$0x1] %vm1799, %v1748
      %1823 = vst.msk [vmem:[#allocation5 + $0x5f] sm:$0xfe] %vm1797, %v1750
      %1824 = vst.msk [vmem:[#allocation5 + $0x67] sm:$0x1] %vm1799, %v1752
      %1825 = vst.msk [vmem:[#allocation5 + $0x67] sm:$0xfe] %vm1797, %v1754
      %1826 = vst.msk [vmem:[#allocation5 + $0x6f] sm:$0x1] %vm1799, %v1756
      %1827 = vst.msk [vmem:[#allocation5 + $0x6f] sm:$0xfe] %vm1797, %v1758
      %1828 = vst.msk [vmem:[#allocation5 + $0x77] sm:$0x1] %vm1799, %v1760
      %1829 = vst.msk [vmem:[#allocation5 + $0x77] sm:$0xfe] %vm1797, %v1762
      %1830 = vst.msk [vmem:[#allocation5 + $0x7f] sm:$0x1] %vm1799, %v1764
      %1831 = vrot.lane.b32.xlu0 %v762, 60
      %v1832 = vpop.permute.xlu0 %1831
      %1833 = vrot.lane.b32.xlu0 %v763, 60
      %v1834 = vpop.permute.xlu0 %1833
      %1835 = vrot.lane.b32.xlu0 %v764, 60
      %v1836 = vpop.permute.xlu0 %1835
      %1837 = vrot.lane.b32.xlu0 %v765, 60
      %v1838 = vpop.permute.xlu0 %1837
      %1839 = vrot.lane.b32.xlu0 %v766, 60
      %v1840 = vpop.permute.xlu0 %1839
      %1841 = vrot.lane.b32.xlu0 %v767, 60
      %v1842 = vpop.permute.xlu0 %1841
      %1843 = vrot.lane.b32.xlu0 %v768, 60
      %v1844 = vpop.permute.xlu0 %1843
      %1845 = vrot.lane.b32.xlu0 %v769, 60
      %v1846 = vpop.permute.xlu0 %1845
      %1847 = vrot.lane.b32.xlu0 %v770, 60
      %v1848 = vpop.permute.xlu0 %1847
      %1849 = vrot.lane.b32.xlu0 %v771, 60
      %v1850 = vpop.permute.xlu0 %1849
      %1851 = vrot.lane.b32.xlu0 %v772, 60
      %v1852 = vpop.permute.xlu0 %1851
      %1853 = vrot.lane.b32.xlu0 %v773, 60
      %v1854 = vpop.permute.xlu0 %1853
      %1855 = vrot.lane.b32.xlu0 %v774, 60
      %v1856 = vpop.permute.xlu0 %1855
      %1857 = vrot.lane.b32.xlu0 %v775, 60
      %v1858 = vpop.permute.xlu0 %1857
      %1859 = vrot.lane.b32.xlu0 %v776, 60
      %v1860 = vpop.permute.xlu0 %1859
      %1861 = vrot.lane.b32.xlu0 %v777, 60
      %v1862 = vpop.permute.xlu0 %1861
      %1863 = vrot.lane.b32.xlu0 %v782, 60
      %v1864 = vpop.permute.xlu0 %1863
      %1865 = vrot.lane.b32.xlu0 %v783, 60
      %v1866 = vpop.permute.xlu0 %1865
      %1867 = vrot.lane.b32.xlu0 %v784, 60
      %v1868 = vpop.permute.xlu0 %1867
      %1869 = vrot.lane.b32.xlu0 %v785, 60
      %v1870 = vpop.permute.xlu0 %1869
      %1871 = vrot.lane.b32.xlu0 %v786, 60
      %v1872 = vpop.permute.xlu0 %1871
      %1873 = vrot.lane.b32.xlu0 %v787, 60
      %v1874 = vpop.permute.xlu0 %1873
      %1875 = vrot.lane.b32.xlu0 %v788, 60
      %v1876 = vpop.permute.xlu0 %1875
      %1877 = vrot.lane.b32.xlu0 %v789, 60
      %v1878 = vpop.permute.xlu0 %1877
      %1879 = vrot.lane.b32.xlu0 %v790, 60
      %v1880 = vpop.permute.xlu0 %1879
      %1881 = vrot.lane.b32.xlu0 %v791, 60
      %v1882 = vpop.permute.xlu0 %1881
      %1883 = vrot.lane.b32.xlu0 %v792, 60
      %v1884 = vpop.permute.xlu0 %1883
      %1885 = vrot.lane.b32.xlu0 %v793, 60
      %v1886 = vpop.permute.xlu0 %1885
      %1887 = vrot.lane.b32.xlu0 %v794, 60
      %v1888 = vpop.permute.xlu0 %1887
      %1889 = vrot.lane.b32.xlu0 %v795, 60
      %v1890 = vpop.permute.xlu0 %1889
      %1891 = vrot.lane.b32.xlu0 %v796, 60
      %v1892 = vpop.permute.xlu0 %1891
      %1893 = vrot.lane.b32.xlu0 %v797, 60
      %v1894 = vpop.permute.xlu0 %1893
      %vm1927 = vcmask 523746
      %1928 = vst.msk [vmem:[#allocation5 - $0x2] sm:$0xfc] %vm1927, %v1832
      %vm1929 = vcmask 517600
      %1930 = vst.msk [vmem:[#allocation5 + $0x6] sm:$0x3] %vm1929, %v1834
      %1931 = vst.msk [vmem:[#allocation5 + $0x6] sm:$0xfc] %vm1927, %v1836
      %1932 = vst.msk [vmem:[#allocation5 + $0xe] sm:$0x3] %vm1929, %v1838
      %1933 = vst.msk [vmem:[#allocation5 + $0xe] sm:$0xfc] %vm1927, %v1840
      %1934 = vst.msk [vmem:[#allocation5 + $0x16] sm:$0x3] %vm1929, %v1842
      %1935 = vst.msk [vmem:[#allocation5 + $0x16] sm:$0xfc] %vm1927, %v1844
      %1936 = vst.msk [vmem:[#allocation5 + $0x1e] sm:$0x3] %vm1929, %v1846
      %1937 = vst.msk [vmem:[#allocation5 + $0x1e] sm:$0xfc] %vm1927, %v1848
      %1938 = vst.msk [vmem:[#allocation5 + $0x26] sm:$0x3] %vm1929, %v1850
      %1939 = vst.msk [vmem:[#allocation5 + $0x26] sm:$0xfc] %vm1927, %v1852
      %1940 = vst.msk [vmem:[#allocation5 + $0x2e] sm:$0x3] %vm1929, %v1854
      %1941 = vst.msk [vmem:[#allocation5 + $0x2e] sm:$0xfc] %vm1927, %v1856
      %1942 = vst.msk [vmem:[#allocation5 + $0x36] sm:$0x3] %vm1929, %v1858
      %1943 = vst.msk [vmem:[#allocation5 + $0x36] sm:$0xfc] %vm1927, %v1860
      %1944 = vst.msk [vmem:[#allocation5 + $0x3e] sm:$0x3] %vm1929, %v1862
      %1945 = vst.msk [vmem:[#allocation5 + $0x3e] sm:$0xfc] %vm1927, %v1864
      %1946 = vst.msk [vmem:[#allocation5 + $0x46] sm:$0x3] %vm1929, %v1866
      %1947 = vst.msk [vmem:[#allocation5 + $0x46] sm:$0xfc] %vm1927, %v1868
      %1948 = vst.msk [vmem:[#allocation5 + $0x4e] sm:$0x3] %vm1929, %v1870
      %1949 = vst.msk [vmem:[#allocation5 + $0x4e] sm:$0xfc] %vm1927, %v1872
      %1950 = vst.msk [vmem:[#allocation5 + $0x56] sm:$0x3] %vm1929, %v1874
      %1951 = vst.msk [vmem:[#allocation5 + $0x56] sm:$0xfc] %vm1927, %v1876
      %1952 = vst.msk [vmem:[#allocation5 + $0x5e] sm:$0x3] %vm1929, %v1878
      %1953 = vst.msk [vmem:[#allocation5 + $0x5e] sm:$0xfc] %vm1927, %v1880
      %1954 = vst.msk [vmem:[#allocation5 + $0x66] sm:$0x3] %vm1929, %v1882
      %1955 = vst.msk [vmem:[#allocation5 + $0x66] sm:$0xfc] %vm1927, %v1884
      %1956 = vst.msk [vmem:[#allocation5 + $0x6e] sm:$0x3] %vm1929, %v1886
      %1957 = vst.msk [vmem:[#allocation5 + $0x6e] sm:$0xfc] %vm1927, %v1888
      %1958 = vst.msk [vmem:[#allocation5 + $0x76] sm:$0x3] %vm1929, %v1890
      %1959 = vst.msk [vmem:[#allocation5 + $0x76] sm:$0xfc] %vm1927, %v1892
      %1960 = vst.msk [vmem:[#allocation5 + $0x7e] sm:$0x3] %vm1929, %v1894
      %1961 = vrot.lane.b32.xlu0 %v332, 64
      %v1962 = vpop.permute.xlu0 %1961
      %1963 = vrot.lane.b32.xlu0 %v333, 64
      %v1964 = vpop.permute.xlu0 %1963
      %1965 = vrot.lane.b32.xlu0 %v334, 64
      %v1966 = vpop.permute.xlu0 %1965
      %1967 = vrot.lane.b32.xlu0 %v335, 64
      %v1968 = vpop.permute.xlu0 %1967
      %1969 = vrot.lane.b32.xlu0 %v336, 64
      %v1970 = vpop.permute.xlu0 %1969
      %1971 = vrot.lane.b32.xlu0 %v337, 64
      %v1972 = vpop.permute.xlu0 %1971
      %1973 = vrot.lane.b32.xlu0 %v338, 64
      %v1974 = vpop.permute.xlu0 %1973
      %1975 = vrot.lane.b32.xlu0 %v339, 64
      %v1976 = vpop.permute.xlu0 %1975
      %1977 = vrot.lane.b32.xlu0 %v340, 64
      %v1978 = vpop.permute.xlu0 %1977
      %1979 = vrot.lane.b32.xlu0 %v341, 64
      %v1980 = vpop.permute.xlu0 %1979
      %1981 = vrot.lane.b32.xlu0 %v342, 64
      %v1982 = vpop.permute.xlu0 %1981
      %1983 = vrot.lane.b32.xlu0 %v343, 64
      %v1984 = vpop.permute.xlu0 %1983
      %1985 = vrot.lane.b32.xlu0 %v344, 64
      %v1986 = vpop.permute.xlu0 %1985
      %1987 = vrot.lane.b32.xlu0 %v345, 64
      %v1988 = vpop.permute.xlu0 %1987
      %1989 = vrot.lane.b32.xlu0 %v346, 64
      %v1990 = vpop.permute.xlu0 %1989
      %1991 = vrot.lane.b32.xlu0 %v347, 64
      %v1992 = vpop.permute.xlu0 %1991
      %1993 = vrot.lane.b32.xlu0 %v352, 64
      %v1994 = vpop.permute.xlu0 %1993
      %1995 = vrot.lane.b32.xlu0 %v353, 64
      %v1996 = vpop.permute.xlu0 %1995
      %1997 = vrot.lane.b32.xlu0 %v354, 64
      %v1998 = vpop.permute.xlu0 %1997
      %1999 = vrot.lane.b32.xlu0 %v355, 64
      %v2000 = vpop.permute.xlu0 %1999
      %2001 = vrot.lane.b32.xlu0 %v356, 64
      %v2002 = vpop.permute.xlu0 %2001
      %2003 = vrot.lane.b32.xlu0 %v357, 64
      %v2004 = vpop.permute.xlu0 %2003
      %2005 = vrot.lane.b32.xlu0 %v358, 64
      %v2006 = vpop.permute.xlu0 %2005
      %2007 = vrot.lane.b32.xlu0 %v359, 64
      %v2008 = vpop.permute.xlu0 %2007
      %2009 = vrot.lane.b32.xlu0 %v360, 64
      %v2010 = vpop.permute.xlu0 %2009
      %2011 = vrot.lane.b32.xlu0 %v361, 64
      %v2012 = vpop.permute.xlu0 %2011
      %2013 = vrot.lane.b32.xlu0 %v362, 64
      %v2014 = vpop.permute.xlu0 %2013
      %2015 = vrot.lane.b32.xlu0 %v363, 64
      %v2016 = vpop.permute.xlu0 %2015
      %2017 = vrot.lane.b32.xlu0 %v364, 64
      %v2018 = vpop.permute.xlu0 %2017
      %2019 = vrot.lane.b32.xlu0 %v365, 64
      %v2020 = vpop.permute.xlu0 %2019
      %2021 = vrot.lane.b32.xlu0 %v366, 64
      %v2022 = vpop.permute.xlu0 %2021
      %2023 = vrot.lane.b32.xlu0 %v367, 64
      %v2024 = vpop.permute.xlu0 %2023
      %vm2057 = vcmask 589314
      %2058 = vst.msk [vmem:[#allocation5 - $0x2] sm:$0xfc] %vm2057, %v1962
      %vm2059 = vcmask 583168
      %2060 = vst.msk [vmem:[#allocation5 + $0x6] sm:$0x3] %vm2059, %v1964
      %2061 = vst.msk [vmem:[#allocation5 + $0x6] sm:$0xfc] %vm2057, %v1966
      %2062 = vst.msk [vmem:[#allocation5 + $0xe] sm:$0x3] %vm2059, %v1968
      %2063 = vst.msk [vmem:[#allocation5 + $0xe] sm:$0xfc] %vm2057, %v1970
      %2064 = vst.msk [vmem:[#allocation5 + $0x16] sm:$0x3] %vm2059, %v1972
      %2065 = vst.msk [vmem:[#allocation5 + $0x16] sm:$0xfc] %vm2057, %v1974
      %2066 = vst.msk [vmem:[#allocation5 + $0x1e] sm:$0x3] %vm2059, %v1976
      %2067 = vst.msk [vmem:[#allocation5 + $0x1e] sm:$0xfc] %vm2057, %v1978
      %2068 = vst.msk [vmem:[#allocation5 + $0x26] sm:$0x3] %vm2059, %v1980
      %2069 = vst.msk [vmem:[#allocation5 + $0x26] sm:$0xfc] %vm2057, %v1982
      %2070 = vst.msk [vmem:[#allocation5 + $0x2e] sm:$0x3] %vm2059, %v1984
      %2071 = vst.msk [vmem:[#allocation5 + $0x2e] sm:$0xfc] %vm2057, %v1986
      %2072 = vst.msk [vmem:[#allocation5 + $0x36] sm:$0x3] %vm2059, %v1988
      %2073 = vst.msk [vmem:[#allocation5 + $0x36] sm:$0xfc] %vm2057, %v1990
      %2074 = vst.msk [vmem:[#allocation5 + $0x3e] sm:$0x3] %vm2059, %v1992
      %2075 = vst.msk [vmem:[#allocation5 + $0x3e] sm:$0xfc] %vm2057, %v1994
      %2076 = vst.msk [vmem:[#allocation5 + $0x46] sm:$0x3] %vm2059, %v1996
      %2077 = vst.msk [vmem:[#allocation5 + $0x46] sm:$0xfc] %vm2057, %v1998
      %2078 = vst.msk [vmem:[#allocation5 + $0x4e] sm:$0x3] %vm2059, %v2000
      %2079 = vst.msk [vmem:[#allocation5 + $0x4e] sm:$0xfc] %vm2057, %v2002
      %2080 = vst.msk [vmem:[#allocation5 + $0x56] sm:$0x3] %vm2059, %v2004
      %2081 = vst.msk [vmem:[#allocation5 + $0x56] sm:$0xfc] %vm2057, %v2006
      %2082 = vst.msk [vmem:[#allocation5 + $0x5e] sm:$0x3] %vm2059, %v2008
      %2083 = vst.msk [vmem:[#allocation5 + $0x5e] sm:$0xfc] %vm2057, %v2010
      %2084 = vst.msk [vmem:[#allocation5 + $0x66] sm:$0x3] %vm2059, %v2012
      %2085 = vst.msk [vmem:[#allocation5 + $0x66] sm:$0xfc] %vm2057, %v2014
      %2086 = vst.msk [vmem:[#allocation5 + $0x6e] sm:$0x3] %vm2059, %v2016
      %2087 = vst.msk [vmem:[#allocation5 + $0x6e] sm:$0xfc] %vm2057, %v2018
      %2088 = vst.msk [vmem:[#allocation5 + $0x76] sm:$0x3] %vm2059, %v2020
      %2089 = vst.msk [vmem:[#allocation5 + $0x76] sm:$0xfc] %vm2057, %v2022
      %2090 = vst.msk [vmem:[#allocation5 + $0x7e] sm:$0x3] %vm2059, %v2024
      %2093 = vrot.lane.b32.xlu0 %v764, 72
      %v2094 = vpop.permute.xlu0 %2093
      %2095 = vrot.lane.b32.xlu0 %v766, 72
      %v2096 = vpop.permute.xlu0 %2095
      %2097 = vrot.lane.b32.xlu0 %v768, 72
      %v2098 = vpop.permute.xlu0 %2097
      %2099 = vrot.lane.b32.xlu0 %v770, 72
      %v2100 = vpop.permute.xlu0 %2099
      %2101 = vrot.lane.b32.xlu0 %v772, 72
      %v2102 = vpop.permute.xlu0 %2101
      %2103 = vrot.lane.b32.xlu0 %v774, 72
      %v2104 = vpop.permute.xlu0 %2103
      %2105 = vrot.lane.b32.xlu0 %v776, 72
      %v2106 = vpop.permute.xlu0 %2105
      %2107 = vrot.lane.b32.xlu0 %v778, 72
      %v2108 = vpop.permute.xlu0 %2107
      %2109 = vrot.lane.b32.xlu0 %v784, 72
      %v2110 = vpop.permute.xlu0 %2109
      %2111 = vrot.lane.b32.xlu0 %v786, 72
      %v2112 = vpop.permute.xlu0 %2111
      %2113 = vrot.lane.b32.xlu0 %v788, 72
      %v2114 = vpop.permute.xlu0 %2113
      %2115 = vrot.lane.b32.xlu0 %v790, 72
      %v2116 = vpop.permute.xlu0 %2115
      %2117 = vrot.lane.b32.xlu0 %v792, 72
      %v2118 = vpop.permute.xlu0 %2117
      %2119 = vrot.lane.b32.xlu0 %v794, 72
      %v2120 = vpop.permute.xlu0 %2119
      %2121 = vrot.lane.b32.xlu0 %v796, 72
      %v2122 = vpop.permute.xlu0 %2121
      %2123 = vrot.lane.b32.xlu0 %v798, 72
      %v2124 = vpop.permute.xlu0 %2123
      %vm2141 = vcmask 622144
      %2142 = vst.msk [vmem:[#allocation5] sm:$0xff] %vm2141, %v2094
      %2143 = vst.msk [vmem:[#allocation5 + $0x8] sm:$0xff] %vm2141, %v2096
      %2144 = vst.msk [vmem:[#allocation5 + $0x10] sm:$0xff] %vm2141, %v2098
      %2145 = vst.msk [vmem:[#allocation5 + $0x18] sm:$0xff] %vm2141, %v2100
      %2146 = vst.msk [vmem:[#allocation5 + $0x20] sm:$0xff] %vm2141, %v2102
      %2147 = vst.msk [vmem:[#allocation5 + $0x28] sm:$0xff] %vm2141, %v2104
      %2148 = vst.msk [vmem:[#allocation5 + $0x30] sm:$0xff] %vm2141, %v2106
      %2149 = vst.msk [vmem:[#allocation5 + $0x38] sm:$0xff] %vm2141, %v2108
      %2150 = vst.msk [vmem:[#allocation5 + $0x40] sm:$0xff] %vm2141, %v2110
      %2151 = vst.msk [vmem:[#allocation5 + $0x48] sm:$0xff] %vm2141, %v2112
      %2152 = vst.msk [vmem:[#allocation5 + $0x50] sm:$0xff] %vm2141, %v2114
      %2153 = vst.msk [vmem:[#allocation5 + $0x58] sm:$0xff] %vm2141, %v2116
      %2154 = vst.msk [vmem:[#allocation5 + $0x60] sm:$0xff] %vm2141, %v2118
      %2155 = vst.msk [vmem:[#allocation5 + $0x68] sm:$0xff] %vm2141, %v2120
      %2156 = vst.msk [vmem:[#allocation5 + $0x70] sm:$0xff] %vm2141, %v2122
      %2157 = vst.msk [vmem:[#allocation5 + $0x78] sm:$0xff] %vm2141, %v2124
      %2160 = vrot.lane.b32.xlu0 %v334, 76
      %v2161 = vpop.permute.xlu0 %2160
      %2162 = vrot.lane.b32.xlu0 %v336, 76
      %v2163 = vpop.permute.xlu0 %2162
      %2164 = vrot.lane.b32.xlu0 %v338, 76
      %v2165 = vpop.permute.xlu0 %2164
      %2166 = vrot.lane.b32.xlu0 %v340, 76
      %v2167 = vpop.permute.xlu0 %2166
      %2168 = vrot.lane.b32.xlu0 %v342, 76
      %v2169 = vpop.permute.xlu0 %2168
      %2170 = vrot.lane.b32.xlu0 %v344, 76
      %v2171 = vpop.permute.xlu0 %2170
      %2172 = vrot.lane.b32.xlu0 %v346, 76
      %v2173 = vpop.permute.xlu0 %2172
      %2174 = vrot.lane.b32.xlu0 %v348, 76
      %v2175 = vpop.permute.xlu0 %2174
      %2176 = vrot.lane.b32.xlu0 %v354, 76
      %v2177 = vpop.permute.xlu0 %2176
      %2178 = vrot.lane.b32.xlu0 %v356, 76
      %v2179 = vpop.permute.xlu0 %2178
      %2180 = vrot.lane.b32.xlu0 %v358, 76
      %v2181 = vpop.permute.xlu0 %2180
      %2182 = vrot.lane.b32.xlu0 %v360, 76
      %v2183 = vpop.permute.xlu0 %2182
      %2184 = vrot.lane.b32.xlu0 %v362, 76
      %v2185 = vpop.permute.xlu0 %2184
      %2186 = vrot.lane.b32.xlu0 %v364, 76
      %v2187 = vpop.permute.xlu0 %2186
      %2188 = vrot.lane.b32.xlu0 %v366, 76
      %v2189 = vpop.permute.xlu0 %2188
      %2190 = vrot.lane.b32.xlu0 %v368, 76
      %v2191 = vpop.permute.xlu0 %2190
      %vm2208 = vcmask 687712
      %2209 = vst.msk [vmem:[#allocation5] sm:$0xff] %vm2208, %v2161
      %2210 = vst.msk [vmem:[#allocation5 + $0x8] sm:$0xff] %vm2208, %v2163
      %2211 = vst.msk [vmem:[#allocation5 + $0x10] sm:$0xff] %vm2208, %v2165
      %2212 = vst.msk [vmem:[#allocation5 + $0x18] sm:$0xff] %vm2208, %v2167
      %2213 = vst.msk [vmem:[#allocation5 + $0x20] sm:$0xff] %vm2208, %v2169
      %2214 = vst.msk [vmem:[#allocation5 + $0x28] sm:$0xff] %vm2208, %v2171
      %2215 = vst.msk [vmem:[#allocation5 + $0x30] sm:$0xff] %vm2208, %v2173
      %2216 = vst.msk [vmem:[#allocation5 + $0x38] sm:$0xff] %vm2208, %v2175
      %2217 = vst.msk [vmem:[#allocation5 + $0x40] sm:$0xff] %vm2208, %v2177
      %2218 = vst.msk [vmem:[#allocation5 + $0x48] sm:$0xff] %vm2208, %v2179
      %2219 = vst.msk [vmem:[#allocation5 + $0x50] sm:$0xff] %vm2208, %v2181
      %2220 = vst.msk [vmem:[#allocation5 + $0x58] sm:$0xff] %vm2208, %v2183
      %2221 = vst.msk [vmem:[#allocation5 + $0x60] sm:$0xff] %vm2208, %v2185
      %2222 = vst.msk [vmem:[#allocation5 + $0x68] sm:$0xff] %vm2208, %v2187
      %2223 = vst.msk [vmem:[#allocation5 + $0x70] sm:$0xff] %vm2208, %v2189
      %2224 = vst.msk [vmem:[#allocation5 + $0x78] sm:$0xff] %vm2208, %v2191
      %2227 = vrot.lane.b32.xlu0 %v764, 84
      %v2228 = vpop.permute.xlu0 %2227
      %2229 = vrot.lane.b32.xlu0 %v765, 84
      %v2230 = vpop.permute.xlu0 %2229
      %2231 = vrot.lane.b32.xlu0 %v766, 84
      %v2232 = vpop.permute.xlu0 %2231
      %2233 = vrot.lane.b32.xlu0 %v767, 84
      %v2234 = vpop.permute.xlu0 %2233
      %2235 = vrot.lane.b32.xlu0 %v768, 84
      %v2236 = vpop.permute.xlu0 %2235
      %2237 = vrot.lane.b32.xlu0 %v769, 84
      %v2238 = vpop.permute.xlu0 %2237
      %2239 = vrot.lane.b32.xlu0 %v770, 84
      %v2240 = vpop.permute.xlu0 %2239
      %2241 = vrot.lane.b32.xlu0 %v771, 84
      %v2242 = vpop.permute.xlu0 %2241
      %2243 = vrot.lane.b32.xlu0 %v772, 84
      %v2244 = vpop.permute.xlu0 %2243
      %2245 = vrot.lane.b32.xlu0 %v773, 84
      %v2246 = vpop.permute.xlu0 %2245
      %2247 = vrot.lane.b32.xlu0 %v774, 84
      %v2248 = vpop.permute.xlu0 %2247
      %2249 = vrot.lane.b32.xlu0 %v775, 84
      %v2250 = vpop.permute.xlu0 %2249
      %2251 = vrot.lane.b32.xlu0 %v776, 84
      %v2252 = vpop.permute.xlu0 %2251
      %2253 = vrot.lane.b32.xlu0 %v777, 84
      %v2254 = vpop.permute.xlu0 %2253
      %2255 = vrot.lane.b32.xlu0 %v778, 84
      %v2256 = vpop.permute.xlu0 %2255
      %2257 = vrot.lane.b32.xlu0 %v779, 84
      %v2258 = vpop.permute.xlu0 %2257
      %2259 = vrot.lane.b32.xlu0 %v784, 84
      %v2260 = vpop.permute.xlu0 %2259
      %2261 = vrot.lane.b32.xlu0 %v785, 84
      %v2262 = vpop.permute.xlu0 %2261
      %2263 = vrot.lane.b32.xlu0 %v786, 84
      %v2264 = vpop.permute.xlu0 %2263
      %2265 = vrot.lane.b32.xlu0 %v787, 84
      %v2266 = vpop.permute.xlu0 %2265
      %2267 = vrot.lane.b32.xlu0 %v788, 84
      %v2268 = vpop.permute.xlu0 %2267
      %2269 = vrot.lane.b32.xlu0 %v789, 84
      %v2270 = vpop.permute.xlu0 %2269
      %2271 = vrot.lane.b32.xlu0 %v790, 84
      %v2272 = vpop.permute.xlu0 %2271
      %2273 = vrot.lane.b32.xlu0 %v791, 84
      %v2274 = vpop.permute.xlu0 %2273
      %2275 = vrot.lane.b32.xlu0 %v792, 84
      %v2276 = vpop.permute.xlu0 %2275
      %2277 = vrot.lane.b32.xlu0 %v793, 84
      %v2278 = vpop.permute.xlu0 %2277
      %2279 = vrot.lane.b32.xlu0 %v794, 84
      %v2280 = vpop.permute.xlu0 %2279
      %2281 = vrot.lane.b32.xlu0 %v795, 84
      %v2282 = vpop.permute.xlu0 %2281
      %2283 = vrot.lane.b32.xlu0 %v796, 84
      %v2284 = vpop.permute.xlu0 %2283
      %2285 = vrot.lane.b32.xlu0 %v797, 84
      %v2286 = vpop.permute.xlu0 %2285
      %2287 = vrot.lane.b32.xlu0 %v798, 84
      %v2288 = vpop.permute.xlu0 %2287
      %2289 = vrot.lane.b32.xlu0 %v799, 84
      %v2290 = vpop.permute.xlu0 %2289
      %vm2323 = vcmask 720545
      %2324 = vst.msk [vmem:[#allocation5 - $0x1] sm:$0xfe] %vm2323, %v2228
      %vm2325 = vcmask 713376
      %2326 = vst.msk [vmem:[#allocation5 + $0x7] sm:$0x1] %vm2325, %v2230
      %2327 = vst.msk [vmem:[#allocation5 + $0x7] sm:$0xfe] %vm2323, %v2232
      %2328 = vst.msk [vmem:[#allocation5 + $0xf] sm:$0x1] %vm2325, %v2234
      %2329 = vst.msk [vmem:[#allocation5 + $0xf] sm:$0xfe] %vm2323, %v2236
      %2330 = vst.msk [vmem:[#allocation5 + $0x17] sm:$0x1] %vm2325, %v2238
      %2331 = vst.msk [vmem:[#allocation5 + $0x17] sm:$0xfe] %vm2323, %v2240
      %2332 = vst.msk [vmem:[#allocation5 + $0x1f] sm:$0x1] %vm2325, %v2242
      %2333 = vst.msk [vmem:[#allocation5 + $0x1f] sm:$0xfe] %vm2323, %v2244
      %2334 = vst.msk [vmem:[#allocation5 + $0x27] sm:$0x1] %vm2325, %v2246
      %2335 = vst.msk [vmem:[#allocation5 + $0x27] sm:$0xfe] %vm2323, %v2248
      %2336 = vst.msk [vmem:[#allocation5 + $0x2f] sm:$0x1] %vm2325, %v2250
      %2337 = vst.msk [vmem:[#allocation5 + $0x2f] sm:$0xfe] %vm2323, %v2252
      %2338 = vst.msk [vmem:[#allocation5 + $0x37] sm:$0x1] %vm2325, %v2254
      %2339 = vst.msk [vmem:[#allocation5 + $0x37] sm:$0xfe] %vm2323, %v2256
      %2340 = vst.msk [vmem:[#allocation5 + $0x3f] sm:$0x1] %vm2325, %v2258
      %2341 = vst.msk [vmem:[#allocation5 + $0x3f] sm:$0xfe] %vm2323, %v2260
      %2342 = vst.msk [vmem:[#allocation5 + $0x47] sm:$0x1] %vm2325, %v2262
      %2343 = vst.msk [vmem:[#allocation5 + $0x47] sm:$0xfe] %vm2323, %v2264
      %2344 = vst.msk [vmem:[#allocation5 + $0x4f] sm:$0x1] %vm2325, %v2266
      %2345 = vst.msk [vmem:[#allocation5 + $0x4f] sm:$0xfe] %vm2323, %v2268
      %2346 = vst.msk [vmem:[#allocation5 + $0x57] sm:$0x1] %vm2325, %v2270
      %2347 = vst.msk [vmem:[#allocation5 + $0x57] sm:$0xfe] %vm2323, %v2272
      %2348 = vst.msk [vmem:[#allocation5 + $0x5f] sm:$0x1] %vm2325, %v2274
      %2349 = vst.msk [vmem:[#allocation5 + $0x5f] sm:$0xfe] %vm2323, %v2276
      %2350 = vst.msk [vmem:[#allocation5 + $0x67] sm:$0x1] %vm2325, %v2278
      %2351 = vst.msk [vmem:[#allocation5 + $0x67] sm:$0xfe] %vm2323, %v2280
      %2352 = vst.msk [vmem:[#allocation5 + $0x6f] sm:$0x1] %vm2325, %v2282
      %2353 = vst.msk [vmem:[#allocation5 + $0x6f] sm:$0xfe] %vm2323, %v2284
      %2354 = vst.msk [vmem:[#allocation5 + $0x77] sm:$0x1] %vm2325, %v2286
      %2355 = vst.msk [vmem:[#allocation5 + $0x77] sm:$0xfe] %vm2323, %v2288
      %2356 = vst.msk [vmem:[#allocation5 + $0x7f] sm:$0x1] %vm2325, %v2290
      %2359 = vrot.lane.b32.xlu0 %v334, 88
      %v2360 = vpop.permute.xlu0 %2359
      %2361 = vrot.lane.b32.xlu0 %v335, 88
      %v2362 = vpop.permute.xlu0 %2361
      %2363 = vrot.lane.b32.xlu0 %v336, 88
      %v2364 = vpop.permute.xlu0 %2363
      %2365 = vrot.lane.b32.xlu0 %v337, 88
      %v2366 = vpop.permute.xlu0 %2365
      %2367 = vrot.lane.b32.xlu0 %v338, 88
      %v2368 = vpop.permute.xlu0 %2367
      %2369 = vrot.lane.b32.xlu0 %v339, 88
      %v2370 = vpop.permute.xlu0 %2369
      %2371 = vrot.lane.b32.xlu0 %v340, 88
      %v2372 = vpop.permute.xlu0 %2371
      %2373 = vrot.lane.b32.xlu0 %v341, 88
      %v2374 = vpop.permute.xlu0 %2373
      %2375 = vrot.lane.b32.xlu0 %v342, 88
      %v2376 = vpop.permute.xlu0 %2375
      %2377 = vrot.lane.b32.xlu0 %v343, 88
      %v2378 = vpop.permute.xlu0 %2377
      %2379 = vrot.lane.b32.xlu0 %v344, 88
      %v2380 = vpop.permute.xlu0 %2379
      %2381 = vrot.lane.b32.xlu0 %v345, 88
      %v2382 = vpop.permute.xlu0 %2381
      %2383 = vrot.lane.b32.xlu0 %v346, 88
      %v2384 = vpop.permute.xlu0 %2383
      %2385 = vrot.lane.b32.xlu0 %v347, 88
      %v2386 = vpop.permute.xlu0 %2385
      %2387 = vrot.lane.b32.xlu0 %v348, 88
      %v2388 = vpop.permute.xlu0 %2387
      %2389 = vrot.lane.b32.xlu0 %v349, 88
      %v2390 = vpop.permute.xlu0 %2389
      %2391 = vrot.lane.b32.xlu0 %v354, 88
      %v2392 = vpop.permute.xlu0 %2391
      %2393 = vrot.lane.b32.xlu0 %v355, 88
      %v2394 = vpop.permute.xlu0 %2393
      %2395 = vrot.lane.b32.xlu0 %v356, 88
      %v2396 = vpop.permute.xlu0 %2395
      %2397 = vrot.lane.b32.xlu0 %v357, 88
      %v2398 = vpop.permute.xlu0 %2397
      %2399 = vrot.lane.b32.xlu0 %v358, 88
      %v2400 = vpop.permute.xlu0 %2399
      %2401 = vrot.lane.b32.xlu0 %v359, 88
      %v2402 = vpop.permute.xlu0 %2401
      %2403 = vrot.lane.b32.xlu0 %v360, 88
      %v2404 = vpop.permute.xlu0 %2403
      %2405 = vrot.lane.b32.xlu0 %v361, 88
      %v2406 = vpop.permute.xlu0 %2405
      %2407 = vrot.lane.b32.xlu0 %v362, 88
      %v2408 = vpop.permute.xlu0 %2407
      %2409 = vrot.lane.b32.xlu0 %v363, 88
      %v2410 = vpop.permute.xlu0 %2409
      %2411 = vrot.lane.b32.xlu0 %v364, 88
      %v2412 = vpop.permute.xlu0 %2411
      %2413 = vrot.lane.b32.xlu0 %v365, 88
      %v2414 = vpop.permute.xlu0 %2413
      %2415 = vrot.lane.b32.xlu0 %v366, 88
      %v2416 = vpop.permute.xlu0 %2415
      %2417 = vrot.lane.b32.xlu0 %v367, 88
      %v2418 = vpop.permute.xlu0 %2417
      %2419 = vrot.lane.b32.xlu0 %v368, 88
      %v2420 = vpop.permute.xlu0 %2419
      %2421 = vrot.lane.b32.xlu0 %v369, 88
      %v2422 = vpop.permute.xlu0 %2421
      %vm2455 = vcmask 786113
      %2456 = vst.msk [vmem:[#allocation5 - $0x1] sm:$0xfe] %vm2455, %v2360
      %vm2457 = vcmask 778944
      %2458 = vst.msk [vmem:[#allocation5 + $0x7] sm:$0x1] %vm2457, %v2362
      %2459 = vst.msk [vmem:[#allocation5 + $0x7] sm:$0xfe] %vm2455, %v2364
      %2460 = vst.msk [vmem:[#allocation5 + $0xf] sm:$0x1] %vm2457, %v2366
      %2461 = vst.msk [vmem:[#allocation5 + $0xf] sm:$0xfe] %vm2455, %v2368
      %2462 = vst.msk [vmem:[#allocation5 + $0x17] sm:$0x1] %vm2457, %v2370
      %2463 = vst.msk [vmem:[#allocation5 + $0x17] sm:$0xfe] %vm2455, %v2372
      %2464 = vst.msk [vmem:[#allocation5 + $0x1f] sm:$0x1] %vm2457, %v2374
      %2465 = vst.msk [vmem:[#allocation5 + $0x1f] sm:$0xfe] %vm2455, %v2376
      %2466 = vst.msk [vmem:[#allocation5 + $0x27] sm:$0x1] %vm2457, %v2378
      %2467 = vst.msk [vmem:[#allocation5 + $0x27] sm:$0xfe] %vm2455, %v2380
      %2468 = vst.msk [vmem:[#allocation5 + $0x2f] sm:$0x1] %vm2457, %v2382
      %2469 = vst.msk [vmem:[#allocation5 + $0x2f] sm:$0xfe] %vm2455, %v2384
      %2470 = vst.msk [vmem:[#allocation5 + $0x37] sm:$0x1] %vm2457, %v2386
      %2471 = vst.msk [vmem:[#allocation5 + $0x37] sm:$0xfe] %vm2455, %v2388
      %2472 = vst.msk [vmem:[#allocation5 + $0x3f] sm:$0x1] %vm2457, %v2390
      %2473 = vst.msk [vmem:[#allocation5 + $0x3f] sm:$0xfe] %vm2455, %v2392
      %2474 = vst.msk [vmem:[#allocation5 + $0x47] sm:$0x1] %vm2457, %v2394
      %2475 = vst.msk [vmem:[#allocation5 + $0x47] sm:$0xfe] %vm2455, %v2396
      %2476 = vst.msk [vmem:[#allocation5 + $0x4f] sm:$0x1] %vm2457, %v2398
      %2477 = vst.msk [vmem:[#allocation5 + $0x4f] sm:$0xfe] %vm2455, %v2400
      %2478 = vst.msk [vmem:[#allocation5 + $0x57] sm:$0x1] %vm2457, %v2402
      %2479 = vst.msk [vmem:[#allocation5 + $0x57] sm:$0xfe] %vm2455, %v2404
      %2480 = vst.msk [vmem:[#allocation5 + $0x5f] sm:$0x1] %vm2457, %v2406
      %2481 = vst.msk [vmem:[#allocation5 + $0x5f] sm:$0xfe] %vm2455, %v2408
      %2482 = vst.msk [vmem:[#allocation5 + $0x67] sm:$0x1] %vm2457, %v2410
      %2483 = vst.msk [vmem:[#allocation5 + $0x67] sm:$0xfe] %vm2455, %v2412
      %2484 = vst.msk [vmem:[#allocation5 + $0x6f] sm:$0x1] %vm2457, %v2414
      %2485 = vst.msk [vmem:[#allocation5 + $0x6f] sm:$0xfe] %vm2455, %v2416
      %2486 = vst.msk [vmem:[#allocation5 + $0x77] sm:$0x1] %vm2457, %v2418
      %2487 = vst.msk [vmem:[#allocation5 + $0x77] sm:$0xfe] %vm2455, %v2420
      %2488 = vst.msk [vmem:[#allocation5 + $0x7f] sm:$0x1] %vm2457, %v2422
      %2489 = vrot.lane.b32.xlu0 %v764, 96
      %v2490 = vpop.permute.xlu0 %2489
      %2491 = vrot.lane.b32.xlu0 %v765, 96
      %v2492 = vpop.permute.xlu0 %2491
      %2493 = vrot.lane.b32.xlu0 %v766, 96
      %v2494 = vpop.permute.xlu0 %2493
      %2495 = vrot.lane.b32.xlu0 %v767, 96
      %v2496 = vpop.permute.xlu0 %2495
      %2497 = vrot.lane.b32.xlu0 %v768, 96
      %v2498 = vpop.permute.xlu0 %2497
      %2499 = vrot.lane.b32.xlu0 %v769, 96
      %v2500 = vpop.permute.xlu0 %2499
      %2501 = vrot.lane.b32.xlu0 %v770, 96
      %v2502 = vpop.permute.xlu0 %2501
      %2503 = vrot.lane.b32.xlu0 %v771, 96
      %v2504 = vpop.permute.xlu0 %2503
      %2505 = vrot.lane.b32.xlu0 %v772, 96
      %v2506 = vpop.permute.xlu0 %2505
      %2507 = vrot.lane.b32.xlu0 %v773, 96
      %v2508 = vpop.permute.xlu0 %2507
      %2509 = vrot.lane.b32.xlu0 %v774, 96
      %v2510 = vpop.permute.xlu0 %2509
      %2511 = vrot.lane.b32.xlu0 %v775, 96
      %v2512 = vpop.permute.xlu0 %2511
      %2513 = vrot.lane.b32.xlu0 %v776, 96
      %v2514 = vpop.permute.xlu0 %2513
      %2515 = vrot.lane.b32.xlu0 %v777, 96
      %v2516 = vpop.permute.xlu0 %2515
      %2517 = vrot.lane.b32.xlu0 %v778, 96
      %v2518 = vpop.permute.xlu0 %2517
      %2519 = vrot.lane.b32.xlu0 %v779, 96
      %v2520 = vpop.permute.xlu0 %2519
      %2521 = vrot.lane.b32.xlu0 %v784, 96
      %v2522 = vpop.permute.xlu0 %2521
      %2523 = vrot.lane.b32.xlu0 %v785, 96
      %v2524 = vpop.permute.xlu0 %2523
      %2525 = vrot.lane.b32.xlu0 %v786, 96
      %v2526 = vpop.permute.xlu0 %2525
      %2527 = vrot.lane.b32.xlu0 %v787, 96
      %v2528 = vpop.permute.xlu0 %2527
      %2529 = vrot.lane.b32.xlu0 %v788, 96
      %v2530 = vpop.permute.xlu0 %2529
      %2531 = vrot.lane.b32.xlu0 %v789, 96
      %v2532 = vpop.permute.xlu0 %2531
      %2533 = vrot.lane.b32.xlu0 %v790, 96
      %v2534 = vpop.permute.xlu0 %2533
      %2535 = vrot.lane.b32.xlu0 %v791, 96
      %v2536 = vpop.permute.xlu0 %2535
      %2537 = vrot.lane.b32.xlu0 %v792, 96
      %v2538 = vpop.permute.xlu0 %2537
      %2539 = vrot.lane.b32.xlu0 %v793, 96
      %v2540 = vpop.permute.xlu0 %2539
      %2541 = vrot.lane.b32.xlu0 %v794, 96
      %v2542 = vpop.permute.xlu0 %2541
      %2543 = vrot.lane.b32.xlu0 %v795, 96
      %v2544 = vpop.permute.xlu0 %2543
      %2545 = vrot.lane.b32.xlu0 %v796, 96
      %v2546 = vpop.permute.xlu0 %2545
      %2547 = vrot.lane.b32.xlu0 %v797, 96
      %v2548 = vpop.permute.xlu0 %2547
      %2549 = vrot.lane.b32.xlu0 %v798, 96
      %v2550 = vpop.permute.xlu0 %2549
      %2551 = vrot.lane.b32.xlu0 %v799, 96
      %v2552 = vpop.permute.xlu0 %2551
      %vm2585 = vcmask 818946
      %2586 = vst.msk [vmem:[#allocation5 - $0x2] sm:$0xfc] %vm2585, %v2490
      %vm2587 = vcmask 812800
      %2588 = vst.msk [vmem:[#allocation5 + $0x6] sm:$0x3] %vm2587, %v2492
      %2589 = vst.msk [vmem:[#allocation5 + $0x6] sm:$0xfc] %vm2585, %v2494
      %2590 = vst.msk [vmem:[#allocation5 + $0xe] sm:$0x3] %vm2587, %v2496
      %2591 = vst.msk [vmem:[#allocation5 + $0xe] sm:$0xfc] %vm2585, %v2498
      %2592 = vst.msk [vmem:[#allocation5 + $0x16] sm:$0x3] %vm2587, %v2500
      %2593 = vst.msk [vmem:[#allocation5 + $0x16] sm:$0xfc] %vm2585, %v2502
      %2594 = vst.msk [vmem:[#allocation5 + $0x1e] sm:$0x3] %vm2587, %v2504
      %2595 = vst.msk [vmem:[#allocation5 + $0x1e] sm:$0xfc] %vm2585, %v2506
      %2596 = vst.msk [vmem:[#allocation5 + $0x26] sm:$0x3] %vm2587, %v2508
      %2597 = vst.msk [vmem:[#allocation5 + $0x26] sm:$0xfc] %vm2585, %v2510
      %2598 = vst.msk [vmem:[#allocation5 + $0x2e] sm:$0x3] %vm2587, %v2512
      %2599 = vst.msk [vmem:[#allocation5 + $0x2e] sm:$0xfc] %vm2585, %v2514
      %2600 = vst.msk [vmem:[#allocation5 + $0x36] sm:$0x3] %vm2587, %v2516
      %2601 = vst.msk [vmem:[#allocation5 + $0x36] sm:$0xfc] %vm2585, %v2518
      %2602 = vst.msk [vmem:[#allocation5 + $0x3e] sm:$0x3] %vm2587, %v2520
      %2603 = vst.msk [vmem:[#allocation5 + $0x3e] sm:$0xfc] %vm2585, %v2522
      %2604 = vst.msk [vmem:[#allocation5 + $0x46] sm:$0x3] %vm2587, %v2524
      %2605 = vst.msk [vmem:[#allocation5 + $0x46] sm:$0xfc] %vm2585, %v2526
      %2606 = vst.msk [vmem:[#allocation5 + $0x4e] sm:$0x3] %vm2587, %v2528
      %2607 = vst.msk [vmem:[#allocation5 + $0x4e] sm:$0xfc] %vm2585, %v2530
      %2608 = vst.msk [vmem:[#allocation5 + $0x56] sm:$0x3] %vm2587, %v2532
      %2609 = vst.msk [vmem:[#allocation5 + $0x56] sm:$0xfc] %vm2585, %v2534
      %2610 = vst.msk [vmem:[#allocation5 + $0x5e] sm:$0x3] %vm2587, %v2536
      %2611 = vst.msk [vmem:[#allocation5 + $0x5e] sm:$0xfc] %vm2585, %v2538
      %2612 = vst.msk [vmem:[#allocation5 + $0x66] sm:$0x3] %vm2587, %v2540
      %2613 = vst.msk [vmem:[#allocation5 + $0x66] sm:$0xfc] %vm2585, %v2542
      %2614 = vst.msk [vmem:[#allocation5 + $0x6e] sm:$0x3] %vm2587, %v2544
      %2615 = vst.msk [vmem:[#allocation5 + $0x6e] sm:$0xfc] %vm2585, %v2546
      %2616 = vst.msk [vmem:[#allocation5 + $0x76] sm:$0x3] %vm2587, %v2548
      %2617 = vst.msk [vmem:[#allocation5 + $0x76] sm:$0xfc] %vm2585, %v2550
      %2618 = vst.msk [vmem:[#allocation5 + $0x7e] sm:$0x3] %vm2587, %v2552
      %2619 = vrot.lane.b32.xlu0 %v334, 100
      %v2620 = vpop.permute.xlu0 %2619
      %2621 = vrot.lane.b32.xlu0 %v335, 100
      %v2622 = vpop.permute.xlu0 %2621
      %2623 = vrot.lane.b32.xlu0 %v336, 100
      %v2624 = vpop.permute.xlu0 %2623
      %2625 = vrot.lane.b32.xlu0 %v337, 100
      %v2626 = vpop.permute.xlu0 %2625
      %2627 = vrot.lane.b32.xlu0 %v338, 100
      %v2628 = vpop.permute.xlu0 %2627
      %2629 = vrot.lane.b32.xlu0 %v339, 100
      %v2630 = vpop.permute.xlu0 %2629
      %2631 = vrot.lane.b32.xlu0 %v340, 100
      %v2632 = vpop.permute.xlu0 %2631
      %2633 = vrot.lane.b32.xlu0 %v341, 100
      %v2634 = vpop.permute.xlu0 %2633
      %2635 = vrot.lane.b32.xlu0 %v342, 100
      %v2636 = vpop.permute.xlu0 %2635
      %2637 = vrot.lane.b32.xlu0 %v343, 100
      %v2638 = vpop.permute.xlu0 %2637
      %2639 = vrot.lane.b32.xlu0 %v344, 100
      %v2640 = vpop.permute.xlu0 %2639
      %2641 = vrot.lane.b32.xlu0 %v345, 100
      %v2642 = vpop.permute.xlu0 %2641
      %2643 = vrot.lane.b32.xlu0 %v346, 100
      %v2644 = vpop.permute.xlu0 %2643
      %2645 = vrot.lane.b32.xlu0 %v347, 100
      %v2646 = vpop.permute.xlu0 %2645
      %2647 = vrot.lane.b32.xlu0 %v348, 100
      %v2648 = vpop.permute.xlu0 %2647
      %2649 = vrot.lane.b32.xlu0 %v349, 100
      %v2650 = vpop.permute.xlu0 %2649
      %2651 = vrot.lane.b32.xlu0 %v354, 100
      %v2652 = vpop.permute.xlu0 %2651
      %2653 = vrot.lane.b32.xlu0 %v355, 100
      %v2654 = vpop.permute.xlu0 %2653
      %2655 = vrot.lane.b32.xlu0 %v356, 100
      %v2656 = vpop.permute.xlu0 %2655
      %2657 = vrot.lane.b32.xlu0 %v357, 100
      %v2658 = vpop.permute.xlu0 %2657
      %2659 = vrot.lane.b32.xlu0 %v358, 100
      %v2660 = vpop.permute.xlu0 %2659
      %2661 = vrot.lane.b32.xlu0 %v359, 100
      %v2662 = vpop.permute.xlu0 %2661
      %2663 = vrot.lane.b32.xlu0 %v360, 100
      %v2664 = vpop.permute.xlu0 %2663
      %2665 = vrot.lane.b32.xlu0 %v361, 100
      %v2666 = vpop.permute.xlu0 %2665
      %2667 = vrot.lane.b32.xlu0 %v362, 100
      %v2668 = vpop.permute.xlu0 %2667
      %2669 = vrot.lane.b32.xlu0 %v363, 100
      %v2670 = vpop.permute.xlu0 %2669
      %2671 = vrot.lane.b32.xlu0 %v364, 100
      %v2672 = vpop.permute.xlu0 %2671
      %2673 = vrot.lane.b32.xlu0 %v365, 100
      %v2674 = vpop.permute.xlu0 %2673
      %2675 = vrot.lane.b32.xlu0 %v366, 100
      %v2676 = vpop.permute.xlu0 %2675
      %2677 = vrot.lane.b32.xlu0 %v367, 100
      %v2678 = vpop.permute.xlu0 %2677
      %2679 = vrot.lane.b32.xlu0 %v368, 100
      %v2680 = vpop.permute.xlu0 %2679
      %2681 = vrot.lane.b32.xlu0 %v369, 100
      %v2682 = vpop.permute.xlu0 %2681
      %vm2715 = vcmask 884514
      %2716 = vst.msk [vmem:[#allocation5 - $0x2] sm:$0xfc] %vm2715, %v2620
      %vm2717 = vcmask 878368
      %2718 = vst.msk [vmem:[#allocation5 + $0x6] sm:$0x3] %vm2717, %v2622
      %2719 = vst.msk [vmem:[#allocation5 + $0x6] sm:$0xfc] %vm2715, %v2624
      %2720 = vst.msk [vmem:[#allocation5 + $0xe] sm:$0x3] %vm2717, %v2626
      %2721 = vst.msk [vmem:[#allocation5 + $0xe] sm:$0xfc] %vm2715, %v2628
      %2722 = vst.msk [vmem:[#allocation5 + $0x16] sm:$0x3] %vm2717, %v2630
      %2723 = vst.msk [vmem:[#allocation5 + $0x16] sm:$0xfc] %vm2715, %v2632
      %2724 = vst.msk [vmem:[#allocation5 + $0x1e] sm:$0x3] %vm2717, %v2634
      %2725 = vst.msk [vmem:[#allocation5 + $0x1e] sm:$0xfc] %vm2715, %v2636
      %2726 = vst.msk [vmem:[#allocation5 + $0x26] sm:$0x3] %vm2717, %v2638
      %2727 = vst.msk [vmem:[#allocation5 + $0x26] sm:$0xfc] %vm2715, %v2640
      %2728 = vst.msk [vmem:[#allocation5 + $0x2e] sm:$0x3] %vm2717, %v2642
      %2729 = vst.msk [vmem:[#allocation5 + $0x2e] sm:$0xfc] %vm2715, %v2644
      %2730 = vst.msk [vmem:[#allocation5 + $0x36] sm:$0x3] %vm2717, %v2646
      %2731 = vst.msk [vmem:[#allocation5 + $0x36] sm:$0xfc] %vm2715, %v2648
      %2732 = vst.msk [vmem:[#allocation5 + $0x3e] sm:$0x3] %vm2717, %v2650
      %2733 = vst.msk [vmem:[#allocation5 + $0x3e] sm:$0xfc] %vm2715, %v2652
      %2734 = vst.msk [vmem:[#allocation5 + $0x46] sm:$0x3] %vm2717, %v2654
      %2735 = vst.msk [vmem:[#allocation5 + $0x46] sm:$0xfc] %vm2715, %v2656
      %2736 = vst.msk [vmem:[#allocation5 + $0x4e] sm:$0x3] %vm2717, %v2658
      %2737 = vst.msk [vmem:[#allocation5 + $0x4e] sm:$0xfc] %vm2715, %v2660
      %2738 = vst.msk [vmem:[#allocation5 + $0x56] sm:$0x3] %vm2717, %v2662
      %2739 = vst.msk [vmem:[#allocation5 + $0x56] sm:$0xfc] %vm2715, %v2664
      %2740 = vst.msk [vmem:[#allocation5 + $0x5e] sm:$0x3] %vm2717, %v2666
      %2741 = vst.msk [vmem:[#allocation5 + $0x5e] sm:$0xfc] %vm2715, %v2668
      %2742 = vst.msk [vmem:[#allocation5 + $0x66] sm:$0x3] %vm2717, %v2670
      %2743 = vst.msk [vmem:[#allocation5 + $0x66] sm:$0xfc] %vm2715, %v2672
      %2744 = vst.msk [vmem:[#allocation5 + $0x6e] sm:$0x3] %vm2717, %v2674
      %2745 = vst.msk [vmem:[#allocation5 + $0x6e] sm:$0xfc] %vm2715, %v2676
      %2746 = vst.msk [vmem:[#allocation5 + $0x76] sm:$0x3] %vm2717, %v2678
      %2747 = vst.msk [vmem:[#allocation5 + $0x76] sm:$0xfc] %vm2715, %v2680
      %2748 = vst.msk [vmem:[#allocation5 + $0x7e] sm:$0x3] %vm2717, %v2682
      %v2749 = vld [vmem:[#allocation5] sm:$0xff]
      %v2750 = vld [vmem:[#allocation5 + $0x8] sm:$0xff]
      %v2751 = vld [vmem:[#allocation5 + $0x10] sm:$0xff]
      %v2752 = vld [vmem:[#allocation5 + $0x18] sm:$0xff]
      %v2753 = vld [vmem:[#allocation5 + $0x20] sm:$0xff]
      %v2754 = vld [vmem:[#allocation5 + $0x28] sm:$0xff]
      %v2755 = vld [vmem:[#allocation5 + $0x30] sm:$0xff]
      %v2756 = vld [vmem:[#allocation5 + $0x38] sm:$0xff]
      %v2757 = vld [vmem:[#allocation5 + $0x40] sm:$0xff]
      %v2758 = vld [vmem:[#allocation5 + $0x48] sm:$0xff]
      %v2759 = vld [vmem:[#allocation5 + $0x50] sm:$0xff]
      %v2760 = vld [vmem:[#allocation5 + $0x58] sm:$0xff]
      %v2761 = vld [vmem:[#allocation5 + $0x60] sm:$0xff]
      %v2762 = vld [vmem:[#allocation5 + $0x68] sm:$0xff]
      %v2763 = vld [vmem:[#allocation5 + $0x70] sm:$0xff]
      %v2764 = vld [vmem:[#allocation5 + $0x78] sm:$0xff]
      %v2765 = vpack.c.bf16 %v2750, %v2749
      %v2766 = vpack.c.bf16 %v2752, %v2751
      %v2767 = vpack.c.bf16 %v2754, %v2753
      %v2768 = vpack.c.bf16 %v2756, %v2755
      %v2769 = vpack.c.bf16 %v2758, %v2757
      %v2770 = vpack.c.bf16 %v2760, %v2759
      %v2771 = vpack.c.bf16 %v2762, %v2761
      %v2772 = vpack.c.bf16 %v2764, %v2763
      %v2773 = vld [vmem:[%s1] sm:$0xf]
      %v2774 = vld [vmem:[%s1 + $0x4] sm:$0xf]
      %v2775 = vld [vmem:[%s1 + $0x8] sm:$0xf]
      %v2776 = vld [vmem:[%s1 + $0xc] sm:$0xf]
      %v2777 = vld [vmem:[%s1 + $0x10] sm:$0xf]
      %v2778 = vld [vmem:[%s1 + $0x14] sm:$0xf]
      %v2779 = vld [vmem:[%s1 + $0x18] sm:$0xf]
      %v2780 = vld [vmem:[%s1 + $0x1c] sm:$0xf]
      %v2781 = vld [vmem:[%s1 + $0x20] sm:$0xf]
      %v2782 = vld [vmem:[%s1 + $0x24] sm:$0xf]
      %v2783 = vld [vmem:[%s1 + $0x28] sm:$0xf]
      %v2784 = vld [vmem:[%s1 + $0x2c] sm:$0xf]
      %v2785 = vld [vmem:[%s1 + $0x30] sm:$0xf]
      %v2786 = vld [vmem:[%s1 + $0x34] sm:$0x3]
      %v2787 = vld [vmem:[%s2] sm:$0x1]
      %v2789 = vlaneseq
      %v2790 = vshrl.u32 %v2789, 7
      %v2791 = vsub.s32 0, %v2790
      %v2792 = vrot.slane %v2787, %v2791
      %v2808 = vunpack.c.l.b16 %v2773
      %v2809 = vunpack.c.l.b16 %v2774
      %v2810 = vunpack.c.l.b16 %v2775
      %v2811 = vunpack.c.l.b16 %v2776
      %v2812 = vunpack.c.l.b16 %v2777
      %v2813 = vunpack.c.l.b16 %v2778
      %v2814 = vunpack.c.l.b16 %v2779
      %v2815 = vunpack.c.l.b16 %v2780
      %v2816 = vunpack.c.l.b16 %v2781
      %v2817 = vunpack.c.l.b16 %v2782
      %v2818 = vunpack.c.l.b16 %v2783
      %v2819 = vunpack.c.l.b16 %v2784
      %v2820 = vunpack.c.l.b16 %v2785
      %v2821 = vunpack.c.l.b16 %v2786
      %v2822 = vpack.c.b16 %v2809, %v2808
      %v2823 = vpack.c.b16 %v2811, %v2810
      %v2824 = vpack.c.b16 %v2813, %v2812
      %v2825 = vpack.c.b16 %v2815, %v2814
      %v2826 = vpack.c.b16 %v2817, %v2816
      %v2827 = vpack.c.b16 %v2819, %v2818
      %v2828 = vpack.c.b16 %v2821, %v2820
      %vm2835 = vcmask 883712
      %v2837 = vsel %vm2835, %v2765, 0
      %v2840 = vsel %vm2835, %v2766, 0
      %v2843 = vsel %vm2835, %v2767, 0
      %v2846 = vsel %vm2835, %v2768, 0
      %v2849 = vsel %vm2835, %v2769, 0
      %v2852 = vsel %vm2835, %v2770, 0
      %v2855 = vsel %vm2835, %v2771, 0
      %v2858 = vsel %vm2835, %v2772, 0
      %vm2860 = vcmask 1045504
      %v2862 = vsel %vm2860, %v2828, 0
      %2864 = vmatprep.subr.bf16.mxu0 0
      %2865 = vmatpush1.bf16.msra.mxu0 %v2822
      %2866 = vmatprep.subr.bf16.mxu0 0
      %2867 = vmatpush1.bf16.msra.mxu0 %v2823
      %2868 = vmatprep.subr.bf16.mxu0 0
      %2869 = vmatpush1.bf16.msra.mxu0 %v2824
      %2870 = vmatprep.subr.bf16.mxu0 0
      %2871 = vmatpush1.bf16.msra.mxu0 %v2825
      %2872 = vmatprep.subr.bf16.mxu0 0
      %2873 = vmatpush1.bf16.msra.mxu0 %v2826
      %2874 = vmatprep.subr.bf16.mxu0 0
      %2875 = vmatpush1.bf16.msra.mxu0 %v2827
      %2876 = vmatprep.subr.bf16.mxu0 0
      %2877 = vmatpush1.bf16.msra.mxu0 %v2862
      %2878 = vmatprep.subr.bf16.mxu0 0
      %2879 = vmatpush1.bf16.msra.mxu0 0
      %2880 = vmatprep.subr.bf16.mxu0 0
      %2881 = vmatpush1.bf16.msra.mxu0 0
      %2882 = vmatprep.subr.bf16.mxu0 0
      %2883 = vmatpush1.bf16.msra.mxu0 0
      %2884 = vmatprep.subr.bf16.mxu0 0
      %2885 = vmatpush1.bf16.msra.mxu0 0
      %2886 = vmatprep.subr.bf16.mxu0 0
      %2887 = vmatpush1.bf16.msra.mxu0 0
      %2888 = vmatprep.subr.bf16.mxu0 0
      %2889 = vmatpush1.bf16.msra.mxu0 0
      %2890 = vmatprep.subr.bf16.mxu0 0
      %2891 = vmatpush1.bf16.msra.mxu0 0
      %2892 = vmatprep.subr.bf16.mxu0 0
      %2893 = vmatpush1.bf16.msra.mxu0 0
      %2894 = vmatprep.subr.bf16.mxu0 0
      %2895 = vmatpush1.bf16.msra.mxu0 0
      %2896 = vmatprep.mubr.bf16.mxu0 0
      %2897 = vmatmul.mubr.bf16.gmra.mrb[0].mxu0 %v2837
      %v2898 = vpop.f32.mrb[0].mxu0
      %v2899 = vadd.f32 %v2792, %v2898
      %v2900 = vpop.f32.mrb[0].mxu0
      %v2901 = vpop.f32.mrb[0].mxu0
      %v2902 = vadd.f32 %v2792, %v2901
      %v2903 = vpop.f32.mrb[0].mxu0
      %2904 = vmatprep.mubr.bf16.mxu0 0
      %2905 = vmatmul.mubr.bf16.gmra.mrb[0].mxu0 %v2840
      %v2906 = vpop.f32.mrb[0].mxu0
      %v2907 = vadd.f32 %v2792, %v2906
      %v2908 = vpop.f32.mrb[0].mxu0
      %v2909 = vpop.f32.mrb[0].mxu0
      %v2910 = vadd.f32 %v2792, %v2909
      %v2911 = vpop.f32.mrb[0].mxu0
      %2912 = vmatprep.mubr.bf16.mxu0 0
      %2913 = vmatmul.mubr.bf16.gmra.mrb[0].mxu0 %v2843
      %v2914 = vpop.f32.mrb[0].mxu0
      %v2915 = vadd.f32 %v2792, %v2914
      %v2916 = vpop.f32.mrb[0].mxu0
      %v2917 = vpop.f32.mrb[0].mxu0
      %v2918 = vadd.f32 %v2792, %v2917
      %v2919 = vpop.f32.mrb[0].mxu0
      %2920 = vmatprep.mubr.bf16.mxu0 0
      %2921 = vmatmul.mubr.bf16.gmra.mrb[0].mxu0 %v2846
      %v2922 = vpop.f32.mrb[0].mxu0
      %v2923 = vadd.f32 %v2792, %v2922
      %v2924 = vpop.f32.mrb[0].mxu0
      %v2925 = vpop.f32.mrb[0].mxu0
      %v2926 = vadd.f32 %v2792, %v2925
      %v2927 = vpop.f32.mrb[0].mxu0
      %2928 = vmatprep.mubr.bf16.mxu0 0
      %2929 = vmatmul.mubr.bf16.gmra.mrb[0].mxu0 %v2849
      %v2930 = vpop.f32.mrb[0].mxu0
      %v2931 = vadd.f32 %v2792, %v2930
      %v2932 = vpop.f32.mrb[0].mxu0
      %v2933 = vpop.f32.mrb[0].mxu0
      %v2934 = vadd.f32 %v2792, %v2933
      %v2935 = vpop.f32.mrb[0].mxu0
      %2936 = vmatprep.mubr.bf16.mxu0 0
      %2937 = vmatmul.mubr.bf16.gmra.mrb[0].mxu0 %v2852
      %v2938 = vpop.f32.mrb[0].mxu0
      %v2939 = vadd.f32 %v2792, %v2938
      %v2940 = vpop.f32.mrb[0].mxu0
      %v2941 = vpop.f32.mrb[0].mxu0
      %v2942 = vadd.f32 %v2792, %v2941
      %v2943 = vpop.f32.mrb[0].mxu0
      %2944 = vmatprep.mubr.bf16.mxu0 0
      %2945 = vmatmul.mubr.bf16.gmra.mrb[0].mxu0 %v2855
      %v2946 = vpop.f32.mrb[0].mxu0
      %v2947 = vadd.f32 %v2792, %v2946
      %v2948 = vpop.f32.mrb[0].mxu0
      %v2949 = vpop.f32.mrb[0].mxu0
      %v2950 = vadd.f32 %v2792, %v2949
      %v2951 = vpop.f32.mrb[0].mxu0
      %2952 = vmatprep.mubr.bf16.mxu0 0
      %2953 = vmatmul.mubr.bf16.gmra.mrb[0].mxu0 %v2858
      %v2954 = vpop.f32.mrb[0].mxu0
      %v2955 = vadd.f32 %v2792, %v2954
      %v2956 = vpop.f32.mrb[0].mxu0
      %v2957 = vpop.f32.mrb[0].mxu0
      %v2958 = vadd.f32 %v2792, %v2957
      %v2959 = vpop.f32.mrb[0].mxu0
      %2960 = vdwg.mxu0
      %v2961 = vxor.u32 %v2899, 2147483648
      %v2962 = vxor.u32 %v2902, 2147483648
      %v2963 = vxor.u32 %v2907, 2147483648
      %v2964 = vxor.u32 %v2910, 2147483648
      %v2965 = vxor.u32 %v2915, 2147483648
      %v2966 = vxor.u32 %v2918, 2147483648
      %v2967 = vxor.u32 %v2923, 2147483648
      %v2968 = vxor.u32 %v2926, 2147483648
      %v2969 = vxor.u32 %v2931, 2147483648
      %v2970 = vxor.u32 %v2934, 2147483648
      %v2971 = vxor.u32 %v2939, 2147483648
      %v2972 = vxor.u32 %v2942, 2147483648
      %v2973 = vxor.u32 %v2947, 2147483648
      %v2974 = vxor.u32 %v2950, 2147483648
      %v2975 = vxor.u32 %v2955, 2147483648
      %v2976 = vxor.u32 %v2958, 2147483648
      %v2977 = vmul.f32 %v2961, 1.442695
      %v2978 = vpow.pop %v2977
      %v2979 = vmul.f32 %v2962, 1.442695
      %v2980 = vpow.pop %v2979
      %v2981 = vmul.f32 %v2963, 1.442695
      %v2982 = vpow.pop %v2981
      %v2983 = vmul.f32 %v2964, 1.442695
      %v2984 = vpow.pop %v2983
      %v2985 = vmul.f32 %v2965, 1.442695
      %v2986 = vpow.pop %v2985
      %v2987 = vmul.f32 %v2966, 1.442695
      %v2988 = vpow.pop %v2987
      %v2989 = vmul.f32 %v2967, 1.442695
      %v2990 = vpow.pop %v2989
      %v2991 = vmul.f32 %v2968, 1.442695
      %v2992 = vpow.pop %v2991
      %v2993 = vmul.f32 %v2969, 1.442695
      %v2994 = vpow.pop %v2993
      %v2995 = vmul.f32 %v2970, 1.442695
      %v2996 = vpow.pop %v2995
      %v2997 = vmul.f32 %v2971, 1.442695
      %v2998 = vpow.pop %v2997
      %v2999 = vmul.f32 %v2972, 1.442695
      %v3000 = vpow.pop %v2999
      %v3001 = vmul.f32 %v2973, 1.442695
      %v3002 = vpow.pop %v3001
      %v3003 = vmul.f32 %v2974, 1.442695
      %v3004 = vpow.pop %v3003
      %v3005 = vmul.f32 %v2975, 1.442695
      %v3006 = vpow.pop %v3005
      %v3007 = vmul.f32 %v2976, 1.442695
      %v3008 = vpow.pop %v3007
      %v3009 = vadd.f32 %v2978, 1.0
      %v3010 = vadd.f32 %v2980, 1.0
      %v3011 = vadd.f32 %v2982, 1.0
      %v3012 = vadd.f32 %v2984, 1.0
      %v3013 = vadd.f32 %v2986, 1.0
      %v3014 = vadd.f32 %v2988, 1.0
      %v3015 = vadd.f32 %v2990, 1.0
      %v3016 = vadd.f32 %v2992, 1.0
      %v3017 = vadd.f32 %v2994, 1.0
      %v3018 = vadd.f32 %v2996, 1.0
      %v3019 = vadd.f32 %v2998, 1.0
      %v3020 = vadd.f32 %v3000, 1.0
      %v3021 = vadd.f32 %v3002, 1.0
      %v3022 = vadd.f32 %v3004, 1.0
      %v3023 = vadd.f32 %v3006, 1.0
      %v3024 = vadd.f32 %v3008, 1.0
      %v3025 = vrcp.pop %v3009
      %v3026 = vmul.f32 1.0, %v3025
      %v3027 = vrcp.pop %v3010
      %v3028 = vmul.f32 1.0, %v3027
      %v3029 = vrcp.pop %v3011
      %v3030 = vmul.f32 1.0, %v3029
      %v3031 = vrcp.pop %v3012
      %v3032 = vmul.f32 1.0, %v3031
      %v3033 = vrcp.pop %v3013
      %v3034 = vmul.f32 1.0, %v3033
      %v3035 = vrcp.pop %v3014
      %v3036 = vmul.f32 1.0, %v3035
      %v3037 = vrcp.pop %v3015
      %v3038 = vmul.f32 1.0, %v3037
      %v3039 = vrcp.pop %v3016
      %v3040 = vmul.f32 1.0, %v3039
      %v3041 = vrcp.pop %v3017
      %v3042 = vmul.f32 1.0, %v3041
      %v3043 = vrcp.pop %v3018
      %v3044 = vmul.f32 1.0, %v3043
      %v3045 = vrcp.pop %v3019
      %v3046 = vmul.f32 1.0, %v3045
      %v3047 = vrcp.pop %v3020
      %v3048 = vmul.f32 1.0, %v3047
      %v3049 = vrcp.pop %v3021
      %v3050 = vmul.f32 1.0, %v3049
      %v3051 = vrcp.pop %v3022
      %v3052 = vmul.f32 1.0, %v3051
      %v3053 = vrcp.pop %v3023
      %v3054 = vmul.f32 1.0, %v3053
      %v3055 = vrcp.pop %v3024
      %v3056 = vmul.f32 1.0, %v3055
      %v3057 = vtanh.pop %v2899
      %v3058 = vtanh.pop %v2902
      %v3059 = vtanh.pop %v2907
      %v3060 = vtanh.pop %v2910
      %v3061 = vtanh.pop %v2915
      %v3062 = vtanh.pop %v2918
      %v3063 = vtanh.pop %v2923
      %v3064 = vtanh.pop %v2926
      %v3065 = vtanh.pop %v2931
      %v3066 = vtanh.pop %v2934
      %v3067 = vtanh.pop %v2939
      %v3068 = vtanh.pop %v2942
      %v3069 = vtanh.pop %v2947
      %v3070 = vtanh.pop %v2950
      %v3071 = vtanh.pop %v2955
      %v3072 = vtanh.pop %v2958
      %v3073 = vld [vmem:[#allocation4] sm:$0xff]
      %v3074 = vld [vmem:[#allocation4 + $0x8] sm:$0xff]
      %v3075 = vld [vmem:[#allocation4 + $0x10] sm:$0xff]
      %v3076 = vld [vmem:[#allocation4 + $0x18] sm:$0xff]
      %v3077 = vld [vmem:[#allocation4 + $0x20] sm:$0xff]
      %v3078 = vld [vmem:[#allocation4 + $0x28] sm:$0xff]
      %v3079 = vld [vmem:[#allocation4 + $0x30] sm:$0xff]
      %v3080 = vld [vmem:[#allocation4 + $0x38] sm:$0xff]
      %v3081 = vld [vmem:[#allocation4 + $0x40] sm:$0xff]
      %v3082 = vld [vmem:[#allocation4 + $0x48] sm:$0xff]
      %v3083 = vld [vmem:[#allocation4 + $0x50] sm:$0xff]
      %v3084 = vld [vmem:[#allocation4 + $0x58] sm:$0xff]
      %v3085 = vld [vmem:[#allocation4 + $0x60] sm:$0xff]
      %v3086 = vld [vmem:[#allocation4 + $0x68] sm:$0xff]
      %v3087 = vld [vmem:[#allocation4 + $0x70] sm:$0xff]
      %v3088 = vld [vmem:[#allocation4 + $0x78] sm:$0xff]
      %3105 = vrot.lane.b32.xlu0 %v3073, 8
      %v3106 = vpop.permute.xlu0 %3105
      %3107 = vrot.lane.b32.xlu0 %v3074, 8
      %v3108 = vpop.permute.xlu0 %3107
      %3109 = vrot.lane.b32.xlu0 %v3075, 8
      %v3110 = vpop.permute.xlu0 %3109
      %3111 = vrot.lane.b32.xlu0 %v3076, 8
      %v3112 = vpop.permute.xlu0 %3111
      %3113 = vrot.lane.b32.xlu0 %v3077, 8
      %v3114 = vpop.permute.xlu0 %3113
      %3115 = vrot.lane.b32.xlu0 %v3078, 8
      %v3116 = vpop.permute.xlu0 %3115
      %3117 = vrot.lane.b32.xlu0 %v3079, 8
      %v3118 = vpop.permute.xlu0 %3117
      %3119 = vrot.lane.b32.xlu0 %v3080, 8
      %v3120 = vpop.permute.xlu0 %3119
      %3121 = vrot.lane.b32.xlu0 %v3081, 8
      %v3122 = vpop.permute.xlu0 %3121
      %3123 = vrot.lane.b32.xlu0 %v3082, 8
      %v3124 = vpop.permute.xlu0 %3123
      %3125 = vrot.lane.b32.xlu0 %v3083, 8
      %v3126 = vpop.permute.xlu0 %3125
      %3127 = vrot.lane.b32.xlu0 %v3084, 8
      %v3128 = vpop.permute.xlu0 %3127
      %3129 = vrot.lane.b32.xlu0 %v3085, 8
      %v3130 = vpop.permute.xlu0 %3129
      %3131 = vrot.lane.b32.xlu0 %v3086, 8
      %v3132 = vpop.permute.xlu0 %3131
      %3133 = vrot.lane.b32.xlu0 %v3087, 8
      %v3134 = vpop.permute.xlu0 %3133
      %3135 = vrot.lane.b32.xlu0 %v3088, 8
      %v3136 = vpop.permute.xlu0 %3135
      %v3153 = vmul.f32 %v3026, %v3106
      %v3154 = vmul.f32 %v3028, %v3108
      %v3155 = vmul.f32 %v3030, %v3110
      %v3156 = vmul.f32 %v3032, %v3112
      %v3157 = vmul.f32 %v3034, %v3114
      %v3158 = vmul.f32 %v3036, %v3116
      %v3159 = vmul.f32 %v3038, %v3118
      %v3160 = vmul.f32 %v3040, %v3120
      %v3161 = vmul.f32 %v3042, %v3122
      %v3162 = vmul.f32 %v3044, %v3124
      %v3163 = vmul.f32 %v3046, %v3126
      %v3164 = vmul.f32 %v3048, %v3128
      %v3165 = vmul.f32 %v3050, %v3130
      %v3166 = vmul.f32 %v3052, %v3132
      %v3167 = vmul.f32 %v3054, %v3134
      %v3168 = vmul.f32 %v3056, %v3136
      %3185 = vrot.lane.b32.xlu0 %v3057, 112
      %v3186 = vpop.permute.xlu0 %3185
      %3187 = vrot.lane.b32.xlu0 %v3058, 112
      %v3188 = vpop.permute.xlu0 %3187
      %3189 = vrot.lane.b32.xlu0 %v3059, 112
      %v3190 = vpop.permute.xlu0 %3189
      %3191 = vrot.lane.b32.xlu0 %v3060, 112
      %v3192 = vpop.permute.xlu0 %3191
      %3193 = vrot.lane.b32.xlu0 %v3061, 112
      %v3194 = vpop.permute.xlu0 %3193
      %3195 = vrot.lane.b32.xlu0 %v3062, 112
      %v3196 = vpop.permute.xlu0 %3195
      %3197 = vrot.lane.b32.xlu0 %v3063, 112
      %v3198 = vpop.permute.xlu0 %3197
      %3199 = vrot.lane.b32.xlu0 %v3064, 112
      %v3200 = vpop.permute.xlu0 %3199
      %3201 = vrot.lane.b32.xlu0 %v3065, 112
      %v3202 = vpop.permute.xlu0 %3201
      %3203 = vrot.lane.b32.xlu0 %v3066, 112
      %v3204 = vpop.permute.xlu0 %3203
      %3205 = vrot.lane.b32.xlu0 %v3067, 112
      %v3206 = vpop.permute.xlu0 %3205
      %3207 = vrot.lane.b32.xlu0 %v3068, 112
      %v3208 = vpop.permute.xlu0 %3207
      %3209 = vrot.lane.b32.xlu0 %v3069, 112
      %v3210 = vpop.permute.xlu0 %3209
      %3211 = vrot.lane.b32.xlu0 %v3070, 112
      %v3212 = vpop.permute.xlu0 %3211
      %3213 = vrot.lane.b32.xlu0 %v3071, 112
      %v3214 = vpop.permute.xlu0 %3213
      %3215 = vrot.lane.b32.xlu0 %v3072, 112
      %v3216 = vpop.permute.xlu0 %3215
      %v3233 = vmul.f32 %v3026, %v3186
      %v3234 = vmul.f32 %v3028, %v3188
      %v3235 = vmul.f32 %v3030, %v3190
      %v3236 = vmul.f32 %v3032, %v3192
      %v3237 = vmul.f32 %v3034, %v3194
      %v3238 = vmul.f32 %v3036, %v3196
      %v3239 = vmul.f32 %v3038, %v3198
      %v3240 = vmul.f32 %v3040, %v3200
      %v3241 = vmul.f32 %v3042, %v3202
      %v3242 = vmul.f32 %v3044, %v3204
      %v3243 = vmul.f32 %v3046, %v3206
      %v3244 = vmul.f32 %v3048, %v3208
      %v3245 = vmul.f32 %v3050, %v3210
      %v3246 = vmul.f32 %v3052, %v3212
      %v3247 = vmul.f32 %v3054, %v3214
      %v3248 = vmul.f32 %v3056, %v3216
      %3265 = vrot.lane.b32.xlu0 %v3233, 8
      %v3266 = vpop.permute.xlu0 %3265
      %3267 = vrot.lane.b32.xlu0 %v3234, 8
      %v3268 = vpop.permute.xlu0 %3267
      %3269 = vrot.lane.b32.xlu0 %v3235, 8
      %v3270 = vpop.permute.xlu0 %3269
      %3271 = vrot.lane.b32.xlu0 %v3236, 8
      %v3272 = vpop.permute.xlu0 %3271
      %3273 = vrot.lane.b32.xlu0 %v3237, 8
      %v3274 = vpop.permute.xlu0 %3273
      %3275 = vrot.lane.b32.xlu0 %v3238, 8
      %v3276 = vpop.permute.xlu0 %3275
      %3277 = vrot.lane.b32.xlu0 %v3239, 8
      %v3278 = vpop.permute.xlu0 %3277
      %3279 = vrot.lane.b32.xlu0 %v3240, 8
      %v3280 = vpop.permute.xlu0 %3279
      %3281 = vrot.lane.b32.xlu0 %v3241, 8
      %v3282 = vpop.permute.xlu0 %3281
      %3283 = vrot.lane.b32.xlu0 %v3242, 8
      %v3284 = vpop.permute.xlu0 %3283
      %3285 = vrot.lane.b32.xlu0 %v3243, 8
      %v3286 = vpop.permute.xlu0 %3285
      %3287 = vrot.lane.b32.xlu0 %v3244, 8
      %v3288 = vpop.permute.xlu0 %3287
      %3289 = vrot.lane.b32.xlu0 %v3245, 8
      %v3290 = vpop.permute.xlu0 %3289
      %3291 = vrot.lane.b32.xlu0 %v3246, 8
      %v3292 = vpop.permute.xlu0 %3291
      %3293 = vrot.lane.b32.xlu0 %v3247, 8
      %v3294 = vpop.permute.xlu0 %3293
      %3295 = vrot.lane.b32.xlu0 %v3248, 8
      %v3296 = vpop.permute.xlu0 %3295
      %v3313 = vadd.f32 %v3153, %v3266
      %v3314 = vadd.f32 %v3154, %v3268
      %v3315 = vadd.f32 %v3155, %v3270
      %v3316 = vadd.f32 %v3156, %v3272
      %v3317 = vadd.f32 %v3157, %v3274
      %v3318 = vadd.f32 %v3158, %v3276
      %v3319 = vadd.f32 %v3159, %v3278
      %v3320 = vadd.f32 %v3160, %v3280
      %v3321 = vadd.f32 %v3161, %v3282
      %v3322 = vadd.f32 %v3162, %v3284
      %v3323 = vadd.f32 %v3163, %v3286
      %v3324 = vadd.f32 %v3164, %v3288
      %v3325 = vadd.f32 %v3165, %v3290
      %v3326 = vadd.f32 %v3166, %v3292
      %v3327 = vadd.f32 %v3167, %v3294
      %v3328 = vadd.f32 %v3168, %v3296
      %v3329 = vtanh.pop %v3313
      %v3330 = vtanh.pop %v3314
      %v3331 = vtanh.pop %v3315
      %v3332 = vtanh.pop %v3316
      %v3333 = vtanh.pop %v3317
      %v3334 = vtanh.pop %v3318
      %v3335 = vtanh.pop %v3319
      %v3336 = vtanh.pop %v3320
      %v3337 = vtanh.pop %v3321
      %v3338 = vtanh.pop %v3322
      %v3339 = vtanh.pop %v3323
      %v3340 = vtanh.pop %v3324
      %v3341 = vtanh.pop %v3325
      %v3342 = vtanh.pop %v3326
      %v3343 = vtanh.pop %v3327
      %v3344 = vtanh.pop %v3328
      %3361 = vrot.lane.b32.xlu0 %v3329, 16
      %v3362 = vpop.permute.xlu0 %3361
      %3363 = vrot.lane.b32.xlu0 %v3330, 16
      %v3364 = vpop.permute.xlu0 %3363
      %3365 = vrot.lane.b32.xlu0 %v3331, 16
      %v3366 = vpop.permute.xlu0 %3365
      %3367 = vrot.lane.b32.xlu0 %v3332, 16
      %v3368 = vpop.permute.xlu0 %3367
      %3369 = vrot.lane.b32.xlu0 %v3333, 16
      %v3370 = vpop.permute.xlu0 %3369
      %3371 = vrot.lane.b32.xlu0 %v3334, 16
      %v3372 = vpop.permute.xlu0 %3371
      %3373 = vrot.lane.b32.xlu0 %v3335, 16
      %v3374 = vpop.permute.xlu0 %3373
      %3375 = vrot.lane.b32.xlu0 %v3336, 16
      %v3376 = vpop.permute.xlu0 %3375
      %3377 = vrot.lane.b32.xlu0 %v3337, 16
      %v3378 = vpop.permute.xlu0 %3377
      %3379 = vrot.lane.b32.xlu0 %v3338, 16
      %v3380 = vpop.permute.xlu0 %3379
      %3381 = vrot.lane.b32.xlu0 %v3339, 16
      %v3382 = vpop.permute.xlu0 %3381
      %3383 = vrot.lane.b32.xlu0 %v3340, 16
      %v3384 = vpop.permute.xlu0 %3383
      %3385 = vrot.lane.b32.xlu0 %v3341, 16
      %v3386 = vpop.permute.xlu0 %3385
      %3387 = vrot.lane.b32.xlu0 %v3342, 16
      %v3388 = vpop.permute.xlu0 %3387
      %3389 = vrot.lane.b32.xlu0 %v3343, 16
      %v3390 = vpop.permute.xlu0 %3389
      %3391 = vrot.lane.b32.xlu0 %v3344, 16
      %v3392 = vpop.permute.xlu0 %3391
      %v3409 = vmul.f32 %v3026, %v3362
      %v3410 = vmul.f32 %v3028, %v3364
      %v3411 = vmul.f32 %v3030, %v3366
      %v3412 = vmul.f32 %v3032, %v3368
      %v3413 = vmul.f32 %v3034, %v3370
      %v3414 = vmul.f32 %v3036, %v3372
      %v3415 = vmul.f32 %v3038, %v3374
      %v3416 = vmul.f32 %v3040, %v3376
      %v3417 = vmul.f32 %v3042, %v3378
      %v3418 = vmul.f32 %v3044, %v3380
      %v3419 = vmul.f32 %v3046, %v3382
      %v3420 = vmul.f32 %v3048, %v3384
      %v3421 = vmul.f32 %v3050, %v3386
      %v3422 = vmul.f32 %v3052, %v3388
      %v3423 = vmul.f32 %v3054, %v3390
      %v3424 = vmul.f32 %v3056, %v3392
      %3441 = vrot.lane.b32.xlu0 %v3313, 120
      %v3442 = vpop.permute.xlu0 %3441
      %3443 = vrot.lane.b32.xlu0 %v3314, 120
      %v3444 = vpop.permute.xlu0 %3443
      %3445 = vrot.lane.b32.xlu0 %v3315, 120
      %v3446 = vpop.permute.xlu0 %3445
      %3447 = vrot.lane.b32.xlu0 %v3316, 120
      %v3448 = vpop.permute.xlu0 %3447
      %3449 = vrot.lane.b32.xlu0 %v3317, 120
      %v3450 = vpop.permute.xlu0 %3449
      %3451 = vrot.lane.b32.xlu0 %v3318, 120
      %v3452 = vpop.permute.xlu0 %3451
      %3453 = vrot.lane.b32.xlu0 %v3319, 120
      %v3454 = vpop.permute.xlu0 %3453
      %3455 = vrot.lane.b32.xlu0 %v3320, 120
      %v3456 = vpop.permute.xlu0 %3455
      %3457 = vrot.lane.b32.xlu0 %v3321, 120
      %v3458 = vpop.permute.xlu0 %3457
      %3459 = vrot.lane.b32.xlu0 %v3322, 120
      %v3460 = vpop.permute.xlu0 %3459
      %3461 = vrot.lane.b32.xlu0 %v3323, 120
      %v3462 = vpop.permute.xlu0 %3461
      %3463 = vrot.lane.b32.xlu0 %v3324, 120
      %v3464 = vpop.permute.xlu0 %3463
      %3465 = vrot.lane.b32.xlu0 %v3325, 120
      %v3466 = vpop.permute.xlu0 %3465
      %3467 = vrot.lane.b32.xlu0 %v3326, 120
      %v3468 = vpop.permute.xlu0 %3467
      %3469 = vrot.lane.b32.xlu0 %v3327, 120
      %v3470 = vpop.permute.xlu0 %3469
      %3471 = vrot.lane.b32.xlu0 %v3328, 120
      %v3472 = vpop.permute.xlu0 %3471
      %3489 = vst.msk [vmem:[#allocation4] sm:$0xff] %vm459, %v3442
      %3490 = vst.msk [vmem:[#allocation4 + $0x8] sm:$0xff] %vm459, %v3444
      %3491 = vst.msk [vmem:[#allocation4 + $0x10] sm:$0xff] %vm459, %v3446
      %3492 = vst.msk [vmem:[#allocation4 + $0x18] sm:$0xff] %vm459, %v3448
      %3493 = vst.msk [vmem:[#allocation4 + $0x20] sm:$0xff] %vm459, %v3450
      %3494 = vst.msk [vmem:[#allocation4 + $0x28] sm:$0xff] %vm459, %v3452
      %3495 = vst.msk [vmem:[#allocation4 + $0x30] sm:$0xff] %vm459, %v3454
      %3496 = vst.msk [vmem:[#allocation4 + $0x38] sm:$0xff] %vm459, %v3456
      %3497 = vst.msk [vmem:[#allocation4 + $0x40] sm:$0xff] %vm459, %v3458
      %3498 = vst.msk [vmem:[#allocation4 + $0x48] sm:$0xff] %vm459, %v3460
      %3499 = vst.msk [vmem:[#allocation4 + $0x50] sm:$0xff] %vm459, %v3462
      %3500 = vst.msk [vmem:[#allocation4 + $0x58] sm:$0xff] %vm459, %v3464
      %3501 = vst.msk [vmem:[#allocation4 + $0x60] sm:$0xff] %vm459, %v3466
      %3502 = vst.msk [vmem:[#allocation4 + $0x68] sm:$0xff] %vm459, %v3468
      %3503 = vst.msk [vmem:[#allocation4 + $0x70] sm:$0xff] %vm459, %v3470
      %3504 = vst.msk [vmem:[#allocation4 + $0x78] sm:$0xff] %vm459, %v3472
      %3521 = vrot.lane.b32.xlu0 %v3409, 104
      %v3522 = vpop.permute.xlu0 %3521
      %3523 = vrot.lane.b32.xlu0 %v3410, 104
      %v3524 = vpop.permute.xlu0 %3523
      %3525 = vrot.lane.b32.xlu0 %v3411, 104
      %v3526 = vpop.permute.xlu0 %3525
      %3527 = vrot.lane.b32.xlu0 %v3412, 104
      %v3528 = vpop.permute.xlu0 %3527
      %3529 = vrot.lane.b32.xlu0 %v3413, 104
      %v3530 = vpop.permute.xlu0 %3529
      %3531 = vrot.lane.b32.xlu0 %v3414, 104
      %v3532 = vpop.permute.xlu0 %3531
      %3533 = vrot.lane.b32.xlu0 %v3415, 104
      %v3534 = vpop.permute.xlu0 %3533
      %3535 = vrot.lane.b32.xlu0 %v3416, 104
      %v3536 = vpop.permute.xlu0 %3535
      %3537 = vrot.lane.b32.xlu0 %v3417, 104
      %v3538 = vpop.permute.xlu0 %3537
      %3539 = vrot.lane.b32.xlu0 %v3418, 104
      %v3540 = vpop.permute.xlu0 %3539
      %3541 = vrot.lane.b32.xlu0 %v3419, 104
      %v3542 = vpop.permute.xlu0 %3541
      %3543 = vrot.lane.b32.xlu0 %v3420, 104
      %v3544 = vpop.permute.xlu0 %3543
      %3545 = vrot.lane.b32.xlu0 %v3421, 104
      %v3546 = vpop.permute.xlu0 %3545
      %3547 = vrot.lane.b32.xlu0 %v3422, 104
      %v3548 = vpop.permute.xlu0 %3547
      %3549 = vrot.lane.b32.xlu0 %v3423, 104
      %v3550 = vpop.permute.xlu0 %3549
      %3551 = vrot.lane.b32.xlu0 %v3424, 104
      %v3552 = vpop.permute.xlu0 %3551
      %s3569 = scalar_lea.vmem [#allocation3], 16
      %3570 = vst.msk [vmem:[%s3569 + $0x1] sm:$0xff] %vm459, %v3522
      %3571 = vst.msk [vmem:[%s3569 + $0x11] sm:$0xff] %vm459, %v3524
      %3572 = vst.msk [vmem:[%s3569 + $0x21] sm:$0xff] %vm459, %v3526
      %3573 = vst.msk [vmem:[%s3569 + $0x31] sm:$0xff] %vm459, %v3528
      %3574 = vst.msk [vmem:[%s3569 + $0x41] sm:$0xff] %vm459, %v3530
      %3575 = vst.msk [vmem:[%s3569 + $0x51] sm:$0xff] %vm459, %v3532
      %3576 = vst.msk [vmem:[%s3569 + $0x61] sm:$0xff] %vm459, %v3534
      %3577 = vst.msk [vmem:[%s3569 + $0x71] sm:$0xff] %vm459, %v3536
      %3578 = vst.msk [vmem:[%s3569 + $0xa1] sm:$0xff] %vm459, %v3538
      %3579 = vst.msk [vmem:[%s3569 + $0xb1] sm:$0xff] %vm459, %v3540
      %3580 = vst.msk [vmem:[%s3569 + $0xc1] sm:$0xff] %vm459, %v3542
      %3581 = vst.msk [vmem:[%s3569 + $0xd1] sm:$0xff] %vm459, %v3544
      %3582 = vst.msk [vmem:[%s3569 + $0xe1] sm:$0xff] %vm459, %v3546
      %3583 = vst.msk [vmem:[%s3569 + $0xf1] sm:$0xff] %vm459, %v3548
      %3584 = vst.msk [vmem:[%s3569 + $0x101] sm:$0xff] %vm459, %v3550
      %3585 = vst.msk [vmem:[%s3569 + $0x111] sm:$0xff] %vm459, %v3552
      %p3586 = scmp.lt.s32.totalorder %s16, 6
      %s3587 = scalar_select %p3586, %s16, 6
      %s3588 = smul.addr %s3587, 16
      %s3589 = smul.addr %s3588, 8
      %s3590 = scalar_lea.vmem %s5, %s3589
      // Predicated region
      $region53: #{network_convlstm_forward.1} parent=39 // pred_check
        %p3591 = pneg %p144
      $region54: #{network_convlstm_forward.1} parent=39 // pred_check_branch
        %3593 = sbr.rel (%p3591) target = $region56
      $region55: #{network_convlstm_forward.1} parent=39 // pred_region
        _
      $region56: #{network_convlstm_forward.1} parent=39 // pred_fallthru
        _
    $region40: #{network_convlstm_forward.1} parent=5 // pred_fallthru
      _
    %p3594 = scmp.le.s32.totalorder 2, %s11
    // Predicated region
    $region57: #{network_convlstm_forward.1} parent=5 // pred_check
      %p3595 = pneg %p3594
    $region58: #{network_convlstm_forward.1} parent=5 // pred_check_branch
      %3597 = sbr.rel (%p3595) target = $region60
    $region59: #{network_convlstm_forward.1} parent=5 // pred_region
      %s3598 = ssub.s32 %s11, 2
      // Predicated region
      $region61: #{network_convlstm_forward.1} parent=59 // pred_check
        %p3599 = pneg %p150
      $region62: #{network_convlstm_forward.1} parent=59 // pred_check_branch
        %3601 = sbr.rel (%p3599) target = $region64
      $region63: #{network_convlstm_forward.1} parent=59 // pred_region
        %p3602 = scmp.lt.s32.totalorder %s17, 6
        %s3603 = scalar_select %p3602, %s17, 6
        %s3604 = smul.addr %s3603, 16
        %s3605 = smul.addr %s3604, 8
        %s3606 = scalar_lea.vmem %s5, %s3605
      $region64: #{network_convlstm_forward.1} parent=59 // pred_fallthru
        _
    $region60: #{network_convlstm_forward.1} parent=5 // pred_fallthru
      _
  $region6: #{network_convlstm_forward.1} parent=0 // loop_footer
    %s15 = sadd.s32 1, %s11
  $region7: #{network_convlstm_forward.1} parent=0 // loop_footer_branch
    %10 = sbr.rel target = $region3
  $region8: #{network_convlstm_forward.1} parent=0 // loop_exit
    _

</llo_original>
